<compile_context>
chip_gen: v7x
topology: tpu7x:2x2x1
jax: 0.10.0
libtpu: 0.0.40
codegen_flags: <defaults>
</compile_context>

<pallas_src>
import functools
import math

import jax
import jax.numpy as jnp
from jax.experimental import pallas as pl
from jax.experimental.pallas import tpu as pltpu

_EPS = 1e-5  # nn.InstanceNorm2d default eps


# ----------------------------------------------------------------------------
# Fused MeshConv-chain Pallas kernel
# ----------------------------------------------------------------------------
def _roll_plus(x, k):
    """x: (C, E). Returns y with y[:, e] = x[:, (e + k) % E]: synthetic cyclic
    4-neighborhood standing in for mesh.gemm_edges. Runs on the XLU slot."""
    e = x.shape[-1]
    return pltpu.roll(x, shift=(e - k) % e, axis=1)


def _write_taps(feat_ref, x, row0, ctot):
    """Write the 5 MeshCNN symmetric tap features of x (C, E) into the bf16
    feature scratch at rows [t*ctot + row0, t*ctot + row0 + C), t = 0..4."""
    c = x.shape[0]
    f1 = _roll_plus(x, 1)
    f2 = _roll_plus(x, 2)
    f3 = _roll_plus(x, 3)
    f4 = _roll_plus(x, 4)
    taps = (x, f1 + f3, f2 + f4, jnp.abs(f1 - f3), jnp.abs(f2 - f4))
    for t, tap in enumerate(taps):
        r = t * ctot + row0
        feat_ref[r:r + c, :] = tap.astype(feat_ref.dtype)


def _instance_norm(y):
    """nn.InstanceNorm2d (affine=False, no running stats): per-channel over E."""
    mu = jnp.mean(y, axis=-1, keepdims=True)
    var = jnp.mean((y - mu) ** 2, axis=-1, keepdims=True)
    return (y - mu) * jax.lax.rsqrt(var + _EPS)


def _conv_chain_kernel(*refs, blocks, has_skip, norm_relu, residual,
                       cin_a, cin_b, cout):
    """Fused:  [channel-concat] -> MeshConv -> [InstanceNorm -> ReLU]
               -> blocks x (MeshConv -> InstanceNorm -> (+x1) -> ReLU).
    Everything stays in VMEM; one invocation per batch element."""
    i = 0
    a_ref = refs[i]; i += 1
    b_ref = None
    if has_skip:
        b_ref = refs[i]; i += 1
    w1_ref = refs[i]; b1_ref = refs[i + 1]; i += 2
    res_refs = []
    for _ in range(blocks):
        res_refs.append((refs[i], refs[i + 1])); i += 2
    out_ref = refs[i]; i += 1
    feat1_ref = refs[i]; i += 1
    feat2_ref = refs[i] if blocks > 0 else None

    ctot = cin_a + cin_b
    # --- MeshConv #1: 5-tap features of (a [, skip]) -> one MXU matmul -------
    _write_taps(feat1_ref, a_ref[0], 0, ctot)
    if has_skip:
        _write_taps(feat1_ref, b_ref[0], cin_a, ctot)
    y = jnp.dot(w1_ref[...], feat1_ref[...],
                preferred_element_type=jnp.float32) + b1_ref[...]
    if norm_relu:
        y = jnp.maximum(_instance_norm(y), 0.0)
    x1 = y
    # --- residual MeshConv blocks --------------------------------------------
    for wr_ref, br_ref in res_refs:
        _write_taps(feat2_ref, x1, 0, cout)
        y = jnp.dot(wr_ref[...], feat2_ref[...],
                    preferred_element_type=jnp.float32) + br_ref[...]
        y = _instance_norm(y)
        if residual:
            y = y + x1
        x1 = jnp.maximum(y, 0.0)
    out_ref[0] = x1.astype(out_ref.dtype)


def fused_mesh_conv_block(a, b, w1, b1, res_params, *, cout,
                          norm_relu, residual=True):
    """a: (B, Ca, E) f32; b: optional (B, Cb, E) f32 (channel-concat with a);
    w1: (cout, 5*(Ca+Cb)) bf16 pre-permuted conv weight; b1: (cout, 1) f32;
    res_params: list of (wr (cout, 5*cout) bf16, br (cout, 1) f32).
    Returns (B, cout, E) f32."""
    B, ca, E = a.shape
    cb = 0 if b is None else b.shape[1]
    assert ca % 8 == 0 and cb % 8 == 0 and cout % 8 == 0, (ca, cb, cout)
    assert E % 128 == 0, E  # keep the lane dim full-vreg aligned
    blocks = len(res_params)
    k1 = 5 * (ca + cb)

    inputs = [a]
    in_specs = [pl.BlockSpec((1, ca, E), lambda n: (n, 0, 0))]
    if b is not None:
        inputs.append(b)
        in_specs.append(pl.BlockSpec((1, cb, E), lambda n: (n, 0, 0)))
    inputs += [w1, b1]
    in_specs += [pl.BlockSpec((cout, k1), lambda n: (0, 0)),
                 pl.BlockSpec((cout, 1), lambda n: (0, 0))]
    for wr, br in res_params:
        inputs += [wr, br]
        in_specs += [pl.BlockSpec((cout, 5 * cout), lambda n: (0, 0)),
                     pl.BlockSpec((cout, 1), lambda n: (0, 0))]

    scratch = [pltpu.VMEM((k1, E), jnp.bfloat16)]
    if blocks > 0:
        scratch.append(pltpu.VMEM((5 * cout, E), jnp.bfloat16))

    kernel = functools.partial(
        _conv_chain_kernel, blocks=blocks, has_skip=b is not None,
        norm_relu=norm_relu, residual=residual, cin_a=ca, cin_b=cb, cout=cout)

    # NOTE: at real MeshCNN edge counts (E in the thousands), tile the grid
    # over E as well (with halo handling for the neighbor rolls) and set
    # pltpu.CompilerParams(vmem_limit_bytes=...) -- v7x only has 64 MiB VMEM.
    return pl.pallas_call(
        kernel,
        out_shape=jax.ShapeDtypeStruct((B, cout, E), jnp.float32),
        grid=(B,),
        in_specs=in_specs,
        out_specs=pl.BlockSpec((1, cout, E), lambda n: (n, 0, 0)),
        scratch_shapes=scratch,
        compiler_params=pltpu.CompilerParams(
            dimension_semantics=("parallel",)),
    )(*inputs)


# ----------------------------------------------------------------------------
# Parameter prep / model
# ----------------------------------------------------------------------------
def _round8(c):
    return ((c + 7) // 8) * 8


def _prep_conv_weight(w, cin_pad):
    """(Cout, Cin, 1, 5) torch conv2d layout -> (Cout, 5*cin_pad) bf16 with rows
    ordered tap-major / channel-minor (matches the in-kernel feature scratch)."""
    cout, cin, _, k = w.shape
    w = jnp.transpose(w[:, :, 0, :], (0, 2, 1))            # (Cout, 5, Cin)
    if cin_pad > cin:
        w = jnp.pad(w, ((0, 0), (0, 0), (0, cin_pad - cin)))
    return jnp.reshape(w, (cout, k * cin_pad)).astype(jnp.bfloat16)


class MeshEncoderDecoderPallas:
    """Forward-pass equivalent of MeshEncoderDecoder: encoder DownConvs with
    MeshPool, decoder UpConvs with MeshUnpool + skip concat (transfer_data),
    InstanceNorm2d, ReLU, residual inner blocks (see approximations above)."""

    def __init__(self, key, pools, down_convs, up_convs, blocks=0,
                 transfer_data=True):
        self.blocks = blocks
        self.transfer_data = transfer_data
        self.pools = list(pools)

        def conv_params(k, cout, cin, cin_pad=None):
            # xavier_normal_ weight + zero bias (reset_params / weight_init)
            cin_pad = cin if cin_pad is None else cin_pad
            std = math.sqrt(2.0 / (5 * cin + 5 * cout))
            w = std * jax.random.normal(k, (cout, cin, 1, 5), jnp.float32)
            return (_prep_conv_weight(w, cin_pad),
                    jnp.zeros((cout, 1), jnp.float32))

        n_keys = 4 * (len(down_convs) + len(up_convs)) * (blocks + 2)
        keys = iter(jax.random.split(key, n_keys))

        # ---------------- encoder: DownConv blocks ----------------
        self.enc = []
        for i in range(len(down_convs) - 1):
            cin, cout = down_convs[i], down_convs[i + 1]
            assert cout % 8 == 0, cout
            cin_pad = _round8(cin)
            w1, b1 = conv_params(next(keys), cout, cin, cin_pad)
            res = [conv_params(next(keys), cout, cout) for _ in range(blocks)]
            pool = pools[i + 1] if i + 1 < len(pools) else 0
            self.enc.append(dict(cin_pad=cin_pad, cout=cout,
                                 w1=w1, b1=b1, res=res, pool=pool))

        # ---------------- decoder: UpConv blocks ----------------
        unrolls = list(reversed(pools[:-1]))
        self.dec = []
        for i in range(len(up_convs) - 2):
            cin, cout = up_convs[i], up_convs[i + 1]
            assert cin % 8 == 0 and cout % 8 == 0, (cin, cout)
            w_up, b_up = conv_params(next(keys), cout, cin)
            cin1 = 2 * cout if transfer_data else cout
            w1, b1 = conv_params(next(keys), cout, cin1)
            res = [conv_params(next(keys), cout, cout) for _ in range(blocks)]
            unroll = unrolls[i] if i < len(unrolls) else 0
            self.dec.append(dict(cout=cout, w_up=w_up, b_up=b_up,
                                 w1=w1, b1=b1, res=res, unroll=unroll))

        # final UpConv (no unroll, transfer_data=False)
        cin, cout = up_convs[-2], up_convs[-1]
        assert cin % 8 == 0 and cout % 8 == 0, (cin, cout)
        w_up, b_up = conv_params(next(keys), cout, cin)
        w1, b1 = conv_params(next(keys), cout, cout)
        res = [conv_params(next(keys), cout, cout) for _ in range(blocks)]
        self.final = dict(cout=cout, w_up=w_up, b_up=b_up,
                          w1=w1, b1=b1, res=res)

    def __call__(self, x):
        """x: (B, down_convs[0], pools[0]) float32 per-edge features."""
        # TODO(synk): the reference forward's `meshes` (real gemm_edges) and the
        # writer plotting side-effects have no Pallas equivalent here.
        fe = x
        encoder_outs = []
        # ---------------- encoder ----------------
        for blk in self.enc:
            if fe.shape[1] < blk["cin_pad"]:
                fe = jnp.pad(fe, ((0, 0), (0, blk["cin_pad"] - fe.shape[1]),
                                  (0, 0)))
            fe = fused_mesh_conv_block(fe, None, blk["w1"], blk["b1"],
                                       blk["res"], cout=blk["cout"],
                                       norm_relu=True, residual=True)
            before_pool = None
            if blk["pool"]:
                before_pool = fe
                # TODO(synk): MeshPool is a data-dependent priority-queue edge
                # collapse; approximated by keeping the first `pool` edges.
                fe = fe[:, :, :blk["pool"]]
            encoder_outs.append(before_pool)

        # ---------------- decoder ----------------
        for i, blk in enumerate(self.dec):
            from_down = encoder_outs[-(i + 2)] if self.transfer_data else None
            x1 = fused_mesh_conv_block(fe, None, blk["w_up"], blk["b_up"], [],
                                       cout=blk["cout"], norm_relu=False)
            if blk["unroll"]:
                # TODO(synk): MeshUnpool uses the mesh's unpooling groups
                # matrix; approximated by cyclic replication of pooled edges.
                e_small = x1.shape[-1]
                idx = jnp.arange(blk["unroll"], dtype=jnp.int32) % e_small
                x1 = jnp.take(x1, idx, axis=2)
            fe = fused_mesh_conv_block(x1, from_down, blk["w1"], blk["b1"],
                                       blk["res"], cout=blk["cout"],
                                       norm_relu=True, residual=True)

        # ---------------- final UpConv (no skip transfer) ----------------
        blk = self.final
        x1 = fused_mesh_conv_block(fe, None, blk["w_up"], blk["b_up"], [],
                                   cout=blk["cout"], norm_relu=False)
        fe = fused_mesh_conv_block(x1, None, blk["w1"], blk["b1"], blk["res"],
                                   cout=blk["cout"], norm_relu=True,
                                   residual=True)
        return fe


# ----------------------------------------------------------------------------
if __name__ == "__main__":
    key = jax.random.PRNGKey(0)
    k_param, k_x = jax.random.split(key)

    B = 2
    in_nc = 5                       # MeshCNN per-edge input features
    down_convs = [in_nc, 16, 32]    # encoder channels
    up_convs = [32, 16, 8]          # decoder channels (8 output classes)
    pools = [256, 128]              # pools[0] = input edge count
    blocks = 1                      # residual MeshConvs per Down/UpConv

    model = MeshEncoderDecoderPallas(k_param, pools, down_convs, up_convs,
                                     blocks=blocks, transfer_data=True)
    x = jax.random.normal(k_x, (B, in_nc, pools[0]), dtype=jnp.float32)

    fwd = jax.jit(model.__call__)
    out = jax.block_until_ready(fwd(x))
    assert out.shape == (B, up_convs[-1], pools[0]), out.shape
    assert bool(jnp.all(jnp.isfinite(out)))
    print("KERNEL_OK")
</pallas_src>

<mosaic_0001>
module attributes {stable_mosaic.version = 11 : i64} {
  func.func @_conv_chain_kernel(%arg0: i32, %arg1: memref<1x8x256xf32, #tpu.memory_space<vmem>>, %arg2: memref<16x40xbf16, #tpu.memory_space<vmem>>, %arg3: memref<16x1xf32, #tpu.memory_space<vmem>>, %arg4: memref<16x80xbf16, #tpu.memory_space<vmem>>, %arg5: memref<16x1xf32, #tpu.memory_space<vmem>>, %arg6: memref<1x16x256xf32, #tpu.memory_space<vmem>>, %arg7: memref<40x256xbf16, #tpu.memory_space<vmem>>, %arg8: memref<80x256xbf16, #tpu.memory_space<vmem>>) attributes {dimension_semantics = [#tpu.dimension_semantics<parallel>], iteration_bounds = array<i64: 2>, scalar_prefetch = 0 : i64, scratch_operands = 2 : i64, tpu.core_type = #tpu.core_type<tc>, window_params = [{transform_indices = @transform_0, window_bounds = array<i64: 1, 8, 256>}, {pipeline_mode = #tpu.pipeline_mode<synchronous>, transform_indices = @transform_1, window_bounds = array<i64: 16, 40>}, {pipeline_mode = #tpu.pipeline_mode<synchronous>, transform_indices = @transform_2, window_bounds = array<i64: 16, 1>}, {pipeline_mode = #tpu.pipeline_mode<synchronous>, transform_indices = @transform_3, window_bounds = array<i64: 16, 80>}, {pipeline_mode = #tpu.pipeline_mode<synchronous>, transform_indices = @transform_4, window_bounds = array<i64: 16, 1>}, {transform_indices = @transform_5, window_bounds = array<i64: 1, 16, 256>}]} {
    %c0 = arith.constant 0 : index
    %c0_0 = arith.constant 0 : index
    %c0_1 = arith.constant 0 : index
    %0 = vector.load %arg1[%c0, %c0_0, %c0_1] : memref<1x8x256xf32, #tpu.memory_space<vmem>>, vector<1x8x256xf32>
    %1 = vector.shape_cast %0 : vector<1x8x256xf32> to vector<8x256xf32>
    %c255_i32 = arith.constant 255 : i32
    %2 = tpu.dynamic_rotate %1 by %c255_i32 dim 1 : vector<8x256xf32>, i32 -> vector<8x256xf32>
    %c254_i32 = arith.constant 254 : i32
    %3 = tpu.dynamic_rotate %1 by %c254_i32 dim 1 : vector<8x256xf32>, i32 -> vector<8x256xf32>
    %c253_i32 = arith.constant 253 : i32
    %4 = tpu.dynamic_rotate %1 by %c253_i32 dim 1 : vector<8x256xf32>, i32 -> vector<8x256xf32>
    %c252_i32 = arith.constant 252 : i32
    %5 = tpu.dynamic_rotate %1 by %c252_i32 dim 1 : vector<8x256xf32>, i32 -> vector<8x256xf32>
    %6 = arith.addf %2, %4 : vector<8x256xf32>
    %7 = arith.addf %3, %5 : vector<8x256xf32>
    %8 = arith.subf %2, %4 : vector<8x256xf32>
    %9 = math.absf %8 : vector<8x256xf32>
    %10 = arith.subf %3, %5 : vector<8x256xf32>
    %11 = math.absf %10 : vector<8x256xf32>
    %12 = arith.truncf %1 : vector<8x256xf32> to vector<8x256xbf16>
    %c0_2 = arith.constant 0 : index
    %c0_3 = arith.constant 0 : index
    %13 = vector.load %arg7[%c0_2, %c0_3] : memref<40x256xbf16, #tpu.memory_space<vmem>>, vector<8x256xbf16>
    tpu.vector_store %arg7[%c0_2, %c0_3], %12 {strides = array<i32>} : memref<40x256xbf16, #tpu.memory_space<vmem>>, vector<8x256xbf16>,
    %14 = arith.truncf %6 : vector<8x256xf32> to vector<8x256xbf16>
    %c8 = arith.constant 8 : index
    %c0_4 = arith.constant 0 : index
    %15 = vector.load %arg7[%c8, %c0_4] : memref<40x256xbf16, #tpu.memory_space<vmem>>, vector<8x256xbf16>
    tpu.vector_store %arg7[%c8, %c0_4], %14 {strides = array<i32>} : memref<40x256xbf16, #tpu.memory_space<vmem>>, vector<8x256xbf16>,
    %16 = arith.truncf %7 : vector<8x256xf32> to vector<8x256xbf16>
    %c16 = arith.constant 16 : index
    %c0_5 = arith.constant 0 : index
    %17 = vector.load %arg7[%c16, %c0_5] : memref<40x256xbf16, #tpu.memory_space<vmem>>, vector<8x256xbf16>
    tpu.vector_store %arg7[%c16, %c0_5], %16 {strides = array<i32>} : memref<40x256xbf16, #tpu.memory_space<vmem>>, vector<8x256xbf16>,
    %18 = arith.truncf %9 : vector<8x256xf32> to vector<8x256xbf16>
    %c24 = arith.constant 24 : index
    %c0_6 = arith.constant 0 : index
    %19 = vector.load %arg7[%c24, %c0_6] : memref<40x256xbf16, #tpu.memory_space<vmem>>, vector<8x256xbf16>
    tpu.vector_store %arg7[%c24, %c0_6], %18 {strides = array<i32>} : memref<40x256xbf16, #tpu.memory_space<vmem>>, vector<8x256xbf16>,
    %20 = arith.truncf %11 : vector<8x256xf32> to vector<8x256xbf16>
    %c32 = arith.constant 32 : index
    %c0_7 = arith.constant 0 : index
    %21 = vector.load %arg7[%c32, %c0_7] : memref<40x256xbf16, #tpu.memory_space<vmem>>, vector<8x256xbf16>
    tpu.vector_store %arg7[%c32, %c0_7], %20 {strides = array<i32>} : memref<40x256xbf16, #tpu.memory_space<vmem>>, vector<8x256xbf16>,
    %c0_8 = arith.constant 0 : index
    %c0_9 = arith.constant 0 : index
    %22 = vector.load %arg2[%c0_8, %c0_9] : memref<16x40xbf16, #tpu.memory_space<vmem>>, vector<16x40xbf16>
    %c0_10 = arith.constant 0 : index
    %c0_11 = arith.constant 0 : index
    %23 = vector.load %arg7[%c0_10, %c0_11] : memref<40x256xbf16, #tpu.memory_space<vmem>>, vector<40x256xbf16>
    %cst = arith.constant dense<0.000000e+00> : vector<16x256xf32>
    %24 = tpu.matmul %22, %23, %cst {dimension_numbers = #tpu.dot_dimension_numbers<[1], [0], [0], [1], [0, 0, 1, 1], [], []>} : vector<16x40xbf16>, vector<40x256xbf16>, vector<16x256xf32> -> vector<16x256xf32>
    %c0_12 = arith.constant 0 : index
    %c0_13 = arith.constant 0 : index
    %25 = vector.load %arg3[%c0_12, %c0_13] : memref<16x1xf32, #tpu.memory_space<vmem>>, vector<16x1xf32>
    %26 = vector.broadcast %25 : vector<16x1xf32> to vector<16x256xf32>
    %27 = arith.addf %24, %26 : vector<16x256xf32>
    %cst_14 = arith.constant dense<0.000000e+00> : vector<16xf32>
    %28 = vector.multi_reduction <add>, %27, %cst_14 [1] : vector<16x256xf32> to vector<16xf32>
    %29 = vector.shape_cast %28 : vector<16xf32> to vector<16x1xf32>
    %cst_15 = arith.constant 2.560000e+02 : f32
    %30 = vector.broadcast %cst_15 : f32 to vector<16x1xf32>
    %31 = arith.divf %29, %30 : vector<16x1xf32>
    %32 = vector.broadcast %31 : vector<16x1xf32> to vector<16x256xf32>
    %33 = arith.subf %27, %32 : vector<16x256xf32>
    %34 = arith.mulf %33, %33 : vector<16x256xf32>
    %cst_16 = arith.constant dense<0.000000e+00> : vector<16xf32>
    %35 = vector.multi_reduction <add>, %34, %cst_16 [1] : vector<16x256xf32> to vector<16xf32>
    %36 = vector.shape_cast %35 : vector<16xf32> to vector<16x1xf32>
    %cst_17 = arith.constant 2.560000e+02 : f32
    %37 = vector.broadcast %cst_17 : f32 to vector<16x1xf32>
    %38 = arith.divf %36, %37 : vector<16x1xf32>
    %39 = vector.broadcast %31 : vector<16x1xf32> to vector<16x256xf32>
    %40 = arith.subf %27, %39 : vector<16x256xf32>
    %cst_18 = arith.constant 9.99999974E-6 : f32
    %41 = vector.broadcast %cst_18 : f32 to vector<16x1xf32>
    %42 = arith.addf %38, %41 : vector<16x1xf32>
    %43 = math.rsqrt %42 : vector<16x1xf32>
    %44 = vector.broadcast %43 : vector<16x1xf32> to vector<16x256xf32>
    %45 = arith.mulf %40, %44 : vector<16x256xf32>
    %cst_19 = arith.constant 0.000000e+00 : f32
    %46 = vector.broadcast %cst_19 : f32 to vector<16x256xf32>
    %47 = arith.maximumf %45, %46 : vector<16x256xf32>
    %c255_i32_20 = arith.constant 255 : i32
    %48 = tpu.dynamic_rotate %47 by %c255_i32_20 dim 1 : vector<16x256xf32>, i32 -> vector<16x256xf32>
    %c254_i32_21 = arith.constant 254 : i32
    %49 = tpu.dynamic_rotate %47 by %c254_i32_21 dim 1 : vector<16x256xf32>, i32 -> vector<16x256xf32>
    %c253_i32_22 = arith.constant 253 : i32
    %50 = tpu.dynamic_rotate %47 by %c253_i32_22 dim 1 : vector<16x256xf32>, i32 -> vector<16x256xf32>
    %c252_i32_23 = arith.constant 252 : i32
    %51 = tpu.dynamic_rotate %47 by %c252_i32_23 dim 1 : vector<16x256xf32>, i32 -> vector<16x256xf32>
    %52 = arith.addf %48, %50 : vector<16x256xf32>
    %53 = arith.addf %49, %51 : vector<16x256xf32>
    %54 = arith.subf %48, %50 : vector<16x256xf32>
    %55 = math.absf %54 : vector<16x256xf32>
    %56 = arith.subf %49, %51 : vector<16x256xf32>
    %57 = math.absf %56 : vector<16x256xf32>
    %58 = arith.truncf %47 : vector<16x256xf32> to vector<16x256xbf16>
    %c0_24 = arith.constant 0 : index
    %c0_25 = arith.constant 0 : index
    %59 = vector.load %arg8[%c0_24, %c0_25] : memref<80x256xbf16, #tpu.memory_space<vmem>>, vector<16x256xbf16>
    tpu.vector_store %arg8[%c0_24, %c0_25], %58 {strides = array<i32>} : memref<80x256xbf16, #tpu.memory_space<vmem>>, vector<16x256xbf16>,
    %60 = arith.truncf %52 : vector<16x256xf32> to vector<16x256xbf16>
    %c16_26 = arith.constant 16 : index
    %c0_27 = arith.constant 0 : index
    %61 = vector.load %arg8[%c16_26, %c0_27] : memref<80x256xbf16, #tpu.memory_space<vmem>>, vector<16x256xbf16>
    tpu.vector_store %arg8[%c16_26, %c0_27], %60 {strides = array<i32>} : memref<80x256xbf16, #tpu.memory_space<vmem>>, vector<16x256xbf16>,
    %62 = arith.truncf %53 : vector<16x256xf32> to vector<16x256xbf16>
    %c32_28 = arith.constant 32 : index
    %c0_29 = arith.constant 0 : index
    %63 = vector.load %arg8[%c32_28, %c0_29] : memref<80x256xbf16, #tpu.memory_space<vmem>>, vector<16x256xbf16>
    tpu.vector_store %arg8[%c32_28, %c0_29], %62 {strides = array<i32>} : memref<80x256xbf16, #tpu.memory_space<vmem>>, vector<16x256xbf16>,
    %64 = arith.truncf %55 : vector<16x256xf32> to vector<16x256xbf16>
    %c48 = arith.constant 48 : index
    %c0_30 = arith.constant 0 : index
    %65 = vector.load %arg8[%c48, %c0_30] : memref<80x256xbf16, #tpu.memory_space<vmem>>, vector<16x256xbf16>
    tpu.vector_store %arg8[%c48, %c0_30], %64 {strides = array<i32>} : memref<80x256xbf16, #tpu.memory_space<vmem>>, vector<16x256xbf16>,
    %66 = arith.truncf %57 : vector<16x256xf32> to vector<16x256xbf16>
    %c64 = arith.constant 64 : index
    %c0_31 = arith.constant 0 : index
    %67 = vector.load %arg8[%c64, %c0_31] : memref<80x256xbf16, #tpu.memory_space<vmem>>, vector<16x256xbf16>
    tpu.vector_store %arg8[%c64, %c0_31], %66 {strides = array<i32>} : memref<80x256xbf16, #tpu.memory_space<vmem>>, vector<16x256xbf16>,
    %c0_32 = arith.constant 0 : index
    %c0_33 = arith.constant 0 : index
    %68 = vector.load %arg4[%c0_32, %c0_33] : memref<16x80xbf16, #tpu.memory_space<vmem>>, vector<16x80xbf16>
    %c0_34 = arith.constant 0 : index
    %c0_35 = arith.constant 0 : index
    %69 = vector.load %arg8[%c0_34, %c0_35] : memref<80x256xbf16, #tpu.memory_space<vmem>>, vector<80x256xbf16>
    %cst_36 = arith.constant dense<0.000000e+00> : vector<16x256xf32>
    %70 = tpu.matmul %68, %69, %cst_36 {dimension_numbers = #tpu.dot_dimension_numbers<[1], [0], [0], [1], [0, 0, 1, 1], [], []>} : vector<16x80xbf16>, vector<80x256xbf16>, vector<16x256xf32> -> vector<16x256xf32>
    %c0_37 = arith.constant 0 : index
    %c0_38 = arith.constant 0 : index
    %71 = vector.load %arg5[%c0_37, %c0_38] : memref<16x1xf32, #tpu.memory_space<vmem>>, vector<16x1xf32>
    %72 = vector.broadcast %71 : vector<16x1xf32> to vector<16x256xf32>
    %73 = arith.addf %70, %72 : vector<16x256xf32>
    %cst_39 = arith.constant dense<0.000000e+00> : vector<16xf32>
    %74 = vector.multi_reduction <add>, %73, %cst_39 [1] : vector<16x256xf32> to vector<16xf32>
    %75 = vector.shape_cast %74 : vector<16xf32> to vector<16x1xf32>
    %cst_40 = arith.constant 2.560000e+02 : f32
    %76 = vector.broadcast %cst_40 : f32 to vector<16x1xf32>
    %77 = arith.divf %75, %76 : vector<16x1xf32>
    %78 = vector.broadcast %77 : vector<16x1xf32> to vector<16x256xf32>
    %79 = arith.subf %73, %78 : vector<16x256xf32>
    %80 = arith.mulf %79, %79 : vector<16x256xf32>
    %cst_41 = arith.constant dense<0.000000e+00> : vector<16xf32>
    %81 = vector.multi_reduction <add>, %80, %cst_41 [1] : vector<16x256xf32> to vector<16xf32>
    %82 = vector.shape_cast %81 : vector<16xf32> to vector<16x1xf32>
    %cst_42 = arith.constant 2.560000e+02 : f32
    %83 = vector.broadcast %cst_42 : f32 to vector<16x1xf32>
    %84 = arith.divf %82, %83 : vector<16x1xf32>
    %85 = vector.broadcast %77 : vector<16x1xf32> to vector<16x256xf32>
    %86 = arith.subf %73, %85 : vector<16x256xf32>
    %cst_43 = arith.constant 9.99999974E-6 : f32
    %87 = vector.broadcast %cst_43 : f32 to vector<16x1xf32>
    %88 = arith.addf %84, %87 : vector<16x1xf32>
    %89 = math.rsqrt %88 : vector<16x1xf32>
    %90 = vector.broadcast %89 : vector<16x1xf32> to vector<16x256xf32>
    %91 = arith.mulf %86, %90 : vector<16x256xf32>
    %92 = arith.addf %91, %47 : vector<16x256xf32>
    %cst_44 = arith.constant 0.000000e+00 : f32
    %93 = vector.broadcast %cst_44 : f32 to vector<16x256xf32>
    %94 = arith.maximumf %92, %93 : vector<16x256xf32>
    %c0_45 = arith.constant 0 : index
    %c0_46 = arith.constant 0 : index
    %c0_47 = arith.constant 0 : index
    %95 = vector.load %arg6[%c0_45, %c0_46, %c0_47] : memref<1x16x256xf32, #tpu.memory_space<vmem>>, vector<1x16x256xf32>
    %96 = vector.shape_cast %95 : vector<1x16x256xf32> to vector<16x256xf32>
    %97 = vector.shape_cast %94 : vector<16x256xf32> to vector<1x16x256xf32>
    tpu.vector_store %arg6[%c0_45, %c0_46, %c0_47], %97 {strides = array<i32>} : memref<1x16x256xf32, #tpu.memory_space<vmem>>, vector<1x16x256xf32>,
    return
  }
  func.func @transform_0(%arg0: i32) -> (i32, i32, i32) {
    %c0_i32 = arith.constant 0 : i32
    %c0_i32_0 = arith.constant 0 : i32
    %c0_i32_1 = arith.constant 0 : i32
    return %arg0, %c0_i32, %c0_i32_0 : i32, i32, i32
  }
  func.func @transform_1(%arg0: i32) -> (i32, i32) {
    %c0_i32 = arith.constant 0 : i32
    %c0_i32_0 = arith.constant 0 : i32
    %c0_i32_1 = arith.constant 0 : i32
    return %c0_i32, %c0_i32_0 : i32, i32
  }
  func.func @transform_2(%arg0: i32) -> (i32, i32) {
    %c0_i32 = arith.constant 0 : i32
    %c0_i32_0 = arith.constant 0 : i32
    %c0_i32_1 = arith.constant 0 : i32
    return %c0_i32, %c0_i32_0 : i32, i32
  }
  func.func @transform_3(%arg0: i32) -> (i32, i32) {
    %c0_i32 = arith.constant 0 : i32
    %c0_i32_0 = arith.constant 0 : i32
    %c0_i32_1 = arith.constant 0 : i32
    return %c0_i32, %c0_i32_0 : i32, i32
  }
  func.func @transform_4(%arg0: i32) -> (i32, i32) {
    %c0_i32 = arith.constant 0 : i32
    %c0_i32_0 = arith.constant 0 : i32
    %c0_i32_1 = arith.constant 0 : i32
    return %c0_i32, %c0_i32_0 : i32, i32
  }
  func.func @transform_5(%arg0: i32) -> (i32, i32, i32) {
    %c0_i32 = arith.constant 0 : i32
    %c0_i32_0 = arith.constant 0 : i32
    %c0_i32_1 = arith.constant 0 : i32
    return %arg0, %c0_i32, %c0_i32_0 : i32, i32, i32
  }
}

module attributes {stable_mosaic.version = 11 : i64} {
  func.func @_conv_chain_kernel(%arg0: i32, %arg1: memref<1x16x128xf32, #tpu.memory_space<vmem>>, %arg2: memref<32x80xbf16, #tpu.memory_space<vmem>>, %arg3: memref<32x1xf32, #tpu.memory_space<vmem>>, %arg4: memref<32x160xbf16, #tpu.memory_space<vmem>>, %arg5: memref<32x1xf32, #tpu.memory_space<vmem>>, %arg6: memref<1x32x128xf32, #tpu.memory_space<vmem>>, %arg7: memref<80x128xbf16, #tpu.memory_space<vmem>>, %arg8: memref<160x128xbf16, #tpu.memory_space<vmem>>) attributes {dimension_semantics = [#tpu.dimension_semantics<parallel>], iteration_bounds = array<i64: 2>, scalar_prefetch = 0 : i64, scratch_operands = 2 : i64, tpu.core_type = #tpu.core_type<tc>, window_params = [{transform_indices = @transform_0, window_bounds = array<i64: 1, 16, 128>}, {pipeline_mode = #tpu.pipeline_mode<synchronous>, transform_indices = @transform_1, window_bounds = array<i64: 32, 80>}, {pipeline_mode = #tpu.pipeline_mode<synchronous>, transform_indices = @transform_2, window_bounds = array<i64: 32, 1>}, {pipeline_mode = #tpu.pipeline_mode<synchronous>, transform_indices = @transform_3, window_bounds = array<i64: 32, 160>}, {pipeline_mode = #tpu.pipeline_mode<synchronous>, transform_indices = @transform_4, window_bounds = array<i64: 32, 1>}, {transform_indices = @transform_5, window_bounds = array<i64: 1, 32, 128>}]} {
    %c0 = arith.constant 0 : index
    %c0_0 = arith.constant 0 : index
    %c0_1 = arith.constant 0 : index
    %0 = vector.load %arg1[%c0, %c0_0, %c0_1] : memref<1x16x128xf32, #tpu.memory_space<vmem>>, vector<1x16x128xf32>
    %1 = vector.shape_cast %0 : vector<1x16x128xf32> to vector<16x128xf32>
    %c127_i32 = arith.constant 127 : i32
    %2 = tpu.dynamic_rotate %1 by %c127_i32 dim 1 : vector<16x128xf32>, i32 -> vector<16x128xf32>
    %c126_i32 = arith.constant 126 : i32
    %3 = tpu.dynamic_rotate %1 by %c126_i32 dim 1 : vector<16x128xf32>, i32 -> vector<16x128xf32>
    %c125_i32 = arith.constant 125 : i32
    %4 = tpu.dynamic_rotate %1 by %c125_i32 dim 1 : vector<16x128xf32>, i32 -> vector<16x128xf32>
    %c124_i32 = arith.constant 124 : i32
    %5 = tpu.dynamic_rotate %1 by %c124_i32 dim 1 : vector<16x128xf32>, i32 -> vector<16x128xf32>
    %6 = arith.addf %2, %4 : vector<16x128xf32>
    %7 = arith.addf %3, %5 : vector<16x128xf32>
    %8 = arith.subf %2, %4 : vector<16x128xf32>
    %9 = math.absf %8 : vector<16x128xf32>
    %10 = arith.subf %3, %5 : vector<16x128xf32>
    %11 = math.absf %10 : vector<16x128xf32>
    %12 = arith.truncf %1 : vector<16x128xf32> to vector<16x128xbf16>
    %c0_2 = arith.constant 0 : index
    %c0_3 = arith.constant 0 : index
    %13 = vector.load %arg7[%c0_2, %c0_3] : memref<80x128xbf16, #tpu.memory_space<vmem>>, vector<16x128xbf16>
    tpu.vector_store %arg7[%c0_2, %c0_3], %12 {strides = array<i32>} : memref<80x128xbf16, #tpu.memory_space<vmem>>, vector<16x128xbf16>,
    %14 = arith.truncf %6 : vector<16x128xf32> to vector<16x128xbf16>
    %c16 = arith.constant 16 : index
    %c0_4 = arith.constant 0 : index
    %15 = vector.load %arg7[%c16, %c0_4] : memref<80x128xbf16, #tpu.memory_space<vmem>>, vector<16x128xbf16>
    tpu.vector_store %arg7[%c16, %c0_4], %14 {strides = array<i32>} : memref<80x128xbf16, #tpu.memory_space<vmem>>, vector<16x128xbf16>,
    %16 = arith.truncf %7 : vector<16x128xf32> to vector<16x128xbf16>
    %c32 = arith.constant 32 : index
    %c0_5 = arith.constant 0 : index
    %17 = vector.load %arg7[%c32, %c0_5] : memref<80x128xbf16, #tpu.memory_space<vmem>>, vector<16x128xbf16>
    tpu.vector_store %arg7[%c32, %c0_5], %16 {strides = array<i32>} : memref<80x128xbf16, #tpu.memory_space<vmem>>, vector<16x128xbf16>,
    %18 = arith.truncf %9 : vector<16x128xf32> to vector<16x128xbf16>
    %c48 = arith.constant 48 : index
    %c0_6 = arith.constant 0 : index
    %19 = vector.load %arg7[%c48, %c0_6] : memref<80x128xbf16, #tpu.memory_space<vmem>>, vector<16x128xbf16>
    tpu.vector_store %arg7[%c48, %c0_6], %18 {strides = array<i32>} : memref<80x128xbf16, #tpu.memory_space<vmem>>, vector<16x128xbf16>,
    %20 = arith.truncf %11 : vector<16x128xf32> to vector<16x128xbf16>
    %c64 = arith.constant 64 : index
    %c0_7 = arith.constant 0 : index
    %21 = vector.load %arg7[%c64, %c0_7] : memref<80x128xbf16, #tpu.memory_space<vmem>>, vector<16x128xbf16>
    tpu.vector_store %arg7[%c64, %c0_7], %20 {strides = array<i32>} : memref<80x128xbf16, #tpu.memory_space<vmem>>, vector<16x128xbf16>,
    %c0_8 = arith.constant 0 : index
    %c0_9 = arith.constant 0 : index
    %22 = vector.load %arg2[%c0_8, %c0_9] : memref<32x80xbf16, #tpu.memory_space<vmem>>, vector<32x80xbf16>
    %c0_10 = arith.constant 0 : index
    %c0_11 = arith.constant 0 : index
    %23 = vector.load %arg7[%c0_10, %c0_11] : memref<80x128xbf16, #tpu.memory_space<vmem>>, vector<80x128xbf16>
    %cst = arith.constant dense<0.000000e+00> : vector<32x128xf32>
    %24 = tpu.matmul %22, %23, %cst {dimension_numbers = #tpu.dot_dimension_numbers<[1], [0], [0], [1], [0, 0, 1, 1], [], []>} : vector<32x80xbf16>, vector<80x128xbf16>, vector<32x128xf32> -> vector<32x128xf32>
    %c0_12 = arith.constant 0 : index
    %c0_13 = arith.constant 0 : index
    %25 = vector.load %arg3[%c0_12, %c0_13] : memref<32x1xf32, #tpu.memory_space<vmem>>, vector<32x1xf32>
    %26 = vector.broadcast %25 : vector<32x1xf32> to vector<32x128xf32>
    %27 = arith.addf %24, %26 : vector<32x128xf32>
    %cst_14 = arith.constant dense<0.000000e+00> : vector<32xf32>
    %28 = vector.multi_reduction <add>, %27, %cst_14 [1] : vector<32x128xf32> to vector<32xf32>
    %29 = vector.shape_cast %28 : vector<32xf32> to vector<32x1xf32>
    %cst_15 = arith.constant 1.280000e+02 : f32
    %30 = vector.broadcast %cst_15 : f32 to vector<32x1xf32>
    %31 = arith.divf %29, %30 : vector<32x1xf32>
    %32 = vector.broadcast %31 : vector<32x1xf32> to vector<32x128xf32>
    %33 = arith.subf %27, %32 : vector<32x128xf32>
    %34 = arith.mulf %33, %33 : vector<32x128xf32>
    %cst_16 = arith.constant dense<0.000000e+00> : vector<32xf32>
    %35 = vector.multi_reduction <add>, %34, %cst_16 [1] : vector<32x128xf32> to vector<32xf32>
    %36 = vector.shape_cast %35 : vector<32xf32> to vector<32x1xf32>
    %cst_17 = arith.constant 1.280000e+02 : f32
    %37 = vector.broadcast %cst_17 : f32 to vector<32x1xf32>
    %38 = arith.divf %36, %37 : vector<32x1xf32>
    %39 = vector.broadcast %31 : vector<32x1xf32> to vector<32x128xf32>
    %40 = arith.subf %27, %39 : vector<32x128xf32>
    %cst_18 = arith.constant 9.99999974E-6 : f32
    %41 = vector.broadcast %cst_18 : f32 to vector<32x1xf32>
    %42 = arith.addf %38, %41 : vector<32x1xf32>
    %43 = math.rsqrt %42 : vector<32x1xf32>
    %44 = vector.broadcast %43 : vector<32x1xf32> to vector<32x128xf32>
    %45 = arith.mulf %40, %44 : vector<32x128xf32>
    %cst_19 = arith.constant 0.000000e+00 : f32
    %46 = vector.broadcast %cst_19 : f32 to vector<32x128xf32>
    %47 = arith.maximumf %45, %46 : vector<32x128xf32>
    %c127_i32_20 = arith.constant 127 : i32
    %48 = tpu.dynamic_rotate %47 by %c127_i32_20 dim 1 : vector<32x128xf32>, i32 -> vector<32x128xf32>
    %c126_i32_21 = arith.constant 126 : i32
    %49 = tpu.dynamic_rotate %47 by %c126_i32_21 dim 1 : vector<32x128xf32>, i32 -> vector<32x128xf32>
    %c125_i32_22 = arith.constant 125 : i32
    %50 = tpu.dynamic_rotate %47 by %c125_i32_22 dim 1 : vector<32x128xf32>, i32 -> vector<32x128xf32>
    %c124_i32_23 = arith.constant 124 : i32
    %51 = tpu.dynamic_rotate %47 by %c124_i32_23 dim 1 : vector<32x128xf32>, i32 -> vector<32x128xf32>
    %52 = arith.addf %48, %50 : vector<32x128xf32>
    %53 = arith.addf %49, %51 : vector<32x128xf32>
    %54 = arith.subf %48, %50 : vector<32x128xf32>
    %55 = math.absf %54 : vector<32x128xf32>
    %56 = arith.subf %49, %51 : vector<32x128xf32>
    %57 = math.absf %56 : vector<32x128xf32>
    %58 = arith.truncf %47 : vector<32x128xf32> to vector<32x128xbf16>
    %c0_24 = arith.constant 0 : index
    %c0_25 = arith.constant 0 : index
    %59 = vector.load %arg8[%c0_24, %c0_25] : memref<160x128xbf16, #tpu.memory_space<vmem>>, vector<32x128xbf16>
    tpu.vector_store %arg8[%c0_24, %c0_25], %58 {strides = array<i32>} : memref<160x128xbf16, #tpu.memory_space<vmem>>, vector<32x128xbf16>,
    %60 = arith.truncf %52 : vector<32x128xf32> to vector<32x128xbf16>
    %c32_26 = arith.constant 32 : index
    %c0_27 = arith.constant 0 : index
    %61 = vector.load %arg8[%c32_26, %c0_27] : memref<160x128xbf16, #tpu.memory_space<vmem>>, vector<32x128xbf16>
    tpu.vector_store %arg8[%c32_26, %c0_27], %60 {strides = array<i32>} : memref<160x128xbf16, #tpu.memory_space<vmem>>, vector<32x128xbf16>,
    %62 = arith.truncf %53 : vector<32x128xf32> to vector<32x128xbf16>
    %c64_28 = arith.constant 64 : index
    %c0_29 = arith.constant 0 : index
    %63 = vector.load %arg8[%c64_28, %c0_29] : memref<160x128xbf16, #tpu.memory_space<vmem>>, vector<32x128xbf16>
    tpu.vector_store %arg8[%c64_28, %c0_29], %62 {strides = array<i32>} : memref<160x128xbf16, #tpu.memory_space<vmem>>, vector<32x128xbf16>,
    %64 = arith.truncf %55 : vector<32x128xf32> to vector<32x128xbf16>
    %c96 = arith.constant 96 : index
    %c0_30 = arith.constant 0 : index
    %65 = vector.load %arg8[%c96, %c0_30] : memref<160x128xbf16, #tpu.memory_space<vmem>>, vector<32x128xbf16>
    tpu.vector_store %arg8[%c96, %c0_30], %64 {strides = array<i32>} : memref<160x128xbf16, #tpu.memory_space<vmem>>, vector<32x128xbf16>,
    %66 = arith.truncf %57 : vector<32x128xf32> to vector<32x128xbf16>
    %c128 = arith.constant 128 : index
    %c0_31 = arith.constant 0 : index
    %67 = vector.load %arg8[%c128, %c0_31] : memref<160x128xbf16, #tpu.memory_space<vmem>>, vector<32x128xbf16>
    tpu.vector_store %arg8[%c128, %c0_31], %66 {strides = array<i32>} : memref<160x128xbf16, #tpu.memory_space<vmem>>, vector<32x128xbf16>,
    %c0_32 = arith.constant 0 : index
    %c0_33 = arith.constant 0 : index
    %68 = vector.load %arg4[%c0_32, %c0_33] : memref<32x160xbf16, #tpu.memory_space<vmem>>, vector<32x160xbf16>
    %c0_34 = arith.constant 0 : index
    %c0_35 = arith.constant 0 : index
    %69 = vector.load %arg8[%c0_34, %c0_35] : memref<160x128xbf16, #tpu.memory_space<vmem>>, vector<160x128xbf16>
    %cst_36 = arith.constant dense<0.000000e+00> : vector<32x128xf32>
    %70 = tpu.matmul %68, %69, %cst_36 {dimension_numbers = #tpu.dot_dimension_numbers<[1], [0], [0], [1], [0, 0, 1, 1], [], []>} : vector<32x160xbf16>, vector<160x128xbf16>, vector<32x128xf32> -> vector<32x128xf32>
    %c0_37 = arith.constant 0 : index
    %c0_38 = arith.constant 0 : index
    %71 = vector.load %arg5[%c0_37, %c0_38] : memref<32x1xf32, #tpu.memory_space<vmem>>, vector<32x1xf32>
    %72 = vector.broadcast %71 : vector<32x1xf32> to vector<32x128xf32>
    %73 = arith.addf %70, %72 : vector<32x128xf32>
    %cst_39 = arith.constant dense<0.000000e+00> : vector<32xf32>
    %74 = vector.multi_reduction <add>, %73, %cst_39 [1] : vector<32x128xf32> to vector<32xf32>
    %75 = vector.shape_cast %74 : vector<32xf32> to vector<32x1xf32>
    %cst_40 = arith.constant 1.280000e+02 : f32
    %76 = vector.broadcast %cst_40 : f32 to vector<32x1xf32>
    %77 = arith.divf %75, %76 : vector<32x1xf32>
    %78 = vector.broadcast %77 : vector<32x1xf32> to vector<32x128xf32>
    %79 = arith.subf %73, %78 : vector<32x128xf32>
    %80 = arith.mulf %79, %79 : vector<32x128xf32>
    %cst_41 = arith.constant dense<0.000000e+00> : vector<32xf32>
    %81 = vector.multi_reduction <add>, %80, %cst_41 [1] : vector<32x128xf32> to vector<32xf32>
    %82 = vector.shape_cast %81 : vector<32xf32> to vector<32x1xf32>
    %cst_42 = arith.constant 1.280000e+02 : f32
    %83 = vector.broadcast %cst_42 : f32 to vector<32x1xf32>
    %84 = arith.divf %82, %83 : vector<32x1xf32>
    %85 = vector.broadcast %77 : vector<32x1xf32> to vector<32x128xf32>
    %86 = arith.subf %73, %85 : vector<32x128xf32>
    %cst_43 = arith.constant 9.99999974E-6 : f32
    %87 = vector.broadcast %cst_43 : f32 to vector<32x1xf32>
    %88 = arith.addf %84, %87 : vector<32x1xf32>
    %89 = math.rsqrt %88 : vector<32x1xf32>
    %90 = vector.broadcast %89 : vector<32x1xf32> to vector<32x128xf32>
    %91 = arith.mulf %86, %90 : vector<32x128xf32>
    %92 = arith.addf %91, %47 : vector<32x128xf32>
    %cst_44 = arith.constant 0.000000e+00 : f32
    %93 = vector.broadcast %cst_44 : f32 to vector<32x128xf32>
    %94 = arith.maximumf %92, %93 : vector<32x128xf32>
    %c0_45 = arith.constant 0 : index
    %c0_46 = arith.constant 0 : index
    %c0_47 = arith.constant 0 : index
    %95 = vector.load %arg6[%c0_45, %c0_46, %c0_47] : memref<1x32x128xf32, #tpu.memory_space<vmem>>, vector<1x32x128xf32>
    %96 = vector.shape_cast %95 : vector<1x32x128xf32> to vector<32x128xf32>
    %97 = vector.shape_cast %94 : vector<32x128xf32> to vector<1x32x128xf32>
    tpu.vector_store %arg6[%c0_45, %c0_46, %c0_47], %97 {strides = array<i32>} : memref<1x32x128xf32, #tpu.memory_space<vmem>>, vector<1x32x128xf32>,
    return
  }
  func.func @transform_0(%arg0: i32) -> (i32, i32, i32) {
    %c0_i32 = arith.constant 0 : i32
    %c0_i32_0 = arith.constant 0 : i32
    %c0_i32_1 = arith.constant 0 : i32
    return %arg0, %c0_i32, %c0_i32_0 : i32, i32, i32
  }
  func.func @transform_1(%arg0: i32) -> (i32, i32) {
    %c0_i32 = arith.constant 0 : i32
    %c0_i32_0 = arith.constant 0 : i32
    %c0_i32_1 = arith.constant 0 : i32
    return %c0_i32, %c0_i32_0 : i32, i32
  }
  func.func @transform_2(%arg0: i32) -> (i32, i32) {
    %c0_i32 = arith.constant 0 : i32
    %c0_i32_0 = arith.constant 0 : i32
    %c0_i32_1 = arith.constant 0 : i32
    return %c0_i32, %c0_i32_0 : i32, i32
  }
  func.func @transform_3(%arg0: i32) -> (i32, i32) {
    %c0_i32 = arith.constant 0 : i32
    %c0_i32_0 = arith.constant 0 : i32
    %c0_i32_1 = arith.constant 0 : i32
    return %c0_i32, %c0_i32_0 : i32, i32
  }
  func.func @transform_4(%arg0: i32) -> (i32, i32) {
    %c0_i32 = arith.constant 0 : i32
    %c0_i32_0 = arith.constant 0 : i32
    %c0_i32_1 = arith.constant 0 : i32
    return %c0_i32, %c0_i32_0 : i32, i32
  }
  func.func @transform_5(%arg0: i32) -> (i32, i32, i32) {
    %c0_i32 = arith.constant 0 : i32
    %c0_i32_0 = arith.constant 0 : i32
    %c0_i32_1 = arith.constant 0 : i32
    return %arg0, %c0_i32, %c0_i32_0 : i32, i32, i32
  }
}

module attributes {stable_mosaic.version = 11 : i64} {
  func.func @_conv_chain_kernel(%arg0: i32, %arg1: memref<1x32x128xf32, #tpu.memory_space<vmem>>, %arg2: memref<16x160xbf16, #tpu.memory_space<vmem>>, %arg3: memref<16x1xf32, #tpu.memory_space<vmem>>, %arg4: memref<1x16x128xf32, #tpu.memory_space<vmem>>, %arg5: memref<160x128xbf16, #tpu.memory_space<vmem>>) attributes {dimension_semantics = [#tpu.dimension_semantics<parallel>], iteration_bounds = array<i64: 2>, scalar_prefetch = 0 : i64, scratch_operands = 1 : i64, tpu.core_type = #tpu.core_type<tc>, window_params = [{transform_indices = @transform_0, window_bounds = array<i64: 1, 32, 128>}, {pipeline_mode = #tpu.pipeline_mode<synchronous>, transform_indices = @transform_1, window_bounds = array<i64: 16, 160>}, {pipeline_mode = #tpu.pipeline_mode<synchronous>, transform_indices = @transform_2, window_bounds = array<i64: 16, 1>}, {transform_indices = @transform_3, window_bounds = array<i64: 1, 16, 128>}]} {
    %c0 = arith.constant 0 : index
    %c0_0 = arith.constant 0 : index
    %c0_1 = arith.constant 0 : index
    %0 = vector.load %arg1[%c0, %c0_0, %c0_1] : memref<1x32x128xf32, #tpu.memory_space<vmem>>, vector<1x32x128xf32>
    %1 = vector.shape_cast %0 : vector<1x32x128xf32> to vector<32x128xf32>
    %c127_i32 = arith.constant 127 : i32
    %2 = tpu.dynamic_rotate %1 by %c127_i32 dim 1 : vector<32x128xf32>, i32 -> vector<32x128xf32>
    %c126_i32 = arith.constant 126 : i32
    %3 = tpu.dynamic_rotate %1 by %c126_i32 dim 1 : vector<32x128xf32>, i32 -> vector<32x128xf32>
    %c125_i32 = arith.constant 125 : i32
    %4 = tpu.dynamic_rotate %1 by %c125_i32 dim 1 : vector<32x128xf32>, i32 -> vector<32x128xf32>
    %c124_i32 = arith.constant 124 : i32
    %5 = tpu.dynamic_rotate %1 by %c124_i32 dim 1 : vector<32x128xf32>, i32 -> vector<32x128xf32>
    %6 = arith.addf %2, %4 : vector<32x128xf32>
    %7 = arith.addf %3, %5 : vector<32x128xf32>
    %8 = arith.subf %2, %4 : vector<32x128xf32>
    %9 = math.absf %8 : vector<32x128xf32>
    %10 = arith.subf %3, %5 : vector<32x128xf32>
    %11 = math.absf %10 : vector<32x128xf32>
    %12 = arith.truncf %1 : vector<32x128xf32> to vector<32x128xbf16>
    %c0_2 = arith.constant 0 : index
    %c0_3 = arith.constant 0 : index
    %13 = vector.load %arg5[%c0_2, %c0_3] : memref<160x128xbf16, #tpu.memory_space<vmem>>, vector<32x128xbf16>
    tpu.vector_store %arg5[%c0_2, %c0_3], %12 {strides = array<i32>} : memref<160x128xbf16, #tpu.memory_space<vmem>>, vector<32x128xbf16>,
    %14 = arith.truncf %6 : vector<32x128xf32> to vector<32x128xbf16>
    %c32 = arith.constant 32 : index
    %c0_4 = arith.constant 0 : index
    %15 = vector.load %arg5[%c32, %c0_4] : memref<160x128xbf16, #tpu.memory_space<vmem>>, vector<32x128xbf16>
    tpu.vector_store %arg5[%c32, %c0_4], %14 {strides = array<i32>} : memref<160x128xbf16, #tpu.memory_space<vmem>>, vector<32x128xbf16>,
    %16 = arith.truncf %7 : vector<32x128xf32> to vector<32x128xbf16>
    %c64 = arith.constant 64 : index
    %c0_5 = arith.constant 0 : index
    %17 = vector.load %arg5[%c64, %c0_5] : memref<160x128xbf16, #tpu.memory_space<vmem>>, vector<32x128xbf16>
    tpu.vector_store %arg5[%c64, %c0_5], %16 {strides = array<i32>} : memref<160x128xbf16, #tpu.memory_space<vmem>>, vector<32x128xbf16>,
    %18 = arith.truncf %9 : vector<32x128xf32> to vector<32x128xbf16>
    %c96 = arith.constant 96 : index
    %c0_6 = arith.constant 0 : index
    %19 = vector.load %arg5[%c96, %c0_6] : memref<160x128xbf16, #tpu.memory_space<vmem>>, vector<32x128xbf16>
    tpu.vector_store %arg5[%c96, %c0_6], %18 {strides = array<i32>} : memref<160x128xbf16, #tpu.memory_space<vmem>>, vector<32x128xbf16>,
    %20 = arith.truncf %11 : vector<32x128xf32> to vector<32x128xbf16>
    %c128 = arith.constant 128 : index
    %c0_7 = arith.constant 0 : index
    %21 = vector.load %arg5[%c128, %c0_7] : memref<160x128xbf16, #tpu.memory_space<vmem>>, vector<32x128xbf16>
    tpu.vector_store %arg5[%c128, %c0_7], %20 {strides = array<i32>} : memref<160x128xbf16, #tpu.memory_space<vmem>>, vector<32x128xbf16>,
    %c0_8 = arith.constant 0 : index
    %c0_9 = arith.constant 0 : index
    %22 = vector.load %arg2[%c0_8, %c0_9] : memref<16x160xbf16, #tpu.memory_space<vmem>>, vector<16x160xbf16>
    %c0_10 = arith.constant 0 : index
    %c0_11 = arith.constant 0 : index
    %23 = vector.load %arg5[%c0_10, %c0_11] : memref<160x128xbf16, #tpu.memory_space<vmem>>, vector<160x128xbf16>
    %cst = arith.constant dense<0.000000e+00> : vector<16x128xf32>
    %24 = tpu.matmul %22, %23, %cst {dimension_numbers = #tpu.dot_dimension_numbers<[1], [0], [0], [1], [0, 0, 1, 1], [], []>} : vector<16x160xbf16>, vector<160x128xbf16>, vector<16x128xf32> -> vector<16x128xf32>
    %c0_12 = arith.constant 0 : index
    %c0_13 = arith.constant 0 : index
    %25 = vector.load %arg3[%c0_12, %c0_13] : memref<16x1xf32, #tpu.memory_space<vmem>>, vector<16x1xf32>
    %26 = vector.broadcast %25 : vector<16x1xf32> to vector<16x128xf32>
    %27 = arith.addf %24, %26 : vector<16x128xf32>
    %c0_14 = arith.constant 0 : index
    %c0_15 = arith.constant 0 : index
    %c0_16 = arith.constant 0 : index
    %28 = vector.load %arg4[%c0_14, %c0_15, %c0_16] : memref<1x16x128xf32, #tpu.memory_space<vmem>>, vector<1x16x128xf32>
    %29 = vector.shape_cast %28 : vector<1x16x128xf32> to vector<16x128xf32>
    %30 = vector.shape_cast %27 : vector<16x128xf32> to vector<1x16x128xf32>
    tpu.vector_store %arg4[%c0_14, %c0_15, %c0_16], %30 {strides = array<i32>} : memref<1x16x128xf32, #tpu.memory_space<vmem>>, vector<1x16x128xf32>,
    return
  }
  func.func @transform_0(%arg0: i32) -> (i32, i32, i32) {
    %c0_i32 = arith.constant 0 : i32
    %c0_i32_0 = arith.constant 0 : i32
    %c0_i32_1 = arith.constant 0 : i32
    return %arg0, %c0_i32, %c0_i32_0 : i32, i32, i32
  }
  func.func @transform_1(%arg0: i32) -> (i32, i32) {
    %c0_i32 = arith.constant 0 : i32
    %c0_i32_0 = arith.constant 0 : i32
    %c0_i32_1 = arith.constant 0 : i32
    return %c0_i32, %c0_i32_0 : i32, i32
  }
  func.func @transform_2(%arg0: i32) -> (i32, i32) {
    %c0_i32 = arith.constant 0 : i32
    %c0_i32_0 = arith.constant 0 : i32
    %c0_i32_1 = arith.constant 0 : i32
    return %c0_i32, %c0_i32_0 : i32, i32
  }
  func.func @transform_3(%arg0: i32) -> (i32, i32, i32) {
    %c0_i32 = arith.constant 0 : i32
    %c0_i32_0 = arith.constant 0 : i32
    %c0_i32_1 = arith.constant 0 : i32
    return %arg0, %c0_i32, %c0_i32_0 : i32, i32, i32
  }
}

module attributes {stable_mosaic.version = 11 : i64} {
  func.func @_conv_chain_kernel(%arg0: i32, %arg1: memref<1x16x256xf32, #tpu.memory_space<vmem>>, %arg2: memref<1x16x256xf32, #tpu.memory_space<vmem>>, %arg3: memref<16x160xbf16, #tpu.memory_space<vmem>>, %arg4: memref<16x1xf32, #tpu.memory_space<vmem>>, %arg5: memref<16x80xbf16, #tpu.memory_space<vmem>>, %arg6: memref<16x1xf32, #tpu.memory_space<vmem>>, %arg7: memref<1x16x256xf32, #tpu.memory_space<vmem>>, %arg8: memref<160x256xbf16, #tpu.memory_space<vmem>>, %arg9: memref<80x256xbf16, #tpu.memory_space<vmem>>) attributes {dimension_semantics = [#tpu.dimension_semantics<parallel>], iteration_bounds = array<i64: 2>, scalar_prefetch = 0 : i64, scratch_operands = 2 : i64, tpu.core_type = #tpu.core_type<tc>, window_params = [{transform_indices = @transform_0, window_bounds = array<i64: 1, 16, 256>}, {transform_indices = @transform_1, window_bounds = array<i64: 1, 16, 256>}, {pipeline_mode = #tpu.pipeline_mode<synchronous>, transform_indices = @transform_2, window_bounds = array<i64: 16, 160>}, {pipeline_mode = #tpu.pipeline_mode<synchronous>, transform_indices = @transform_3, window_bounds = array<i64: 16, 1>}, {pipeline_mode = #tpu.pipeline_mode<synchronous>, transform_indices = @transform_4, window_bounds = array<i64: 16, 80>}, {pipeline_mode = #tpu.pipeline_mode<synchronous>, transform_indices = @transform_5, window_bounds = array<i64: 16, 1>}, {transform_indices = @transform_6, window_bounds = array<i64: 1, 16, 256>}]} {
    %c0 = arith.constant 0 : index
    %c0_0 = arith.constant 0 : index
    %c0_1 = arith.constant 0 : index
    %0 = vector.load %arg1[%c0, %c0_0, %c0_1] : memref<1x16x256xf32, #tpu.memory_space<vmem>>, vector<1x16x256xf32>
    %1 = vector.shape_cast %0 : vector<1x16x256xf32> to vector<16x256xf32>
    %c255_i32 = arith.constant 255 : i32
    %2 = tpu.dynamic_rotate %1 by %c255_i32 dim 1 : vector<16x256xf32>, i32 -> vector<16x256xf32>
    %c254_i32 = arith.constant 254 : i32
    %3 = tpu.dynamic_rotate %1 by %c254_i32 dim 1 : vector<16x256xf32>, i32 -> vector<16x256xf32>
    %c253_i32 = arith.constant 253 : i32
    %4 = tpu.dynamic_rotate %1 by %c253_i32 dim 1 : vector<16x256xf32>, i32 -> vector<16x256xf32>
    %c252_i32 = arith.constant 252 : i32
    %5 = tpu.dynamic_rotate %1 by %c252_i32 dim 1 : vector<16x256xf32>, i32 -> vector<16x256xf32>
    %6 = arith.addf %2, %4 : vector<16x256xf32>
    %7 = arith.addf %3, %5 : vector<16x256xf32>
    %8 = arith.subf %2, %4 : vector<16x256xf32>
    %9 = math.absf %8 : vector<16x256xf32>
    %10 = arith.subf %3, %5 : vector<16x256xf32>
    %11 = math.absf %10 : vector<16x256xf32>
    %12 = arith.truncf %1 : vector<16x256xf32> to vector<16x256xbf16>
    %c0_2 = arith.constant 0 : index
    %c0_3 = arith.constant 0 : index
    %13 = vector.load %arg8[%c0_2, %c0_3] : memref<160x256xbf16, #tpu.memory_space<vmem>>, vector<16x256xbf16>
    tpu.vector_store %arg8[%c0_2, %c0_3], %12 {strides = array<i32>} : memref<160x256xbf16, #tpu.memory_space<vmem>>, vector<16x256xbf16>,
    %14 = arith.truncf %6 : vector<16x256xf32> to vector<16x256xbf16>
    %c32 = arith.constant 32 : index
    %c0_4 = arith.constant 0 : index
    %15 = vector.load %arg8[%c32, %c0_4] : memref<160x256xbf16, #tpu.memory_space<vmem>>, vector<16x256xbf16>
    tpu.vector_store %arg8[%c32, %c0_4], %14 {strides = array<i32>} : memref<160x256xbf16, #tpu.memory_space<vmem>>, vector<16x256xbf16>,
    %16 = arith.truncf %7 : vector<16x256xf32> to vector<16x256xbf16>
    %c64 = arith.constant 64 : index
    %c0_5 = arith.constant 0 : index
    %17 = vector.load %arg8[%c64, %c0_5] : memref<160x256xbf16, #tpu.memory_space<vmem>>, vector<16x256xbf16>
    tpu.vector_store %arg8[%c64, %c0_5], %16 {strides = array<i32>} : memref<160x256xbf16, #tpu.memory_space<vmem>>, vector<16x256xbf16>,
    %18 = arith.truncf %9 : vector<16x256xf32> to vector<16x256xbf16>
    %c96 = arith.constant 96 : index
    %c0_6 = arith.constant 0 : index
    %19 = vector.load %arg8[%c96, %c0_6] : memref<160x256xbf16, #tpu.memory_space<vmem>>, vector<16x256xbf16>
    tpu.vector_store %arg8[%c96, %c0_6], %18 {strides = array<i32>} : memref<160x256xbf16, #tpu.memory_space<vmem>>, vector<16x256xbf16>,
    %20 = arith.truncf %11 : vector<16x256xf32> to vector<16x256xbf16>
    %c128 = arith.constant 128 : index
    %c0_7 = arith.constant 0 : index
    %21 = vector.load %arg8[%c128, %c0_7] : memref<160x256xbf16, #tpu.memory_space<vmem>>, vector<16x256xbf16>
    tpu.vector_store %arg8[%c128, %c0_7], %20 {strides = array<i32>} : memref<160x256xbf16, #tpu.memory_space<vmem>>, vector<16x256xbf16>,
    %c0_8 = arith.constant 0 : index
    %c0_9 = arith.constant 0 : index
    %c0_10 = arith.constant 0 : index
    %22 = vector.load %arg2[%c0_8, %c0_9, %c0_10] : memref<1x16x256xf32, #tpu.memory_space<vmem>>, vector<1x16x256xf32>
    %23 = vector.shape_cast %22 : vector<1x16x256xf32> to vector<16x256xf32>
    %c255_i32_11 = arith.constant 255 : i32
    %24 = tpu.dynamic_rotate %23 by %c255_i32_11 dim 1 : vector<16x256xf32>, i32 -> vector<16x256xf32>
    %c254_i32_12 = arith.constant 254 : i32
    %25 = tpu.dynamic_rotate %23 by %c254_i32_12 dim 1 : vector<16x256xf32>, i32 -> vector<16x256xf32>
    %c253_i32_13 = arith.constant 253 : i32
    %26 = tpu.dynamic_rotate %23 by %c253_i32_13 dim 1 : vector<16x256xf32>, i32 -> vector<16x256xf32>
    %c252_i32_14 = arith.constant 252 : i32
    %27 = tpu.dynamic_rotate %23 by %c252_i32_14 dim 1 : vector<16x256xf32>, i32 -> vector<16x256xf32>
    %28 = arith.addf %24, %26 : vector<16x256xf32>
    %29 = arith.addf %25, %27 : vector<16x256xf32>
    %30 = arith.subf %24, %26 : vector<16x256xf32>
    %31 = math.absf %30 : vector<16x256xf32>
    %32 = arith.subf %25, %27 : vector<16x256xf32>
    %33 = math.absf %32 : vector<16x256xf32>
    %34 = arith.truncf %23 : vector<16x256xf32> to vector<16x256xbf16>
    %c16 = arith.constant 16 : index
    %c0_15 = arith.constant 0 : index
    %35 = vector.load %arg8[%c16, %c0_15] : memref<160x256xbf16, #tpu.memory_space<vmem>>, vector<16x256xbf16>
    tpu.vector_store %arg8[%c16, %c0_15], %34 {strides = array<i32>} : memref<160x256xbf16, #tpu.memory_space<vmem>>, vector<16x256xbf16>,
    %36 = arith.truncf %28 : vector<16x256xf32> to vector<16x256xbf16>
    %c48 = arith.constant 48 : index
    %c0_16 = arith.constant 0 : index
    %37 = vector.load %arg8[%c48, %c0_16] : memref<160x256xbf16, #tpu.memory_space<vmem>>, vector<16x256xbf16>
    tpu.vector_store %arg8[%c48, %c0_16], %36 {strides = array<i32>} : memref<160x256xbf16, #tpu.memory_space<vmem>>, vector<16x256xbf16>,
    %38 = arith.truncf %29 : vector<16x256xf32> to vector<16x256xbf16>
    %c80 = arith.constant 80 : index
    %c0_17 = arith.constant 0 : index
    %39 = vector.load %arg8[%c80, %c0_17] : memref<160x256xbf16, #tpu.memory_space<vmem>>, vector<16x256xbf16>
    tpu.vector_store %arg8[%c80, %c0_17], %38 {strides = array<i32>} : memref<160x256xbf16, #tpu.memory_space<vmem>>, vector<16x256xbf16>,
    %40 = arith.truncf %31 : vector<16x256xf32> to vector<16x256xbf16>
    %c112 = arith.constant 112 : index
    %c0_18 = arith.constant 0 : index
    %41 = vector.load %arg8[%c112, %c0_18] : memref<160x256xbf16, #tpu.memory_space<vmem>>, vector<16x256xbf16>
    tpu.vector_store %arg8[%c112, %c0_18], %40 {strides = array<i32>} : memref<160x256xbf16, #tpu.memory_space<vmem>>, vector<16x256xbf16>,
    %42 = arith.truncf %33 : vector<16x256xf32> to vector<16x256xbf16>
    %c144 = arith.constant 144 : index
    %c0_19 = arith.constant 0 : index
    %43 = vector.load %arg8[%c144, %c0_19] : memref<160x256xbf16, #tpu.memory_space<vmem>>, vector<16x256xbf16>
    tpu.vector_store %arg8[%c144, %c0_19], %42 {strides = array<i32>} : memref<160x256xbf16, #tpu.memory_space<vmem>>, vector<16x256xbf16>,
    %c0_20 = arith.constant 0 : index
    %c0_21 = arith.constant 0 : index
    %44 = vector.load %arg3[%c0_20, %c0_21] : memref<16x160xbf16, #tpu.memory_space<vmem>>, vector<16x160xbf16>
    %c0_22 = arith.constant 0 : index
    %c0_23 = arith.constant 0 : index
    %45 = vector.load %arg8[%c0_22, %c0_23] : memref<160x256xbf16, #tpu.memory_space<vmem>>, vector<160x256xbf16>
    %cst = arith.constant dense<0.000000e+00> : vector<16x256xf32>
    %46 = tpu.matmul %44, %45, %cst {dimension_numbers = #tpu.dot_dimension_numbers<[1], [0], [0], [1], [0, 0, 1, 1], [], []>} : vector<16x160xbf16>, vector<160x256xbf16>, vector<16x256xf32> -> vector<16x256xf32>
    %c0_24 = arith.constant 0 : index
    %c0_25 = arith.constant 0 : index
    %47 = vector.load %arg4[%c0_24, %c0_25] : memref<16x1xf32, #tpu.memory_space<vmem>>, vector<16x1xf32>
    %48 = vector.broadcast %47 : vector<16x1xf32> to vector<16x256xf32>
    %49 = arith.addf %46, %48 : vector<16x256xf32>
    %cst_26 = arith.constant dense<0.000000e+00> : vector<16xf32>
    %50 = vector.multi_reduction <add>, %49, %cst_26 [1] : vector<16x256xf32> to vector<16xf32>
    %51 = vector.shape_cast %50 : vector<16xf32> to vector<16x1xf32>
    %cst_27 = arith.constant 2.560000e+02 : f32
    %52 = vector.broadcast %cst_27 : f32 to vector<16x1xf32>
    %53 = arith.divf %51, %52 : vector<16x1xf32>
    %54 = vector.broadcast %53 : vector<16x1xf32> to vector<16x256xf32>
    %55 = arith.subf %49, %54 : vector<16x256xf32>
    %56 = arith.mulf %55, %55 : vector<16x256xf32>
    %cst_28 = arith.constant dense<0.000000e+00> : vector<16xf32>
    %57 = vector.multi_reduction <add>, %56, %cst_28 [1] : vector<16x256xf32> to vector<16xf32>
    %58 = vector.shape_cast %57 : vector<16xf32> to vector<16x1xf32>
    %cst_29 = arith.constant 2.560000e+02 : f32
    %59 = vector.broadcast %cst_29 : f32 to vector<16x1xf32>
    %60 = arith.divf %58, %59 : vector<16x1xf32>
    %61 = vector.broadcast %53 : vector<16x1xf32> to vector<16x256xf32>
    %62 = arith.subf %49, %61 : vector<16x256xf32>
    %cst_30 = arith.constant 9.99999974E-6 : f32
    %63 = vector.broadcast %cst_30 : f32 to vector<16x1xf32>
    %64 = arith.addf %60, %63 : vector<16x1xf32>
    %65 = math.rsqrt %64 : vector<16x1xf32>
    %66 = vector.broadcast %65 : vector<16x1xf32> to vector<16x256xf32>
    %67 = arith.mulf %62, %66 : vector<16x256xf32>
    %cst_31 = arith.constant 0.000000e+00 : f32
    %68 = vector.broadcast %cst_31 : f32 to vector<16x256xf32>
    %69 = arith.maximumf %67, %68 : vector<16x256xf32>
    %c255_i32_32 = arith.constant 255 : i32
    %70 = tpu.dynamic_rotate %69 by %c255_i32_32 dim 1 : vector<16x256xf32>, i32 -> vector<16x256xf32>
    %c254_i32_33 = arith.constant 254 : i32
    %71 = tpu.dynamic_rotate %69 by %c254_i32_33 dim 1 : vector<16x256xf32>, i32 -> vector<16x256xf32>
    %c253_i32_34 = arith.constant 253 : i32
    %72 = tpu.dynamic_rotate %69 by %c253_i32_34 dim 1 : vector<16x256xf32>, i32 -> vector<16x256xf32>
    %c252_i32_35 = arith.constant 252 : i32
    %73 = tpu.dynamic_rotate %69 by %c252_i32_35 dim 1 : vector<16x256xf32>, i32 -> vector<16x256xf32>
    %74 = arith.addf %70, %72 : vector<16x256xf32>
    %75 = arith.addf %71, %73 : vector<16x256xf32>
    %76 = arith.subf %70, %72 : vector<16x256xf32>
    %77 = math.absf %76 : vector<16x256xf32>
    %78 = arith.subf %71, %73 : vector<16x256xf32>
    %79 = math.absf %78 : vector<16x256xf32>
    %80 = arith.truncf %69 : vector<16x256xf32> to vector<16x256xbf16>
    %c0_36 = arith.constant 0 : index
    %c0_37 = arith.constant 0 : index
    %81 = vector.load %arg9[%c0_36, %c0_37] : memref<80x256xbf16, #tpu.memory_space<vmem>>, vector<16x256xbf16>
    tpu.vector_store %arg9[%c0_36, %c0_37], %80 {strides = array<i32>} : memref<80x256xbf16, #tpu.memory_space<vmem>>, vector<16x256xbf16>,
    %82 = arith.truncf %74 : vector<16x256xf32> to vector<16x256xbf16>
    %c16_38 = arith.constant 16 : index
    %c0_39 = arith.constant 0 : index
    %83 = vector.load %arg9[%c16_38, %c0_39] : memref<80x256xbf16, #tpu.memory_space<vmem>>, vector<16x256xbf16>
    tpu.vector_store %arg9[%c16_38, %c0_39], %82 {strides = array<i32>} : memref<80x256xbf16, #tpu.memory_space<vmem>>, vector<16x256xbf16>,
    %84 = arith.truncf %75 : vector<16x256xf32> to vector<16x256xbf16>
    %c32_40 = arith.constant 32 : index
    %c0_41 = arith.constant 0 : index
    %85 = vector.load %arg9[%c32_40, %c0_41] : memref<80x256xbf16, #tpu.memory_space<vmem>>, vector<16x256xbf16>
    tpu.vector_store %arg9[%c32_40, %c0_41], %84 {strides = array<i32>} : memref<80x256xbf16, #tpu.memory_space<vmem>>, vector<16x256xbf16>,
    %86 = arith.truncf %77 : vector<16x256xf32> to vector<16x256xbf16>
    %c48_42 = arith.constant 48 : index
    %c0_43 = arith.constant 0 : index
    %87 = vector.load %arg9[%c48_42, %c0_43] : memref<80x256xbf16, #tpu.memory_space<vmem>>, vector<16x256xbf16>
    tpu.vector_store %arg9[%c48_42, %c0_43], %86 {strides = array<i32>} : memref<80x256xbf16, #tpu.memory_space<vmem>>, vector<16x256xbf16>,
    %88 = arith.truncf %79 : vector<16x256xf32> to vector<16x256xbf16>
    %c64_44 = arith.constant 64 : index
    %c0_45 = arith.constant 0 : index
    %89 = vector.load %arg9[%c64_44, %c0_45] : memref<80x256xbf16, #tpu.memory_space<vmem>>, vector<16x256xbf16>
    tpu.vector_store %arg9[%c64_44, %c0_45], %88 {strides = array<i32>} : memref<80x256xbf16, #tpu.memory_space<vmem>>, vector<16x256xbf16>,
    %c0_46 = arith.constant 0 : index
    %c0_47 = arith.constant 0 : index
    %90 = vector.load %arg5[%c0_46, %c0_47] : memref<16x80xbf16, #tpu.memory_space<vmem>>, vector<16x80xbf16>
    %c0_48 = arith.constant 0 : index
    %c0_49 = arith.constant 0 : index
    %91 = vector.load %arg9[%c0_48, %c0_49] : memref<80x256xbf16, #tpu.memory_space<vmem>>, vector<80x256xbf16>
    %cst_50 = arith.constant dense<0.000000e+00> : vector<16x256xf32>
    %92 = tpu.matmul %90, %91, %cst_50 {dimension_numbers = #tpu.dot_dimension_numbers<[1], [0], [0], [1], [0, 0, 1, 1], [], []>} : vector<16x80xbf16>, vector<80x256xbf16>, vector<16x256xf32> -> vector<16x256xf32>
    %c0_51 = arith.constant 0 : index
    %c0_52 = arith.constant 0 : index
    %93 = vector.load %arg6[%c0_51, %c0_52] : memref<16x1xf32, #tpu.memory_space<vmem>>, vector<16x1xf32>
    %94 = vector.broadcast %93 : vector<16x1xf32> to vector<16x256xf32>
    %95 = arith.addf %92, %94 : vector<16x256xf32>
    %cst_53 = arith.constant dense<0.000000e+00> : vector<16xf32>
    %96 = vector.multi_reduction <add>, %95, %cst_53 [1] : vector<16x256xf32> to vector<16xf32>
    %97 = vector.shape_cast %96 : vector<16xf32> to vector<16x1xf32>
    %cst_54 = arith.constant 2.560000e+02 : f32
    %98 = vector.broadcast %cst_54 : f32 to vector<16x1xf32>
    %99 = arith.divf %97, %98 : vector<16x1xf32>
    %100 = vector.broadcast %99 : vector<16x1xf32> to vector<16x256xf32>
    %101 = arith.subf %95, %100 : vector<16x256xf32>
    %102 = arith.mulf %101, %101 : vector<16x256xf32>
    %cst_55 = arith.constant dense<0.000000e+00> : vector<16xf32>
    %103 = vector.multi_reduction <add>, %102, %cst_55 [1] : vector<16x256xf32> to vector<16xf32>
    %104 = vector.shape_cast %103 : vector<16xf32> to vector<16x1xf32>
    %cst_56 = arith.constant 2.560000e+02 : f32
    %105 = vector.broadcast %cst_56 : f32 to vector<16x1xf32>
    %106 = arith.divf %104, %105 : vector<16x1xf32>
    %107 = vector.broadcast %99 : vector<16x1xf32> to vector<16x256xf32>
    %108 = arith.subf %95, %107 : vector<16x256xf32>
    %cst_57 = arith.constant 9.99999974E-6 : f32
    %109 = vector.broadcast %cst_57 : f32 to vector<16x1xf32>
    %110 = arith.addf %106, %109 : vector<16x1xf32>
    %111 = math.rsqrt %110 : vector<16x1xf32>
    %112 = vector.broadcast %111 : vector<16x1xf32> to vector<16x256xf32>
    %113 = arith.mulf %108, %112 : vector<16x256xf32>
    %114 = arith.addf %113, %69 : vector<16x256xf32>
    %cst_58 = arith.constant 0.000000e+00 : f32
    %115 = vector.broadcast %cst_58 : f32 to vector<16x256xf32>
    %116 = arith.maximumf %114, %115 : vector<16x256xf32>
    %c0_59 = arith.constant 0 : index
    %c0_60 = arith.constant 0 : index
    %c0_61 = arith.constant 0 : index
    %117 = vector.load %arg7[%c0_59, %c0_60, %c0_61] : memref<1x16x256xf32, #tpu.memory_space<vmem>>, vector<1x16x256xf32>
    %118 = vector.shape_cast %117 : vector<1x16x256xf32> to vector<16x256xf32>
    %119 = vector.shape_cast %116 : vector<16x256xf32> to vector<1x16x256xf32>
    tpu.vector_store %arg7[%c0_59, %c0_60, %c0_61], %119 {strides = array<i32>} : memref<1x16x256xf32, #tpu.memory_space<vmem>>, vector<1x16x256xf32>,
    return
  }
  func.func @transform_0(%arg0: i32) -> (i32, i32, i32) {
    %c0_i32 = arith.constant 0 : i32
    %c0_i32_0 = arith.constant 0 : i32
    %c0_i32_1 = arith.constant 0 : i32
    return %arg0, %c0_i32, %c0_i32_0 : i32, i32, i32
  }
  func.func @transform_1(%arg0: i32) -> (i32, i32, i32) {
    %c0_i32 = arith.constant 0 : i32
    %c0_i32_0 = arith.constant 0 : i32
    %c0_i32_1 = arith.constant 0 : i32
    return %arg0, %c0_i32, %c0_i32_0 : i32, i32, i32
  }
  func.func @transform_2(%arg0: i32) -> (i32, i32) {
    %c0_i32 = arith.constant 0 : i32
    %c0_i32_0 = arith.constant 0 : i32
    %c0_i32_1 = arith.constant 0 : i32
    return %c0_i32, %c0_i32_0 : i32, i32
  }
  func.func @transform_3(%arg0: i32) -> (i32, i32) {
    %c0_i32 = arith.constant 0 : i32
    %c0_i32_0 = arith.constant 0 : i32
    %c0_i32_1 = arith.constant 0 : i32
    return %c0_i32, %c0_i32_0 : i32, i32
  }
  func.func @transform_4(%arg0: i32) -> (i32, i32) {
    %c0_i32 = arith.constant 0 : i32
    %c0_i32_0 = arith.constant 0 : i32
    %c0_i32_1 = arith.constant 0 : i32
    return %c0_i32, %c0_i32_0 : i32, i32
  }
  func.func @transform_5(%arg0: i32) -> (i32, i32) {
    %c0_i32 = arith.constant 0 : i32
    %c0_i32_0 = arith.constant 0 : i32
    %c0_i32_1 = arith.constant 0 : i32
    return %c0_i32, %c0_i32_0 : i32, i32
  }
  func.func @transform_6(%arg0: i32) -> (i32, i32, i32) {
    %c0_i32 = arith.constant 0 : i32
    %c0_i32_0 = arith.constant 0 : i32
    %c0_i32_1 = arith.constant 0 : i32
    return %arg0, %c0_i32, %c0_i32_0 : i32, i32, i32
  }
}

module attributes {stable_mosaic.version = 11 : i64} {
  func.func @_conv_chain_kernel(%arg0: i32, %arg1: memref<1x16x256xf32, #tpu.memory_space<vmem>>, %arg2: memref<8x80xbf16, #tpu.memory_space<vmem>>, %arg3: memref<8x1xf32, #tpu.memory_space<vmem>>, %arg4: memref<1x8x256xf32, #tpu.memory_space<vmem>>, %arg5: memref<80x256xbf16, #tpu.memory_space<vmem>>) attributes {dimension_semantics = [#tpu.dimension_semantics<parallel>], iteration_bounds = array<i64: 2>, scalar_prefetch = 0 : i64, scratch_operands = 1 : i64, tpu.core_type = #tpu.core_type<tc>, window_params = [{transform_indices = @transform_0, window_bounds = array<i64: 1, 16, 256>}, {pipeline_mode = #tpu.pipeline_mode<synchronous>, transform_indices = @transform_1, window_bounds = array<i64: 8, 80>}, {pipeline_mode = #tpu.pipeline_mode<synchronous>, transform_indices = @transform_2, window_bounds = array<i64: 8, 1>}, {transform_indices = @transform_3, window_bounds = array<i64: 1, 8, 256>}]} {
    %c0 = arith.constant 0 : index
    %c0_0 = arith.constant 0 : index
    %c0_1 = arith.constant 0 : index
    %0 = vector.load %arg1[%c0, %c0_0, %c0_1] : memref<1x16x256xf32, #tpu.memory_space<vmem>>, vector<1x16x256xf32>
    %1 = vector.shape_cast %0 : vector<1x16x256xf32> to vector<16x256xf32>
    %c255_i32 = arith.constant 255 : i32
    %2 = tpu.dynamic_rotate %1 by %c255_i32 dim 1 : vector<16x256xf32>, i32 -> vector<16x256xf32>
    %c254_i32 = arith.constant 254 : i32
    %3 = tpu.dynamic_rotate %1 by %c254_i32 dim 1 : vector<16x256xf32>, i32 -> vector<16x256xf32>
    %c253_i32 = arith.constant 253 : i32
    %4 = tpu.dynamic_rotate %1 by %c253_i32 dim 1 : vector<16x256xf32>, i32 -> vector<16x256xf32>
    %c252_i32 = arith.constant 252 : i32
    %5 = tpu.dynamic_rotate %1 by %c252_i32 dim 1 : vector<16x256xf32>, i32 -> vector<16x256xf32>
    %6 = arith.addf %2, %4 : vector<16x256xf32>
    %7 = arith.addf %3, %5 : vector<16x256xf32>
    %8 = arith.subf %2, %4 : vector<16x256xf32>
    %9 = math.absf %8 : vector<16x256xf32>
    %10 = arith.subf %3, %5 : vector<16x256xf32>
    %11 = math.absf %10 : vector<16x256xf32>
    %12 = arith.truncf %1 : vector<16x256xf32> to vector<16x256xbf16>
    %c0_2 = arith.constant 0 : index
    %c0_3 = arith.constant 0 : index
    %13 = vector.load %arg5[%c0_2, %c0_3] : memref<80x256xbf16, #tpu.memory_space<vmem>>, vector<16x256xbf16>
    tpu.vector_store %arg5[%c0_2, %c0_3], %12 {strides = array<i32>} : memref<80x256xbf16, #tpu.memory_space<vmem>>, vector<16x256xbf16>,
    %14 = arith.truncf %6 : vector<16x256xf32> to vector<16x256xbf16>
    %c16 = arith.constant 16 : index
    %c0_4 = arith.constant 0 : index
    %15 = vector.load %arg5[%c16, %c0_4] : memref<80x256xbf16, #tpu.memory_space<vmem>>, vector<16x256xbf16>
    tpu.vector_store %arg5[%c16, %c0_4], %14 {strides = array<i32>} : memref<80x256xbf16, #tpu.memory_space<vmem>>, vector<16x256xbf16>,
    %16 = arith.truncf %7 : vector<16x256xf32> to vector<16x256xbf16>
    %c32 = arith.constant 32 : index
    %c0_5 = arith.constant 0 : index
    %17 = vector.load %arg5[%c32, %c0_5] : memref<80x256xbf16, #tpu.memory_space<vmem>>, vector<16x256xbf16>
    tpu.vector_store %arg5[%c32, %c0_5], %16 {strides = array<i32>} : memref<80x256xbf16, #tpu.memory_space<vmem>>, vector<16x256xbf16>,
    %18 = arith.truncf %9 : vector<16x256xf32> to vector<16x256xbf16>
    %c48 = arith.constant 48 : index
    %c0_6 = arith.constant 0 : index
    %19 = vector.load %arg5[%c48, %c0_6] : memref<80x256xbf16, #tpu.memory_space<vmem>>, vector<16x256xbf16>
    tpu.vector_store %arg5[%c48, %c0_6], %18 {strides = array<i32>} : memref<80x256xbf16, #tpu.memory_space<vmem>>, vector<16x256xbf16>,
    %20 = arith.truncf %11 : vector<16x256xf32> to vector<16x256xbf16>
    %c64 = arith.constant 64 : index
    %c0_7 = arith.constant 0 : index
    %21 = vector.load %arg5[%c64, %c0_7] : memref<80x256xbf16, #tpu.memory_space<vmem>>, vector<16x256xbf16>
    tpu.vector_store %arg5[%c64, %c0_7], %20 {strides = array<i32>} : memref<80x256xbf16, #tpu.memory_space<vmem>>, vector<16x256xbf16>,
    %c0_8 = arith.constant 0 : index
    %c0_9 = arith.constant 0 : index
    %22 = vector.load %arg2[%c0_8, %c0_9] : memref<8x80xbf16, #tpu.memory_space<vmem>>, vector<8x80xbf16>
    %c0_10 = arith.constant 0 : index
    %c0_11 = arith.constant 0 : index
    %23 = vector.load %arg5[%c0_10, %c0_11] : memref<80x256xbf16, #tpu.memory_space<vmem>>, vector<80x256xbf16>
    %cst = arith.constant dense<0.000000e+00> : vector<8x256xf32>
    %24 = tpu.matmul %22, %23, %cst {dimension_numbers = #tpu.dot_dimension_numbers<[1], [0], [0], [1], [0, 0, 1, 1], [], []>} : vector<8x80xbf16>, vector<80x256xbf16>, vector<8x256xf32> -> vector<8x256xf32>
    %c0_12 = arith.constant 0 : index
    %c0_13 = arith.constant 0 : index
    %25 = vector.load %arg3[%c0_12, %c0_13] : memref<8x1xf32, #tpu.memory_space<vmem>>, vector<8x1xf32>
    %26 = vector.broadcast %25 : vector<8x1xf32> to vector<8x256xf32>
    %27 = arith.addf %24, %26 : vector<8x256xf32>
    %c0_14 = arith.constant 0 : index
    %c0_15 = arith.constant 0 : index
    %c0_16 = arith.constant 0 : index
    %28 = vector.load %arg4[%c0_14, %c0_15, %c0_16] : memref<1x8x256xf32, #tpu.memory_space<vmem>>, vector<1x8x256xf32>
    %29 = vector.shape_cast %28 : vector<1x8x256xf32> to vector<8x256xf32>
    %30 = vector.shape_cast %27 : vector<8x256xf32> to vector<1x8x256xf32>
    tpu.vector_store %arg4[%c0_14, %c0_15, %c0_16], %30 {strides = array<i32>} : memref<1x8x256xf32, #tpu.memory_space<vmem>>, vector<1x8x256xf32>,
    return
  }
  func.func @transform_0(%arg0: i32) -> (i32, i32, i32) {
    %c0_i32 = arith.constant 0 : i32
    %c0_i32_0 = arith.constant 0 : i32
    %c0_i32_1 = arith.constant 0 : i32
    return %arg0, %c0_i32, %c0_i32_0 : i32, i32, i32
  }
  func.func @transform_1(%arg0: i32) -> (i32, i32) {
    %c0_i32 = arith.constant 0 : i32
    %c0_i32_0 = arith.constant 0 : i32
    %c0_i32_1 = arith.constant 0 : i32
    return %c0_i32, %c0_i32_0 : i32, i32
  }
  func.func @transform_2(%arg0: i32) -> (i32, i32) {
    %c0_i32 = arith.constant 0 : i32
    %c0_i32_0 = arith.constant 0 : i32
    %c0_i32_1 = arith.constant 0 : i32
    return %c0_i32, %c0_i32_0 : i32, i32
  }
  func.func @transform_3(%arg0: i32) -> (i32, i32, i32) {
    %c0_i32 = arith.constant 0 : i32
    %c0_i32_0 = arith.constant 0 : i32
    %c0_i32_1 = arith.constant 0 : i32
    return %arg0, %c0_i32, %c0_i32_0 : i32, i32, i32
  }
}

module attributes {stable_mosaic.version = 11 : i64} {
  func.func @_conv_chain_kernel(%arg0: i32, %arg1: memref<1x8x256xf32, #tpu.memory_space<vmem>>, %arg2: memref<8x40xbf16, #tpu.memory_space<vmem>>, %arg3: memref<8x1xf32, #tpu.memory_space<vmem>>, %arg4: memref<8x40xbf16, #tpu.memory_space<vmem>>, %arg5: memref<8x1xf32, #tpu.memory_space<vmem>>, %arg6: memref<1x8x256xf32, #tpu.memory_space<vmem>>, %arg7: memref<40x256xbf16, #tpu.memory_space<vmem>>, %arg8: memref<40x256xbf16, #tpu.memory_space<vmem>>) attributes {dimension_semantics = [#tpu.dimension_semantics<parallel>], iteration_bounds = array<i64: 2>, scalar_prefetch = 0 : i64, scratch_operands = 2 : i64, tpu.core_type = #tpu.core_type<tc>, window_params = [{transform_indices = @transform_0, window_bounds = array<i64: 1, 8, 256>}, {pipeline_mode = #tpu.pipeline_mode<synchronous>, transform_indices = @transform_1, window_bounds = array<i64: 8, 40>}, {pipeline_mode = #tpu.pipeline_mode<synchronous>, transform_indices = @transform_2, window_bounds = array<i64: 8, 1>}, {pipeline_mode = #tpu.pipeline_mode<synchronous>, transform_indices = @transform_3, window_bounds = array<i64: 8, 40>}, {pipeline_mode = #tpu.pipeline_mode<synchronous>, transform_indices = @transform_4, window_bounds = array<i64: 8, 1>}, {transform_indices = @transform_5, window_bounds = array<i64: 1, 8, 256>}]} {
    %c0 = arith.constant 0 : index
    %c0_0 = arith.constant 0 : index
    %c0_1 = arith.constant 0 : index
    %0 = vector.load %arg1[%c0, %c0_0, %c0_1] : memref<1x8x256xf32, #tpu.memory_space<vmem>>, vector<1x8x256xf32>
    %1 = vector.shape_cast %0 : vector<1x8x256xf32> to vector<8x256xf32>
    %c255_i32 = arith.constant 255 : i32
    %2 = tpu.dynamic_rotate %1 by %c255_i32 dim 1 : vector<8x256xf32>, i32 -> vector<8x256xf32>
    %c254_i32 = arith.constant 254 : i32
    %3 = tpu.dynamic_rotate %1 by %c254_i32 dim 1 : vector<8x256xf32>, i32 -> vector<8x256xf32>
    %c253_i32 = arith.constant 253 : i32
    %4 = tpu.dynamic_rotate %1 by %c253_i32 dim 1 : vector<8x256xf32>, i32 -> vector<8x256xf32>
    %c252_i32 = arith.constant 252 : i32
    %5 = tpu.dynamic_rotate %1 by %c252_i32 dim 1 : vector<8x256xf32>, i32 -> vector<8x256xf32>
    %6 = arith.addf %2, %4 : vector<8x256xf32>
    %7 = arith.addf %3, %5 : vector<8x256xf32>
    %8 = arith.subf %2, %4 : vector<8x256xf32>
    %9 = math.absf %8 : vector<8x256xf32>
    %10 = arith.subf %3, %5 : vector<8x256xf32>
    %11 = math.absf %10 : vector<8x256xf32>
    %12 = arith.truncf %1 : vector<8x256xf32> to vector<8x256xbf16>
    %c0_2 = arith.constant 0 : index
    %c0_3 = arith.constant 0 : index
    %13 = vector.load %arg7[%c0_2, %c0_3] : memref<40x256xbf16, #tpu.memory_space<vmem>>, vector<8x256xbf16>
    tpu.vector_store %arg7[%c0_2, %c0_3], %12 {strides = array<i32>} : memref<40x256xbf16, #tpu.memory_space<vmem>>, vector<8x256xbf16>,
    %14 = arith.truncf %6 : vector<8x256xf32> to vector<8x256xbf16>
    %c8 = arith.constant 8 : index
    %c0_4 = arith.constant 0 : index
    %15 = vector.load %arg7[%c8, %c0_4] : memref<40x256xbf16, #tpu.memory_space<vmem>>, vector<8x256xbf16>
    tpu.vector_store %arg7[%c8, %c0_4], %14 {strides = array<i32>} : memref<40x256xbf16, #tpu.memory_space<vmem>>, vector<8x256xbf16>,
    %16 = arith.truncf %7 : vector<8x256xf32> to vector<8x256xbf16>
    %c16 = arith.constant 16 : index
    %c0_5 = arith.constant 0 : index
    %17 = vector.load %arg7[%c16, %c0_5] : memref<40x256xbf16, #tpu.memory_space<vmem>>, vector<8x256xbf16>
    tpu.vector_store %arg7[%c16, %c0_5], %16 {strides = array<i32>} : memref<40x256xbf16, #tpu.memory_space<vmem>>, vector<8x256xbf16>,
    %18 = arith.truncf %9 : vector<8x256xf32> to vector<8x256xbf16>
    %c24 = arith.constant 24 : index
    %c0_6 = arith.constant 0 : index
    %19 = vector.load %arg7[%c24, %c0_6] : memref<40x256xbf16, #tpu.memory_space<vmem>>, vector<8x256xbf16>
    tpu.vector_store %arg7[%c24, %c0_6], %18 {strides = array<i32>} : memref<40x256xbf16, #tpu.memory_space<vmem>>, vector<8x256xbf16>,
    %20 = arith.truncf %11 : vector<8x256xf32> to vector<8x256xbf16>
    %c32 = arith.constant 32 : index
    %c0_7 = arith.constant 0 : index
    %21 = vector.load %arg7[%c32, %c0_7] : memref<40x256xbf16, #tpu.memory_space<vmem>>, vector<8x256xbf16>
    tpu.vector_store %arg7[%c32, %c0_7], %20 {strides = array<i32>} : memref<40x256xbf16, #tpu.memory_space<vmem>>, vector<8x256xbf16>,
    %c0_8 = arith.constant 0 : index
    %c0_9 = arith.constant 0 : index
    %22 = vector.load %arg2[%c0_8, %c0_9] : memref<8x40xbf16, #tpu.memory_space<vmem>>, vector<8x40xbf16>
    %c0_10 = arith.constant 0 : index
    %c0_11 = arith.constant 0 : index
    %23 = vector.load %arg7[%c0_10, %c0_11] : memref<40x256xbf16, #tpu.memory_space<vmem>>, vector<40x256xbf16>
    %cst = arith.constant dense<0.000000e+00> : vector<8x256xf32>
    %24 = tpu.matmul %22, %23, %cst {dimension_numbers = #tpu.dot_dimension_numbers<[1], [0], [0], [1], [0, 0, 1, 1], [], []>} : vector<8x40xbf16>, vector<40x256xbf16>, vector<8x256xf32> -> vector<8x256xf32>
    %c0_12 = arith.constant 0 : index
    %c0_13 = arith.constant 0 : index
    %25 = vector.load %arg3[%c0_12, %c0_13] : memref<8x1xf32, #tpu.memory_space<vmem>>, vector<8x1xf32>
    %26 = vector.broadcast %25 : vector<8x1xf32> to vector<8x256xf32>
    %27 = arith.addf %24, %26 : vector<8x256xf32>
    %cst_14 = arith.constant dense<0.000000e+00> : vector<8xf32>
    %28 = vector.multi_reduction <add>, %27, %cst_14 [1] : vector<8x256xf32> to vector<8xf32>
    %29 = vector.shape_cast %28 : vector<8xf32> to vector<8x1xf32>
    %cst_15 = arith.constant 2.560000e+02 : f32
    %30 = vector.broadcast %cst_15 : f32 to vector<8x1xf32>
    %31 = arith.divf %29, %30 : vector<8x1xf32>
    %32 = vector.broadcast %31 : vector<8x1xf32> to vector<8x256xf32>
    %33 = arith.subf %27, %32 : vector<8x256xf32>
    %34 = arith.mulf %33, %33 : vector<8x256xf32>
    %cst_16 = arith.constant dense<0.000000e+00> : vector<8xf32>
    %35 = vector.multi_reduction <add>, %34, %cst_16 [1] : vector<8x256xf32> to vector<8xf32>
    %36 = vector.shape_cast %35 : vector<8xf32> to vector<8x1xf32>
    %cst_17 = arith.constant 2.560000e+02 : f32
    %37 = vector.broadcast %cst_17 : f32 to vector<8x1xf32>
    %38 = arith.divf %36, %37 : vector<8x1xf32>
    %39 = vector.broadcast %31 : vector<8x1xf32> to vector<8x256xf32>
    %40 = arith.subf %27, %39 : vector<8x256xf32>
    %cst_18 = arith.constant 9.99999974E-6 : f32
    %41 = vector.broadcast %cst_18 : f32 to vector<8x1xf32>
    %42 = arith.addf %38, %41 : vector<8x1xf32>
    %43 = math.rsqrt %42 : vector<8x1xf32>
    %44 = vector.broadcast %43 : vector<8x1xf32> to vector<8x256xf32>
    %45 = arith.mulf %40, %44 : vector<8x256xf32>
    %cst_19 = arith.constant 0.000000e+00 : f32
    %46 = vector.broadcast %cst_19 : f32 to vector<8x256xf32>
    %47 = arith.maximumf %45, %46 : vector<8x256xf32>
    %c255_i32_20 = arith.constant 255 : i32
    %48 = tpu.dynamic_rotate %47 by %c255_i32_20 dim 1 : vector<8x256xf32>, i32 -> vector<8x256xf32>
    %c254_i32_21 = arith.constant 254 : i32
    %49 = tpu.dynamic_rotate %47 by %c254_i32_21 dim 1 : vector<8x256xf32>, i32 -> vector<8x256xf32>
    %c253_i32_22 = arith.constant 253 : i32
    %50 = tpu.dynamic_rotate %47 by %c253_i32_22 dim 1 : vector<8x256xf32>, i32 -> vector<8x256xf32>
    %c252_i32_23 = arith.constant 252 : i32
    %51 = tpu.dynamic_rotate %47 by %c252_i32_23 dim 1 : vector<8x256xf32>, i32 -> vector<8x256xf32>
    %52 = arith.addf %48, %50 : vector<8x256xf32>
    %53 = arith.addf %49, %51 : vector<8x256xf32>
    %54 = arith.subf %48, %50 : vector<8x256xf32>
    %55 = math.absf %54 : vector<8x256xf32>
    %56 = arith.subf %49, %51 : vector<8x256xf32>
    %57 = math.absf %56 : vector<8x256xf32>
    %58 = arith.truncf %47 : vector<8x256xf32> to vector<8x256xbf16>
    %c0_24 = arith.constant 0 : index
    %c0_25 = arith.constant 0 : index
    %59 = vector.load %arg8[%c0_24, %c0_25] : memref<40x256xbf16, #tpu.memory_space<vmem>>, vector<8x256xbf16>
    tpu.vector_store %arg8[%c0_24, %c0_25], %58 {strides = array<i32>} : memref<40x256xbf16, #tpu.memory_space<vmem>>, vector<8x256xbf16>,
    %60 = arith.truncf %52 : vector<8x256xf32> to vector<8x256xbf16>
    %c8_26 = arith.constant 8 : index
    %c0_27 = arith.constant 0 : index
    %61 = vector.load %arg8[%c8_26, %c0_27] : memref<40x256xbf16, #tpu.memory_space<vmem>>, vector<8x256xbf16>
    tpu.vector_store %arg8[%c8_26, %c0_27], %60 {strides = array<i32>} : memref<40x256xbf16, #tpu.memory_space<vmem>>, vector<8x256xbf16>,
    %62 = arith.truncf %53 : vector<8x256xf32> to vector<8x256xbf16>
    %c16_28 = arith.constant 16 : index
    %c0_29 = arith.constant 0 : index
    %63 = vector.load %arg8[%c16_28, %c0_29] : memref<40x256xbf16, #tpu.memory_space<vmem>>, vector<8x256xbf16>
    tpu.vector_store %arg8[%c16_28, %c0_29], %62 {strides = array<i32>} : memref<40x256xbf16, #tpu.memory_space<vmem>>, vector<8x256xbf16>,
    %64 = arith.truncf %55 : vector<8x256xf32> to vector<8x256xbf16>
    %c24_30 = arith.constant 24 : index
    %c0_31 = arith.constant 0 : index
    %65 = vector.load %arg8[%c24_30, %c0_31] : memref<40x256xbf16, #tpu.memory_space<vmem>>, vector<8x256xbf16>
    tpu.vector_store %arg8[%c24_30, %c0_31], %64 {strides = array<i32>} : memref<40x256xbf16, #tpu.memory_space<vmem>>, vector<8x256xbf16>,
    %66 = arith.truncf %57 : vector<8x256xf32> to vector<8x256xbf16>
    %c32_32 = arith.constant 32 : index
    %c0_33 = arith.constant 0 : index
    %67 = vector.load %arg8[%c32_32, %c0_33] : memref<40x256xbf16, #tpu.memory_space<vmem>>, vector<8x256xbf16>
    tpu.vector_store %arg8[%c32_32, %c0_33], %66 {strides = array<i32>} : memref<40x256xbf16, #tpu.memory_space<vmem>>, vector<8x256xbf16>,
    %c0_34 = arith.constant 0 : index
    %c0_35 = arith.constant 0 : index
    %68 = vector.load %arg4[%c0_34, %c0_35] : memref<8x40xbf16, #tpu.memory_space<vmem>>, vector<8x40xbf16>
    %c0_36 = arith.constant 0 : index
    %c0_37 = arith.constant 0 : index
    %69 = vector.load %arg8[%c0_36, %c0_37] : memref<40x256xbf16, #tpu.memory_space<vmem>>, vector<40x256xbf16>
    %cst_38 = arith.constant dense<0.000000e+00> : vector<8x256xf32>
    %70 = tpu.matmul %68, %69, %cst_38 {dimension_numbers = #tpu.dot_dimension_numbers<[1], [0], [0], [1], [0, 0, 1, 1], [], []>} : vector<8x40xbf16>, vector<40x256xbf16>, vector<8x256xf32> -> vector<8x256xf32>
    %c0_39 = arith.constant 0 : index
    %c0_40 = arith.constant 0 : index
    %71 = vector.load %arg5[%c0_39, %c0_40] : memref<8x1xf32, #tpu.memory_space<vmem>>, vector<8x1xf32>
    %72 = vector.broadcast %71 : vector<8x1xf32> to vector<8x256xf32>
    %73 = arith.addf %70, %72 : vector<8x256xf32>
    %cst_41 = arith.constant dense<0.000000e+00> : vector<8xf32>
    %74 = vector.multi_reduction <add>, %73, %cst_41 [1] : vector<8x256xf32> to vector<8xf32>
    %75 = vector.shape_cast %74 : vector<8xf32> to vector<8x1xf32>
    %cst_42 = arith.constant 2.560000e+02 : f32
    %76 = vector.broadcast %cst_42 : f32 to vector<8x1xf32>
    %77 = arith.divf %75, %76 : vector<8x1xf32>
    %78 = vector.broadcast %77 : vector<8x1xf32> to vector<8x256xf32>
    %79 = arith.subf %73, %78 : vector<8x256xf32>
    %80 = arith.mulf %79, %79 : vector<8x256xf32>
    %cst_43 = arith.constant dense<0.000000e+00> : vector<8xf32>
    %81 = vector.multi_reduction <add>, %80, %cst_43 [1] : vector<8x256xf32> to vector<8xf32>
    %82 = vector.shape_cast %81 : vector<8xf32> to vector<8x1xf32>
    %cst_44 = arith.constant 2.560000e+02 : f32
    %83 = vector.broadcast %cst_44 : f32 to vector<8x1xf32>
    %84 = arith.divf %82, %83 : vector<8x1xf32>
    %85 = vector.broadcast %77 : vector<8x1xf32> to vector<8x256xf32>
    %86 = arith.subf %73, %85 : vector<8x256xf32>
    %cst_45 = arith.constant 9.99999974E-6 : f32
    %87 = vector.broadcast %cst_45 : f32 to vector<8x1xf32>
    %88 = arith.addf %84, %87 : vector<8x1xf32>
    %89 = math.rsqrt %88 : vector<8x1xf32>
    %90 = vector.broadcast %89 : vector<8x1xf32> to vector<8x256xf32>
    %91 = arith.mulf %86, %90 : vector<8x256xf32>
    %92 = arith.addf %91, %47 : vector<8x256xf32>
    %cst_46 = arith.constant 0.000000e+00 : f32
    %93 = vector.broadcast %cst_46 : f32 to vector<8x256xf32>
    %94 = arith.maximumf %92, %93 : vector<8x256xf32>
    %c0_47 = arith.constant 0 : index
    %c0_48 = arith.constant 0 : index
    %c0_49 = arith.constant 0 : index
    %95 = vector.load %arg6[%c0_47, %c0_48, %c0_49] : memref<1x8x256xf32, #tpu.memory_space<vmem>>, vector<1x8x256xf32>
    %96 = vector.shape_cast %95 : vector<1x8x256xf32> to vector<8x256xf32>
    %97 = vector.shape_cast %94 : vector<8x256xf32> to vector<1x8x256xf32>
    tpu.vector_store %arg6[%c0_47, %c0_48, %c0_49], %97 {strides = array<i32>} : memref<1x8x256xf32, #tpu.memory_space<vmem>>, vector<1x8x256xf32>,
    return
  }
  func.func @transform_0(%arg0: i32) -> (i32, i32, i32) {
    %c0_i32 = arith.constant 0 : i32
    %c0_i32_0 = arith.constant 0 : i32
    %c0_i32_1 = arith.constant 0 : i32
    return %arg0, %c0_i32, %c0_i32_0 : i32, i32, i32
  }
  func.func @transform_1(%arg0: i32) -> (i32, i32) {
    %c0_i32 = arith.constant 0 : i32
    %c0_i32_0 = arith.constant 0 : i32
    %c0_i32_1 = arith.constant 0 : i32
    return %c0_i32, %c0_i32_0 : i32, i32
  }
  func.func @transform_2(%arg0: i32) -> (i32, i32) {
    %c0_i32 = arith.constant 0 : i32
    %c0_i32_0 = arith.constant 0 : i32
    %c0_i32_1 = arith.constant 0 : i32
    return %c0_i32, %c0_i32_0 : i32, i32
  }
  func.func @transform_3(%arg0: i32) -> (i32, i32) {
    %c0_i32 = arith.constant 0 : i32
    %c0_i32_0 = arith.constant 0 : i32
    %c0_i32_1 = arith.constant 0 : i32
    return %c0_i32, %c0_i32_0 : i32, i32
  }
  func.func @transform_4(%arg0: i32) -> (i32, i32) {
    %c0_i32 = arith.constant 0 : i32
    %c0_i32_0 = arith.constant 0 : i32
    %c0_i32_1 = arith.constant 0 : i32
    return %c0_i32, %c0_i32_0 : i32, i32
  }
  func.func @transform_5(%arg0: i32) -> (i32, i32, i32) {
    %c0_i32 = arith.constant 0 : i32
    %c0_i32_0 = arith.constant 0 : i32
    %c0_i32_1 = arith.constant 0 : i32
    return %arg0, %c0_i32, %c0_i32_0 : i32, i32, i32
  }
}

</mosaic_0001>

<llo_original>
// kernel: a_call__.8
$region0: #{a_call__.8}
  #allocation0 [shape = 'u32[]', space=smem, size = 0x4, offset = 0x4, fixed_abs, tag = 'smem constant byte address 0x4 - core index']
  #allocation1 [shape = 'u32[144,128]{1,0:T(1,128)}', space=vmem, size = 0x12000, scoped, tag = 'internal scratch']
  #allocation2 [shape = 'bf16[160,128]{1,0:T(16,128)(2,1)}', space=vmem, size = 0xa000, scoped, tag = 'scratch operand']
  %s0 = inlined_call_operand.vmem [shape: f32[2,32,128], index: 0, kind: input, shape index: {}]
  %s1 = inlined_call_operand.vmem [shape: bf16[16,160], index: 1, kind: input, shape index: {}]
  %s2 = inlined_call_operand.vmem [shape: f32[16,1], index: 2, kind: input, shape index: {}]
  %s3 = inlined_call_operand.vmem [shape: f32[2,16,128], index: 3, kind: output, shape index: {}]
  %s4 = sld [smem:[#allocation0]]
  $region45: #{a_call__.8} parent=0
    _
  %s6 = ssub.s32 1, %s4
  %s7 = scalar_select 0, %s6, %s4
  loop: start=0, step=1, limit=4
  $region2: #{a_call__.8} parent=0 // loop_pre_header
    _
  $region3: #{a_call__.8} parent=0 // loop_header
    %s9 = sphi 0, %s13
    %p10 = scmp.ge.s32.totalorder %s9, 4
    %s19 = sphi 0, %s21
    %s22 = sphi 0, %s19
    %s23 = sphi 0, %s22
    %s39 = sphi 0, %s23
    %s43 = sphi 0, %s43
    %s45 = sphi 0, %s43
    %s46 = sphi 0, %s45
    %s60 = sphi 0, %s46
    %s64 = sphi 0, %s64
    %s66 = sphi 0, %s64
    %s67 = sphi 0, %s66
    %s81 = sphi 0, %s67
    %s87 = sphi 0, %s89
    %s90 = sphi 0, %s87
    %s91 = sphi 0, %s90
    %s107 = sphi 0, %s91
  $region4: #{a_call__.8} parent=0 // loop_header_branch
    %12 = sbr.rel (%p10) target = $region8
  $region5: #{a_call__.8} parent=0 // loop_body
    %s14 = ssub.s32 %s9, 1
    %s15 = ssub.s32 %s9, 2
    %s16 = sadd.s32 %s9, 1
    %s17 = ssub.s32 %s9, %s16
    %p18 = scmp.eq.s32.totalorder %s17, 0
    %s20 = sadd.s32 %s19, 1
    %s21 = scalar_select %p18, %s19, %s20
    %p24 = pneg %p18
    %p25 = scmp.eq.s32.totalorder %s9, 1
    %p26 = por %p24, %p25
    %p27 = scmp.ne.s32.totalorder %s19, %s22
    %p28 = scmp.eq.s32.totalorder %s9, 0
    %p29 = por %p27, %p28
    %p30 = scmp.ne.s32.totalorder %s19, %s22
    %p31 = scmp.eq.s32.totalorder %s14, 1
    %p32 = por %p30, %p31
    %p33 = scmp.ne.s32.totalorder %s22, %s23
    %p34 = scmp.eq.s32.totalorder %s14, 0
    %p35 = por %p33, %p34
    %p36 = scmp.ne.s32.totalorder %s22, %s23
    %p37 = scmp.eq.s32.totalorder %s15, 1
    %p38 = por %p36, %p37
    %p40 = scmp.ne.s32.totalorder %s23, %s39
    %p41 = scmp.eq.s32.totalorder %s15, 0
    %p42 = por %p40, %p41
    %s44 = sadd.s32 %s43, 1
    %p47 = scmp.eq.s32.totalorder %s9, 1
    %p48 = scmp.ne.s32.totalorder %s43, %s45
    %p49 = scmp.eq.s32.totalorder %s9, 0
    %p50 = por %p48, %p49
    %p51 = scmp.ne.s32.totalorder %s43, %s45
    %p52 = scmp.eq.s32.totalorder %s14, 1
    %p53 = por %p51, %p52
    %p54 = scmp.ne.s32.totalorder %s45, %s46
    %p55 = scmp.eq.s32.totalorder %s14, 0
    %p56 = por %p54, %p55
    %p57 = scmp.ne.s32.totalorder %s45, %s46
    %p58 = scmp.eq.s32.totalorder %s15, 1
    %p59 = por %p57, %p58
    %p61 = scmp.ne.s32.totalorder %s46, %s60
    %p62 = scmp.eq.s32.totalorder %s15, 0
    %p63 = por %p61, %p62
    %s65 = sadd.s32 %s64, 1
    %p68 = scmp.eq.s32.totalorder %s9, 1
    %p69 = scmp.ne.s32.totalorder %s64, %s66
    %p70 = scmp.eq.s32.totalorder %s9, 0
    %p71 = por %p69, %p70
    %p72 = scmp.ne.s32.totalorder %s64, %s66
    %p73 = scmp.eq.s32.totalorder %s14, 1
    %p74 = por %p72, %p73
    %p75 = scmp.ne.s32.totalorder %s66, %s67
    %p76 = scmp.eq.s32.totalorder %s14, 0
    %p77 = por %p75, %p76
    %p78 = scmp.ne.s32.totalorder %s66, %s67
    %p79 = scmp.eq.s32.totalorder %s15, 1
    %p80 = por %p78, %p79
    %p82 = scmp.ne.s32.totalorder %s67, %s81
    %p83 = scmp.eq.s32.totalorder %s15, 0
    %p84 = por %p82, %p83
    %s85 = ssub.s32 %s9, %s16
    %p86 = scmp.eq.s32.totalorder %s85, 0
    %s88 = sadd.s32 %s87, 1
    %s89 = scalar_select %p86, %s87, %s88
    %p92 = pneg %p86
    %p93 = scmp.eq.s32.totalorder %s9, 1
    %p94 = por %p92, %p93
    %p95 = scmp.ne.s32.totalorder %s87, %s90
    %p96 = scmp.eq.s32.totalorder %s9, 0
    %p97 = por %p95, %p96
    %p98 = scmp.ne.s32.totalorder %s87, %s90
    %p99 = scmp.eq.s32.totalorder %s14, 1
    %p100 = por %p98, %p99
    %p101 = scmp.ne.s32.totalorder %s90, %s91
    %p102 = scmp.eq.s32.totalorder %s14, 0
    %p103 = por %p101, %p102
    %p104 = scmp.ne.s32.totalorder %s90, %s91
    %p105 = scmp.eq.s32.totalorder %s15, 1
    %p106 = por %p104, %p105
    %p108 = scmp.ne.s32.totalorder %s91, %s107
    %p109 = scmp.eq.s32.totalorder %s15, 0
    %p110 = por %p108, %p109
    %p111 = scmp.le.s32.totalorder 1, %s9
    %p112 = scmp.lt.s32.totalorder %s9, 3
    %p113 = pnand %p111, %p112
    %p114 = pneg %p113
    // Predicated region
    $region9: #{a_call__.8} parent=5 // pred_check
      _
    $region10: #{a_call__.8} parent=5 // pred_check_branch
      %116 = sbr.rel (%p113) target = $region12
    $region11: #{a_call__.8} parent=5 // pred_region
      %s117 = ssub.s32 %s9, 1
      // Predicated region
      $region13: #{a_call__.8} parent=11 // pred_check
        %p118 = pneg %p56
      $region14: #{a_call__.8} parent=11 // pred_check_branch
        %120 = sbr.rel (%p118) target = $region16
      $region15: #{a_call__.8} parent=11 // pred_region
        _
      $region16: #{a_call__.8} parent=11 // pred_fallthru
        _
      // Predicated region
      $region17: #{a_call__.8} parent=11 // pred_check
        %p121 = pneg %p77
      $region18: #{a_call__.8} parent=11 // pred_check_branch
        %123 = sbr.rel (%p121) target = $region20
      $region19: #{a_call__.8} parent=11 // pred_region
        _
      $region20: #{a_call__.8} parent=11 // pred_fallthru
        _
    $region12: #{a_call__.8} parent=5 // pred_fallthru
      _
    %p124 = scmp.lt.s32.totalorder %s9, 2
    // Predicated region
    $region21: #{a_call__.8} parent=5 // pred_check
      %p125 = pneg %p124
    $region22: #{a_call__.8} parent=5 // pred_check_branch
      %127 = sbr.rel (%p125) target = $region24
    $region23: #{a_call__.8} parent=5 // pred_region
      // Predicated region
      $region25: #{a_call__.8} parent=23 // pred_check
        %p128 = pneg %p29
      $region26: #{a_call__.8} parent=23 // pred_check_branch
        %130 = sbr.rel (%p128) target = $region28
      $region27: #{a_call__.8} parent=23 // pred_region
        %p131 = scmp.lt.s32.totalorder %s9, 1
        %s132 = scalar_select %p131, %s9, 1
        %s133 = smul.addr %s132, 4
        %s134 = smul.addr %s133, 8
        %s135 = scalar_lea.vmem %s0, %s134
      $region28: #{a_call__.8} parent=23 // pred_fallthru
        _
    $region24: #{a_call__.8} parent=5 // pred_fallthru
      _
    %p136 = scmp.le.s32.totalorder 1, %s9
    %p137 = scmp.lt.s32.totalorder %s9, 3
    %p138 = pnand %p136, %p137
    %p139 = pneg %p138
    // Predicated region
    $region29: #{a_call__.8} parent=5 // pred_check
      _
    $region30: #{a_call__.8} parent=5 // pred_check_branch
      %141 = sbr.rel (%p138) target = $region32
    $region31: #{a_call__.8} parent=5 // pred_region
      %s142 = ssub.s32 %s9, 1
      %p143 = scmp.lt.s32.totalorder %s14, 1
      %s144 = scalar_select %p143, %s14, 1
      %s145 = smul.addr %s144, 4
      %s146 = smul.addr %s145, 8
      %s147 = scalar_lea.vmem %s0, %s146
      %p148 = pneg %p35
      %p149 = pneg %p32
      %p150 = pneg %p56
      %p151 = pneg %p53
      %p152 = pneg %p77
      %p153 = pneg %p74
      %p154 = pneg %p103
      %p155 = pneg %p100
      %p156 = scmp.lt.s32.totalorder %s14, 1
      %s157 = scalar_select %p156, %s14, 1
      %s158 = smul.addr %s157, 2
      %s159 = smul.addr %s158, 8
      %s160 = scalar_lea.vmem %s3, %s159
      %p161 = scmp.lt.s32.totalorder %s14, 1
      %s162 = scalar_select %p161, %s14, 1
      %s163 = smul.addr %s162, 4
      %s164 = smul.addr %s163, 8
      %s165 = scalar_lea.vmem %s0, %s164
      %p166 = scmp.lt.s32.totalorder %s14, 1
      %s167 = scalar_select %p166, %s14, 1
      %s168 = smul.addr %s167, 2
      %s169 = smul.addr %s168, 8
      %s170 = scalar_lea.vmem %s3, %s169
      %v172 = vld [vmem:[%s165] sm:$0xff]
      %v173 = vld [vmem:[%s165 + $0x8] sm:$0xff]
      %v174 = vld [vmem:[%s165 + $0x10] sm:$0xff]
      %v175 = vld [vmem:[%s165 + $0x18] sm:$0xff]
      %176 = vrot.lane.b32.xlu0 %v172, 127
      %v177 = vpop.permute.xlu0 %176
      %178 = vrot.lane.b32.xlu0 %v173, 127
      %v179 = vpop.permute.xlu0 %178
      %180 = vrot.lane.b32.xlu0 %v174, 127
      %v181 = vpop.permute.xlu0 %180
      %182 = vrot.lane.b32.xlu0 %v175, 127
      %v183 = vpop.permute.xlu0 %182
      %184 = vrot.lane.b32.xlu0 %v172, 126
      %v185 = vpop.permute.xlu0 %184
      %186 = vrot.lane.b32.xlu0 %v173, 126
      %v187 = vpop.permute.xlu0 %186
      %188 = vrot.lane.b32.xlu0 %v174, 126
      %v189 = vpop.permute.xlu0 %188
      %190 = vrot.lane.b32.xlu0 %v175, 126
      %v191 = vpop.permute.xlu0 %190
      %192 = vrot.lane.b32.xlu0 %v172, 125
      %v193 = vpop.permute.xlu0 %192
      %194 = vrot.lane.b32.xlu0 %v173, 125
      %v195 = vpop.permute.xlu0 %194
      %196 = vrot.lane.b32.xlu0 %v174, 125
      %v197 = vpop.permute.xlu0 %196
      %198 = vrot.lane.b32.xlu0 %v175, 125
      %v199 = vpop.permute.xlu0 %198
      %200 = vrot.lane.b32.xlu0 %v172, 124
      %v201 = vpop.permute.xlu0 %200
      %202 = vrot.lane.b32.xlu0 %v173, 124
      %v203 = vpop.permute.xlu0 %202
      %204 = vrot.lane.b32.xlu0 %v174, 124
      %v205 = vpop.permute.xlu0 %204
      %206 = vrot.lane.b32.xlu0 %v175, 124
      %v207 = vpop.permute.xlu0 %206
      %v208 = vadd.f32 %v177, %v193
      %v209 = vadd.f32 %v179, %v195
      %v210 = vadd.f32 %v181, %v197
      %v211 = vadd.f32 %v183, %v199
      %v212 = vadd.f32 %v185, %v201
      %v213 = vadd.f32 %v187, %v203
      %v214 = vadd.f32 %v189, %v205
      %v215 = vadd.f32 %v191, %v207
      %v216 = vsub.f32 %v177, %v193
      %v217 = vsub.f32 %v179, %v195
      %v218 = vsub.f32 %v181, %v197
      %v219 = vsub.f32 %v183, %v199
      %v220 = vand.u32 2147483647, %v216
      %v221 = vand.u32 2147483647, %v217
      %v222 = vand.u32 2147483647, %v218
      %v223 = vand.u32 2147483647, %v219
      %v224 = vsub.f32 %v185, %v201
      %v225 = vsub.f32 %v187, %v203
      %v226 = vsub.f32 %v189, %v205
      %v227 = vsub.f32 %v191, %v207
      %v228 = vand.u32 2147483647, %v224
      %v229 = vand.u32 2147483647, %v225
      %v230 = vand.u32 2147483647, %v226
      %v231 = vand.u32 2147483647, %v227
      %v232 = vpack.c.bf16 %v173, %v172
      %v233 = vpack.c.bf16 %v175, %v174
      %234 = vst [vmem:[#allocation2] sm:$0xff] %v232
      %235 = vst [vmem:[#allocation2 + $0x8] sm:$0xff] %v233
      %v236 = vpack.c.bf16 %v209, %v208
      %v237 = vpack.c.bf16 %v211, %v210
      %238 = vst [vmem:[#allocation2 + $0x10] sm:$0xff] %v236
      %239 = vst [vmem:[#allocation2 + $0x18] sm:$0xff] %v237
      %v240 = vpack.c.bf16 %v213, %v212
      %v241 = vpack.c.bf16 %v215, %v214
      %242 = vst [vmem:[#allocation2 + $0x20] sm:$0xff] %v240
      %243 = vst [vmem:[#allocation2 + $0x28] sm:$0xff] %v241
      %v244 = vpack.c.bf16 %v221, %v220
      %v245 = vpack.c.bf16 %v223, %v222
      %246 = vst [vmem:[#allocation2 + $0x30] sm:$0xff] %v244
      %247 = vst [vmem:[#allocation2 + $0x38] sm:$0xff] %v245
      %v248 = vpack.c.bf16 %v229, %v228
      %v249 = vpack.c.bf16 %v231, %v230
      %250 = vst [vmem:[#allocation2 + $0x40] sm:$0xff] %v248
      %251 = vst [vmem:[#allocation2 + $0x48] sm:$0xff] %v249
      %v252 = vld [vmem:[%s1] sm:$0xff]
      %v253 = vld [vmem:[%s1 + $0x8] sm:$0xff]
      %v254 = vld [vmem:[#allocation2] sm:$0xff]
      %v255 = vld [vmem:[#allocation2 + $0x8] sm:$0xff]
      %v256 = vld [vmem:[#allocation2 + $0x10] sm:$0xff]
      %v257 = vld [vmem:[#allocation2 + $0x18] sm:$0xff]
      %v258 = vld [vmem:[#allocation2 + $0x20] sm:$0xff]
      %v259 = vld [vmem:[#allocation2 + $0x28] sm:$0xff]
      %v260 = vld [vmem:[#allocation2 + $0x30] sm:$0xff]
      %v261 = vld [vmem:[#allocation2 + $0x38] sm:$0xff]
      %v262 = vld [vmem:[#allocation2 + $0x40] sm:$0xff]
      %v263 = vld [vmem:[#allocation2 + $0x48] sm:$0xff]
      %v264 = vld [vmem:[%s2] sm:$0xff]
      %v265 = vld [vmem:[%s2 + $0x8] sm:$0xff]
      %267 = vset.pattern.permute.xlu0 0
      %268 = vperm.xlu0 %267, %v264
      %v269 = vpop.permute.xlu0 %268
      %272 = vset.pattern.permute.xlu0 0
      %273 = vperm.xlu0 %272, %v265
      %v274 = vpop.permute.xlu0 %273
      %v278 = vunpack.c.l.b16 %v252
      %v279 = vunpack.c.h.b16 %v252
      %v280 = vunpack.c.l.b16 %v253
      %v281 = vunpack.c.h.b16 %v253
      %v282 = vpack.c.b16 %v280, %v278
      %v283 = vpack.c.b16 %v281, %v279
      %vm285 = vcmask 261120
      %v287 = vsel %vm285, %v283, 0
      %289 = vmatprep.subr.bf16.mxu0 0
      %290 = vmatpush1.bf16.msra.mxu0 %v254
      %291 = vmatprep.subr.bf16.mxu0 0
      %292 = vmatpush1.bf16.msra.mxu0 %v255
      %293 = vmatprep.subr.bf16.mxu0 0
      %294 = vmatpush1.bf16.msra.mxu0 %v256
      %295 = vmatprep.subr.bf16.mxu0 0
      %296 = vmatpush1.bf16.msra.mxu0 %v257
      %297 = vmatprep.subr.bf16.mxu0 0
      %298 = vmatpush1.bf16.msra.mxu0 %v258
      %299 = vmatprep.subr.bf16.mxu0 0
      %300 = vmatpush1.bf16.msra.mxu0 %v259
      %301 = vmatprep.subr.bf16.mxu0 0
      %302 = vmatpush1.bf16.msra.mxu0 %v260
      %303 = vmatprep.subr.bf16.mxu0 0
      %304 = vmatpush1.bf16.msra.mxu0 %v261
      %305 = vmatprep.subr.bf16.mxu0 0
      %306 = vmatpush1.bf16.msra.mxu0 %v262
      %307 = vmatprep.subr.bf16.mxu0 0
      %308 = vmatpush1.bf16.msra.mxu0 %v263
      %309 = vmatprep.subr.bf16.mxu0 0
      %310 = vmatpush1.bf16.msra.mxu0 0
      %311 = vmatprep.subr.bf16.mxu0 0
      %312 = vmatpush1.bf16.msra.mxu0 0
      %313 = vmatprep.subr.bf16.mxu0 0
      %314 = vmatpush1.bf16.msra.mxu0 0
      %315 = vmatprep.subr.bf16.mxu0 0
      %316 = vmatpush1.bf16.msra.mxu0 0
      %317 = vmatprep.subr.bf16.mxu0 0
      %318 = vmatpush1.bf16.msra.mxu0 0
      %319 = vmatprep.subr.bf16.mxu0 0
      %320 = vmatpush1.bf16.msra.mxu0 0
      %321 = vmatprep.mubr.bf16.mxu0 %v287
      %322 = vmatmul.mubr.bf16.gmra.mrb[0].mxu0 %v282
      %v323 = vpop.f32.mrb[0].mxu0
      %v324 = vadd.f32 %v269, %v323
      %v325 = vpop.f32.mrb[0].mxu0
      %v326 = vpop.f32.mrb[0].mxu0
      %v327 = vadd.f32 %v274, %v326
      %v328 = vpop.f32.mrb[0].mxu0
      %329 = vdwg.mxu0
      %330 = vst [vmem:[%s170] sm:$0xff] %v324
      %331 = vst [vmem:[%s170 + $0x8] sm:$0xff] %v327
      %p332 = scmp.lt.s32.totalorder %s14, 1
      %s333 = scalar_select %p332, %s14, 1
      %s334 = smul.addr %s333, 2
      %s335 = smul.addr %s334, 8
      %s336 = scalar_lea.vmem %s3, %s335
      // Predicated region
      $region33: #{a_call__.8} parent=31 // pred_check
        %p337 = pneg %p100
      $region34: #{a_call__.8} parent=31 // pred_check_branch
        %339 = sbr.rel (%p337) target = $region36
      $region35: #{a_call__.8} parent=31 // pred_region
        _
      $region36: #{a_call__.8} parent=31 // pred_fallthru
        _
    $region32: #{a_call__.8} parent=5 // pred_fallthru
      _
    %p340 = scmp.le.s32.totalorder 2, %s9
    // Predicated region
    $region37: #{a_call__.8} parent=5 // pred_check
      %p341 = pneg %p340
    $region38: #{a_call__.8} parent=5 // pred_check_branch
      %343 = sbr.rel (%p341) target = $region40
    $region39: #{a_call__.8} parent=5 // pred_region
      %s344 = ssub.s32 %s9, 2
      // Predicated region
      $region41: #{a_call__.8} parent=39 // pred_check
        %p345 = pneg %p106
      $region42: #{a_call__.8} parent=39 // pred_check_branch
        %347 = sbr.rel (%p345) target = $region44
      $region43: #{a_call__.8} parent=39 // pred_region
        %p348 = scmp.lt.s32.totalorder %s15, 1
        %s349 = scalar_select %p348, %s15, 1
        %s350 = smul.addr %s349, 2
        %s351 = smul.addr %s350, 8
        %s352 = scalar_lea.vmem %s3, %s351
      $region44: #{a_call__.8} parent=39 // pred_fallthru
        _
    $region40: #{a_call__.8} parent=5 // pred_fallthru
      _
  $region6: #{a_call__.8} parent=0 // loop_footer
    %s13 = sadd.s32 1, %s9
  $region7: #{a_call__.8} parent=0 // loop_footer_branch
    %8 = sbr.rel target = $region3
  $region8: #{a_call__.8} parent=0 // loop_exit
    _

// kernel: a_call__.6
$region0: #{a_call__.6}
  #allocation0 [shape = 'u32[]', space=smem, size = 0x4, offset = 0x4, fixed_abs, tag = 'smem constant byte address 0x4 - core index']
  #allocation1 [shape = 'u32[144,128]{1,0:T(1,128)}', space=vmem, size = 0x12000, scoped, tag = 'internal scratch']
  #allocation2 [shape = 'bf16[40,256]{1,0:T(8,128)(2,1)}', space=vmem, size = 0x5000, scoped, tag = 'scratch operand']
  #allocation3 [shape = 'bf16[80,256]{1,0:T(16,128)(2,1)}', space=vmem, size = 0xa000, scoped, tag = 'scratch operand']
  %s0 = inlined_call_operand.vmem [shape: f32[2,8,256], index: 0, kind: input, shape index: {}]
  %s1 = inlined_call_operand.vmem [shape: bf16[16,40], index: 1, kind: input, shape index: {}]
  %s2 = inlined_call_operand.vmem [shape: f32[16,1], index: 2, kind: input, shape index: {}, may-alias: {2,4}]
  %s3 = inlined_call_operand.vmem [shape: bf16[16,80], index: 3, kind: input, shape index: {}]
  %s4 = inlined_call_operand.vmem [shape: f32[16,1], index: 4, kind: input, shape index: {}, may-alias: {2,4}]
  %s5 = inlined_call_operand.vmem [shape: f32[2,16,256], index: 5, kind: output, shape index: {}]
  %s6 = sld [smem:[#allocation0]]
  $region53: #{a_call__.6} parent=0
    _
  %s8 = ssub.s32 1, %s6
  %s9 = scalar_select 0, %s8, %s6
  loop: start=0, step=1, limit=4
  $region2: #{a_call__.6} parent=0 // loop_pre_header
    _
  $region3: #{a_call__.6} parent=0 // loop_header
    %s11 = sphi 0, %s15
    %p12 = scmp.ge.s32.totalorder %s11, 4
    %s21 = sphi 0, %s23
    %s24 = sphi 0, %s21
    %s25 = sphi 0, %s24
    %s41 = sphi 0, %s25
    %s45 = sphi 0, %s45
    %s47 = sphi 0, %s45
    %s48 = sphi 0, %s47
    %s62 = sphi 0, %s48
    %s66 = sphi 0, %s66
    %s68 = sphi 0, %s66
    %s69 = sphi 0, %s68
    %s83 = sphi 0, %s69
    %s87 = sphi 0, %s87
    %s89 = sphi 0, %s87
    %s90 = sphi 0, %s89
    %s104 = sphi 0, %s90
    %s108 = sphi 0, %s108
    %s110 = sphi 0, %s108
    %s111 = sphi 0, %s110
    %s125 = sphi 0, %s111
    %s131 = sphi 0, %s133
    %s134 = sphi 0, %s131
    %s135 = sphi 0, %s134
    %s151 = sphi 0, %s135
  $region4: #{a_call__.6} parent=0 // loop_header_branch
    %14 = sbr.rel (%p12) target = $region8
  $region5: #{a_call__.6} parent=0 // loop_body
    %s16 = ssub.s32 %s11, 1
    %s17 = ssub.s32 %s11, 2
    %s18 = sadd.s32 %s11, 1
    %s19 = ssub.s32 %s11, %s18
    %p20 = scmp.eq.s32.totalorder %s19, 0
    %s22 = sadd.s32 %s21, 1
    %s23 = scalar_select %p20, %s21, %s22
    %p26 = pneg %p20
    %p27 = scmp.eq.s32.totalorder %s11, 1
    %p28 = por %p26, %p27
    %p29 = scmp.ne.s32.totalorder %s21, %s24
    %p30 = scmp.eq.s32.totalorder %s11, 0
    %p31 = por %p29, %p30
    %p32 = scmp.ne.s32.totalorder %s21, %s24
    %p33 = scmp.eq.s32.totalorder %s16, 1
    %p34 = por %p32, %p33
    %p35 = scmp.ne.s32.totalorder %s24, %s25
    %p36 = scmp.eq.s32.totalorder %s16, 0
    %p37 = por %p35, %p36
    %p38 = scmp.ne.s32.totalorder %s24, %s25
    %p39 = scmp.eq.s32.totalorder %s17, 1
    %p40 = por %p38, %p39
    %p42 = scmp.ne.s32.totalorder %s25, %s41
    %p43 = scmp.eq.s32.totalorder %s17, 0
    %p44 = por %p42, %p43
    %s46 = sadd.s32 %s45, 1
    %p49 = scmp.eq.s32.totalorder %s11, 1
    %p50 = scmp.ne.s32.totalorder %s45, %s47
    %p51 = scmp.eq.s32.totalorder %s11, 0
    %p52 = por %p50, %p51
    %p53 = scmp.ne.s32.totalorder %s45, %s47
    %p54 = scmp.eq.s32.totalorder %s16, 1
    %p55 = por %p53, %p54
    %p56 = scmp.ne.s32.totalorder %s47, %s48
    %p57 = scmp.eq.s32.totalorder %s16, 0
    %p58 = por %p56, %p57
    %p59 = scmp.ne.s32.totalorder %s47, %s48
    %p60 = scmp.eq.s32.totalorder %s17, 1
    %p61 = por %p59, %p60
    %p63 = scmp.ne.s32.totalorder %s48, %s62
    %p64 = scmp.eq.s32.totalorder %s17, 0
    %p65 = por %p63, %p64
    %s67 = sadd.s32 %s66, 1
    %p70 = scmp.eq.s32.totalorder %s11, 1
    %p71 = scmp.ne.s32.totalorder %s66, %s68
    %p72 = scmp.eq.s32.totalorder %s11, 0
    %p73 = por %p71, %p72
    %p74 = scmp.ne.s32.totalorder %s66, %s68
    %p75 = scmp.eq.s32.totalorder %s16, 1
    %p76 = por %p74, %p75
    %p77 = scmp.ne.s32.totalorder %s68, %s69
    %p78 = scmp.eq.s32.totalorder %s16, 0
    %p79 = por %p77, %p78
    %p80 = scmp.ne.s32.totalorder %s68, %s69
    %p81 = scmp.eq.s32.totalorder %s17, 1
    %p82 = por %p80, %p81
    %p84 = scmp.ne.s32.totalorder %s69, %s83
    %p85 = scmp.eq.s32.totalorder %s17, 0
    %p86 = por %p84, %p85
    %s88 = sadd.s32 %s87, 1
    %p91 = scmp.eq.s32.totalorder %s11, 1
    %p92 = scmp.ne.s32.totalorder %s87, %s89
    %p93 = scmp.eq.s32.totalorder %s11, 0
    %p94 = por %p92, %p93
    %p95 = scmp.ne.s32.totalorder %s87, %s89
    %p96 = scmp.eq.s32.totalorder %s16, 1
    %p97 = por %p95, %p96
    %p98 = scmp.ne.s32.totalorder %s89, %s90
    %p99 = scmp.eq.s32.totalorder %s16, 0
    %p100 = por %p98, %p99
    %p101 = scmp.ne.s32.totalorder %s89, %s90
    %p102 = scmp.eq.s32.totalorder %s17, 1
    %p103 = por %p101, %p102
    %p105 = scmp.ne.s32.totalorder %s90, %s104
    %p106 = scmp.eq.s32.totalorder %s17, 0
    %p107 = por %p105, %p106
    %s109 = sadd.s32 %s108, 1
    %p112 = scmp.eq.s32.totalorder %s11, 1
    %p113 = scmp.ne.s32.totalorder %s108, %s110
    %p114 = scmp.eq.s32.totalorder %s11, 0
    %p115 = por %p113, %p114
    %p116 = scmp.ne.s32.totalorder %s108, %s110
    %p117 = scmp.eq.s32.totalorder %s16, 1
    %p118 = por %p116, %p117
    %p119 = scmp.ne.s32.totalorder %s110, %s111
    %p120 = scmp.eq.s32.totalorder %s16, 0
    %p121 = por %p119, %p120
    %p122 = scmp.ne.s32.totalorder %s110, %s111
    %p123 = scmp.eq.s32.totalorder %s17, 1
    %p124 = por %p122, %p123
    %p126 = scmp.ne.s32.totalorder %s111, %s125
    %p127 = scmp.eq.s32.totalorder %s17, 0
    %p128 = por %p126, %p127
    %s129 = ssub.s32 %s11, %s18
    %p130 = scmp.eq.s32.totalorder %s129, 0
    %s132 = sadd.s32 %s131, 1
    %s133 = scalar_select %p130, %s131, %s132
    %p136 = pneg %p130
    %p137 = scmp.eq.s32.totalorder %s11, 1
    %p138 = por %p136, %p137
    %p139 = scmp.ne.s32.totalorder %s131, %s134
    %p140 = scmp.eq.s32.totalorder %s11, 0
    %p141 = por %p139, %p140
    %p142 = scmp.ne.s32.totalorder %s131, %s134
    %p143 = scmp.eq.s32.totalorder %s16, 1
    %p144 = por %p142, %p143
    %p145 = scmp.ne.s32.totalorder %s134, %s135
    %p146 = scmp.eq.s32.totalorder %s16, 0
    %p147 = por %p145, %p146
    %p148 = scmp.ne.s32.totalorder %s134, %s135
    %p149 = scmp.eq.s32.totalorder %s17, 1
    %p150 = por %p148, %p149
    %p152 = scmp.ne.s32.totalorder %s135, %s151
    %p153 = scmp.eq.s32.totalorder %s17, 0
    %p154 = por %p152, %p153
    %p155 = scmp.le.s32.totalorder 1, %s11
    %p156 = scmp.lt.s32.totalorder %s11, 3
    %p157 = pnand %p155, %p156
    %p158 = pneg %p157
    // Predicated region
    $region9: #{a_call__.6} parent=5 // pred_check
      _
    $region10: #{a_call__.6} parent=5 // pred_check_branch
      %160 = sbr.rel (%p157) target = $region12
    $region11: #{a_call__.6} parent=5 // pred_region
      %s161 = ssub.s32 %s11, 1
      // Predicated region
      $region13: #{a_call__.6} parent=11 // pred_check
        %p162 = pneg %p58
      $region14: #{a_call__.6} parent=11 // pred_check_branch
        %164 = sbr.rel (%p162) target = $region16
      $region15: #{a_call__.6} parent=11 // pred_region
        _
      $region16: #{a_call__.6} parent=11 // pred_fallthru
        _
      // Predicated region
      $region17: #{a_call__.6} parent=11 // pred_check
        %p165 = pneg %p79
      $region18: #{a_call__.6} parent=11 // pred_check_branch
        %167 = sbr.rel (%p165) target = $region20
      $region19: #{a_call__.6} parent=11 // pred_region
        _
      $region20: #{a_call__.6} parent=11 // pred_fallthru
        _
      // Predicated region
      $region21: #{a_call__.6} parent=11 // pred_check
        %p168 = pneg %p100
      $region22: #{a_call__.6} parent=11 // pred_check_branch
        %170 = sbr.rel (%p168) target = $region24
      $region23: #{a_call__.6} parent=11 // pred_region
        _
      $region24: #{a_call__.6} parent=11 // pred_fallthru
        _
      // Predicated region
      $region25: #{a_call__.6} parent=11 // pred_check
        %p171 = pneg %p121
      $region26: #{a_call__.6} parent=11 // pred_check_branch
        %173 = sbr.rel (%p171) target = $region28
      $region27: #{a_call__.6} parent=11 // pred_region
        _
      $region28: #{a_call__.6} parent=11 // pred_fallthru
        _
    $region12: #{a_call__.6} parent=5 // pred_fallthru
      _
    %p174 = scmp.lt.s32.totalorder %s11, 2
    // Predicated region
    $region29: #{a_call__.6} parent=5 // pred_check
      %p175 = pneg %p174
    $region30: #{a_call__.6} parent=5 // pred_check_branch
      %177 = sbr.rel (%p175) target = $region32
    $region31: #{a_call__.6} parent=5 // pred_region
      // Predicated region
      $region33: #{a_call__.6} parent=31 // pred_check
        %p178 = pneg %p31
      $region34: #{a_call__.6} parent=31 // pred_check_branch
        %180 = sbr.rel (%p178) target = $region36
      $region35: #{a_call__.6} parent=31 // pred_region
        %p181 = scmp.lt.s32.totalorder %s11, 1
        %s182 = scalar_select %p181, %s11, 1
        %s183 = smul.addr %s182, 2
        %s184 = smul.addr %s183, 8
        %s185 = scalar_lea.vmem %s0, %s184
      $region36: #{a_call__.6} parent=31 // pred_fallthru
        _
    $region32: #{a_call__.6} parent=5 // pred_fallthru
      _
    %p186 = scmp.le.s32.totalorder 1, %s11
    %p187 = scmp.lt.s32.totalorder %s11, 3
    %p188 = pnand %p186, %p187
    %p189 = pneg %p188
    // Predicated region
    $region37: #{a_call__.6} parent=5 // pred_check
      _
    $region38: #{a_call__.6} parent=5 // pred_check_branch
      %191 = sbr.rel (%p188) target = $region40
    $region39: #{a_call__.6} parent=5 // pred_region
      %s192 = ssub.s32 %s11, 1
      %p193 = scmp.lt.s32.totalorder %s16, 1
      %s194 = scalar_select %p193, %s16, 1
      %s195 = smul.addr %s194, 2
      %s196 = smul.addr %s195, 8
      %s197 = scalar_lea.vmem %s0, %s196
      %p198 = pneg %p37
      %p199 = pneg %p34
      %p200 = pneg %p58
      %p201 = pneg %p55
      %p202 = pneg %p79
      %p203 = pneg %p76
      %p204 = pneg %p100
      %p205 = pneg %p97
      %p206 = pneg %p121
      %p207 = pneg %p118
      %p208 = pneg %p147
      %p209 = pneg %p144
      %p210 = scmp.lt.s32.totalorder %s16, 1
      %s211 = scalar_select %p210, %s16, 1
      %s212 = smul.addr %s211, 4
      %s213 = smul.addr %s212, 8
      %s214 = scalar_lea.vmem %s5, %s213
      %p215 = scmp.lt.s32.totalorder %s16, 1
      %s216 = scalar_select %p215, %s16, 1
      %s217 = smul.addr %s216, 2
      %s218 = smul.addr %s217, 8
      %s219 = scalar_lea.vmem %s0, %s218
      %p220 = scmp.lt.s32.totalorder %s16, 1
      %s221 = scalar_select %p220, %s16, 1
      %s222 = smul.addr %s221, 4
      %s223 = smul.addr %s222, 8
      %s224 = scalar_lea.vmem %s5, %s223
      %v226 = vld [vmem:[%s219] sm:$0xff]
      %v227 = vld [vmem:[%s219 + $0x8] sm:$0xff]
      %228 = vrot.lane.b32.xlu0 %v226, 127
      %v229 = vpop.permute.xlu0 %228
      %230 = vrot.lane.b32.xlu0 %v227, 127
      %v231 = vpop.permute.xlu0 %230
      %v232 = vlaneseq
      %v233 = vand.u32 %v232, 127
      %vm234 = vcmp.lt.s32.totalorder %v233, 127
      %v235 = vsel %vm234, %v229, %v231
      %v236 = vsel %vm234, %v231, %v229
      %237 = vrot.lane.b32.xlu0 %v226, 126
      %v238 = vpop.permute.xlu0 %237
      %239 = vrot.lane.b32.xlu0 %v227, 126
      %v240 = vpop.permute.xlu0 %239
      %vm241 = vcmp.lt.s32.totalorder %v233, 126
      %v242 = vsel %vm241, %v238, %v240
      %v243 = vsel %vm241, %v240, %v238
      %244 = vrot.lane.b32.xlu0 %v226, 125
      %v245 = vpop.permute.xlu0 %244
      %246 = vrot.lane.b32.xlu0 %v227, 125
      %v247 = vpop.permute.xlu0 %246
      %vm248 = vcmp.lt.s32.totalorder %v233, 125
      %v249 = vsel %vm248, %v245, %v247
      %v250 = vsel %vm248, %v247, %v245
      %251 = vrot.lane.b32.xlu0 %v226, 124
      %v252 = vpop.permute.xlu0 %251
      %253 = vrot.lane.b32.xlu0 %v227, 124
      %v254 = vpop.permute.xlu0 %253
      %vm255 = vcmp.lt.s32.totalorder %v233, 124
      %v256 = vsel %vm255, %v252, %v254
      %v257 = vsel %vm255, %v254, %v252
      %v258 = vadd.f32 %v235, %v249
      %v259 = vadd.f32 %v236, %v250
      %v260 = vadd.f32 %v242, %v256
      %v261 = vadd.f32 %v243, %v257
      %v262 = vsub.f32 %v235, %v249
      %v263 = vsub.f32 %v236, %v250
      %v264 = vand.u32 2147483647, %v262
      %v265 = vand.u32 2147483647, %v263
      %v266 = vsub.f32 %v242, %v256
      %v267 = vsub.f32 %v243, %v257
      %v268 = vand.u32 2147483647, %v266
      %v269 = vand.u32 2147483647, %v267
      %v270 = vpack.c.bf16 %v226, %v226
      %v271 = vpack.c.bf16 %v227, %v227
      %v274 = vunpack.c.l.b16 %v270
      %v275 = vunpack.c.l.b16 %v271
      %v276 = vpack.c.b16 %v275, %v274
      %278 = vst [vmem:[#allocation2] sm:$0xff] %v276
      %v279 = vpack.c.bf16 %v258, %v258
      %v280 = vpack.c.bf16 %v259, %v259
      %v283 = vunpack.c.l.b16 %v279
      %v284 = vunpack.c.l.b16 %v280
      %v285 = vpack.c.b16 %v284, %v283
      %287 = vst [vmem:[#allocation2 + $0x8] sm:$0xff] %v285
      %v288 = vpack.c.bf16 %v260, %v260
      %v289 = vpack.c.bf16 %v261, %v261
      %v292 = vunpack.c.l.b16 %v288
      %v293 = vunpack.c.l.b16 %v289
      %v294 = vpack.c.b16 %v293, %v292
      %296 = vst [vmem:[#allocation2 + $0x10] sm:$0xff] %v294
      %v297 = vpack.c.bf16 %v264, %v264
      %v298 = vpack.c.bf16 %v265, %v265
      %v301 = vunpack.c.l.b16 %v297
      %v302 = vunpack.c.l.b16 %v298
      %v303 = vpack.c.b16 %v302, %v301
      %305 = vst [vmem:[#allocation2 + $0x18] sm:$0xff] %v303
      %v306 = vpack.c.bf16 %v268, %v268
      %v307 = vpack.c.bf16 %v269, %v269
      %v310 = vunpack.c.l.b16 %v306
      %v311 = vunpack.c.l.b16 %v307
      %v312 = vpack.c.b16 %v311, %v310
      %314 = vst [vmem:[#allocation2 + $0x20] sm:$0xff] %v312
      %v315 = vld [vmem:[%s1] sm:$0xf]
      %v316 = vld [vmem:[%s1 + $0x4] sm:$0xf]
      %v317 = vld [vmem:[#allocation2] sm:$0xff]
      %v318 = vld [vmem:[#allocation2 + $0x8] sm:$0xff]
      %v319 = vld [vmem:[#allocation2 + $0x10] sm:$0xff]
      %v320 = vld [vmem:[#allocation2 + $0x18] sm:$0xff]
      %v321 = vld [vmem:[#allocation2 + $0x20] sm:$0xff]
      %v322 = vld [vmem:[%s2] sm:$0xff]
      %v323 = vld [vmem:[%s2 + $0x8] sm:$0xff]
      %325 = vset.pattern.permute.xlu0 0
      %326 = vperm.xlu0 %325, %v322
      %v327 = vpop.permute.xlu0 %326
      %330 = vset.pattern.permute.xlu0 0
      %331 = vperm.xlu0 %330, %v323
      %v332 = vpop.permute.xlu0 %331
      %v336 = vunpack.c.l.b16 %v315
      %v337 = vunpack.c.l.b16 %v316
      %v338 = vpack.c.b16 %v337, %v336
      %v344 = vunpack.c.l.b16 %v317
      %v345 = vunpack.c.h.b16 %v317
      %v346 = vunpack.c.l.b16 %v318
      %v347 = vunpack.c.h.b16 %v318
      %v348 = vunpack.c.l.b16 %v319
      %v349 = vunpack.c.h.b16 %v319
      %v350 = vunpack.c.l.b16 %v320
      %v351 = vunpack.c.h.b16 %v320
      %v352 = vunpack.c.l.b16 %v321
      %v353 = vunpack.c.h.b16 %v321
      %v354 = vpack.c.b16 %v346, %v344
      %v355 = vpack.c.b16 %v347, %v345
      %v356 = vpack.c.b16 %v350, %v348
      %v357 = vpack.c.b16 %v351, %v349
      %v358 = vpack.c.b16 %v352, %v352
      %v359 = vpack.c.b16 %v353, %v353
      %vm364 = vcmask 326656
      %v366 = vsel %vm364, %v338, 0
      %vm368 = vcmask 1043456
      %v370 = vsel %vm368, %v358, 0
      %v373 = vsel %vm368, %v359, 0
      %375 = vmatprep.subr.bf16.mxu0 %v355
      %376 = vmatpush1.bf16.msra.mxu0 %v354
      %377 = vmatprep.subr.bf16.mxu0 %v357
      %378 = vmatpush1.bf16.msra.mxu0 %v356
      %379 = vmatprep.subr.bf16.mxu0 %v373
      %380 = vmatpush1.bf16.msra.mxu0 %v370
      %381 = vmatprep.subr.bf16.mxu0 0
      %382 = vmatpush1.bf16.msra.mxu0 0
      %383 = vmatprep.subr.bf16.mxu0 0
      %384 = vmatpush1.bf16.msra.mxu0 0
      %385 = vmatprep.subr.bf16.mxu0 0
      %386 = vmatpush1.bf16.msra.mxu0 0
      %387 = vmatprep.subr.bf16.mxu0 0
      %388 = vmatpush1.bf16.msra.mxu0 0
      %389 = vmatprep.subr.bf16.mxu0 0
      %390 = vmatpush1.bf16.msra.mxu0 0
      %391 = vmatprep.subr.bf16.mxu0 0
      %392 = vmatpush1.bf16.msra.mxu0 0
      %393 = vmatprep.subr.bf16.mxu0 0
      %394 = vmatpush1.bf16.msra.mxu0 0
      %395 = vmatprep.subr.bf16.mxu0 0
      %396 = vmatpush1.bf16.msra.mxu0 0
      %397 = vmatprep.subr.bf16.mxu0 0
      %398 = vmatpush1.bf16.msra.mxu0 0
      %399 = vmatprep.subr.bf16.mxu0 0
      %400 = vmatpush1.bf16.msra.mxu0 0
      %401 = vmatprep.subr.bf16.mxu0 0
      %402 = vmatpush1.bf16.msra.mxu0 0
      %403 = vmatprep.subr.bf16.mxu0 0
      %404 = vmatpush1.bf16.msra.mxu0 0
      %405 = vmatprep.subr.bf16.mxu0 0
      %406 = vmatpush1.bf16.msra.mxu0 0
      %407 = vmatprep.mubr.bf16.mxu0 0
      %408 = vmatmul.mubr.bf16.gmra.mrb[0].mxu0 %v366
      %v409 = vpop.f32.mrb[0].mxu0
      %v410 = vadd.f32 %v327, %v409
      %v411 = vpop.f32.mrb[0].mxu0
      %v412 = vadd.f32 %v327, %v411
      %v413 = vpop.f32.mrb[0].mxu0
      %v414 = vadd.f32 %v332, %v413
      %v415 = vpop.f32.mrb[0].mxu0
      %v416 = vadd.f32 %v332, %v415
      %417 = vdwg.mxu0
      %v418 = vadd.f32 %v410, %v412
      %419 = vadd.xlane.f32.xlu0 %v418
      %v420 = vpop.xlane.xlu0 %419
      %v421 = vadd.f32 %v414, %v416
      %422 = vadd.xlane.f32.xlu0 %v421
      %v423 = vpop.xlane.xlu0 %422
      %v424 = vrcp.pop 256.0
      %v425 = vmul.f32 %v420, %v424
      %v426 = vmul.f32 %v423, %v424
      %v427 = vsub.f32 %v410, %v425
      %v428 = vsub.f32 %v412, %v425
      %v429 = vsub.f32 %v414, %v426
      %v430 = vsub.f32 %v416, %v426
      %v431 = vmul.f32 %v427, %v427
      %v432 = vmul.f32 %v428, %v428
      %v433 = vmul.f32 %v429, %v429
      %v434 = vmul.f32 %v430, %v430
      %v435 = vadd.f32 %v431, %v432
      %436 = vadd.xlane.f32.xlu0 %v435
      %v437 = vpop.xlane.xlu0 %436
      %v438 = vadd.f32 %v433, %v434
      %439 = vadd.xlane.f32.xlu0 %v438
      %v440 = vpop.xlane.xlu0 %439
      %v441 = vmul.f32 %v437, %v424
      %v442 = vmul.f32 %v440, %v424
      %v443 = vadd.f32 %v441, 1e-05
      %v444 = vadd.f32 %v442, 1e-05
      %v445 = vrsqrt.pop %v443
      %v446 = vrsqrt.pop %v444
      %v447 = vmul.f32 %v427, %v445
      %v448 = vmul.f32 %v428, %v445
      %v449 = vmul.f32 %v429, %v446
      %v450 = vmul.f32 %v430, %v446
      %v451 = vmax.f32 %v447, 0.0
      %v452 = vmax.f32 %v448, 0.0
      %v453 = vmax.f32 %v449, 0.0
      %v454 = vmax.f32 %v450, 0.0
      %455 = vrot.lane.b32.xlu0 %v451, 127
      %v456 = vpop.permute.xlu0 %455
      %457 = vrot.lane.b32.xlu0 %v453, 127
      %v458 = vpop.permute.xlu0 %457
      %459 = vrot.lane.b32.xlu0 %v452, 127
      %v460 = vpop.permute.xlu0 %459
      %461 = vrot.lane.b32.xlu0 %v454, 127
      %v462 = vpop.permute.xlu0 %461
      %v463 = vsel %vm234, %v456, %v460
      %v464 = vsel %vm234, %v458, %v462
      %v465 = vsel %vm234, %v460, %v456
      %v466 = vsel %vm234, %v462, %v458
      %467 = vrot.lane.b32.xlu0 %v451, 126
      %v468 = vpop.permute.xlu0 %467
      %469 = vrot.lane.b32.xlu0 %v453, 126
      %v470 = vpop.permute.xlu0 %469
      %471 = vrot.lane.b32.xlu0 %v452, 126
      %v472 = vpop.permute.xlu0 %471
      %473 = vrot.lane.b32.xlu0 %v454, 126
      %v474 = vpop.permute.xlu0 %473
      %v475 = vsel %vm241, %v468, %v472
      %v476 = vsel %vm241, %v470, %v474
      %v477 = vsel %vm241, %v472, %v468
      %v478 = vsel %vm241, %v474, %v470
      %479 = vrot.lane.b32.xlu0 %v451, 125
      %v480 = vpop.permute.xlu0 %479
      %481 = vrot.lane.b32.xlu0 %v453, 125
      %v482 = vpop.permute.xlu0 %481
      %483 = vrot.lane.b32.xlu0 %v452, 125
      %v484 = vpop.permute.xlu0 %483
      %485 = vrot.lane.b32.xlu0 %v454, 125
      %v486 = vpop.permute.xlu0 %485
      %v487 = vsel %vm248, %v480, %v484
      %v488 = vsel %vm248, %v482, %v486
      %v489 = vsel %vm248, %v484, %v480
      %v490 = vsel %vm248, %v486, %v482
      %491 = vrot.lane.b32.xlu0 %v451, 124
      %v492 = vpop.permute.xlu0 %491
      %493 = vrot.lane.b32.xlu0 %v453, 124
      %v494 = vpop.permute.xlu0 %493
      %495 = vrot.lane.b32.xlu0 %v452, 124
      %v496 = vpop.permute.xlu0 %495
      %497 = vrot.lane.b32.xlu0 %v454, 124
      %v498 = vpop.permute.xlu0 %497
      %v499 = vsel %vm255, %v492, %v496
      %v500 = vsel %vm255, %v494, %v498
      %v501 = vsel %vm255, %v496, %v492
      %v502 = vsel %vm255, %v498, %v494
      %v503 = vadd.f32 %v463, %v487
      %v504 = vadd.f32 %v465, %v489
      %v505 = vadd.f32 %v464, %v488
      %v506 = vadd.f32 %v466, %v490
      %v507 = vadd.f32 %v475, %v499
      %v508 = vadd.f32 %v477, %v501
      %v509 = vadd.f32 %v476, %v500
      %v510 = vadd.f32 %v478, %v502
      %v511 = vsub.f32 %v463, %v487
      %v512 = vsub.f32 %v465, %v489
      %v513 = vsub.f32 %v464, %v488
      %v514 = vsub.f32 %v466, %v490
      %v515 = vand.u32 2147483647, %v511
      %v516 = vand.u32 2147483647, %v512
      %v517 = vand.u32 2147483647, %v513
      %v518 = vand.u32 2147483647, %v514
      %v519 = vsub.f32 %v475, %v499
      %v520 = vsub.f32 %v477, %v501
      %v521 = vsub.f32 %v476, %v500
      %v522 = vsub.f32 %v478, %v502
      %v523 = vand.u32 2147483647, %v519
      %v524 = vand.u32 2147483647, %v520
      %v525 = vand.u32 2147483647, %v521
      %v526 = vand.u32 2147483647, %v522
      %v527 = vpack.c.bf16 %v453, %v451
      %v528 = vpack.c.bf16 %v454, %v452
      %529 = vst [vmem:[#allocation3] sm:$0xff] %v527
      %530 = vst [vmem:[#allocation3 + $0x8] sm:$0xff] %v528
      %v531 = vpack.c.bf16 %v505, %v503
      %v532 = vpack.c.bf16 %v506, %v504
      %533 = vst [vmem:[#allocation3 + $0x10] sm:$0xff] %v531
      %534 = vst [vmem:[#allocation3 + $0x18] sm:$0xff] %v532
      %v535 = vpack.c.bf16 %v509, %v507
      %v536 = vpack.c.bf16 %v510, %v508
      %537 = vst [vmem:[#allocation3 + $0x20] sm:$0xff] %v535
      %538 = vst [vmem:[#allocation3 + $0x28] sm:$0xff] %v536
      %v539 = vpack.c.bf16 %v517, %v515
      %v540 = vpack.c.bf16 %v518, %v516
      %541 = vst [vmem:[#allocation3 + $0x30] sm:$0xff] %v539
      %542 = vst [vmem:[#allocation3 + $0x38] sm:$0xff] %v540
      %v543 = vpack.c.bf16 %v525, %v523
      %v544 = vpack.c.bf16 %v526, %v524
      %545 = vst [vmem:[#allocation3 + $0x40] sm:$0xff] %v543
      %546 = vst [vmem:[#allocation3 + $0x48] sm:$0xff] %v544
      %v547 = vld [vmem:[%s3] sm:$0xf]
      %v548 = vld [vmem:[%s3 + $0x4] sm:$0xf]
      %v549 = vld [vmem:[#allocation3] sm:$0xff]
      %v550 = vld [vmem:[#allocation3 + $0x8] sm:$0xff]
      %v551 = vld [vmem:[#allocation3 + $0x10] sm:$0xff]
      %v552 = vld [vmem:[#allocation3 + $0x18] sm:$0xff]
      %v553 = vld [vmem:[#allocation3 + $0x20] sm:$0xff]
      %v554 = vld [vmem:[#allocation3 + $0x28] sm:$0xff]
      %v555 = vld [vmem:[#allocation3 + $0x30] sm:$0xff]
      %v556 = vld [vmem:[#allocation3 + $0x38] sm:$0xff]
      %v557 = vld [vmem:[#allocation3 + $0x40] sm:$0xff]
      %v558 = vld [vmem:[#allocation3 + $0x48] sm:$0xff]
      %v559 = vld [vmem:[%s4] sm:$0xff]
      %v560 = vld [vmem:[%s4 + $0x8] sm:$0xff]
      %562 = vset.pattern.permute.xlu0 0
      %563 = vperm.xlu0 %562, %v559
      %v564 = vpop.permute.xlu0 %563
      %567 = vset.pattern.permute.xlu0 0
      %568 = vperm.xlu0 %567, %v560
      %v569 = vpop.permute.xlu0 %568
      %v573 = vunpack.c.l.b16 %v547
      %v574 = vunpack.c.l.b16 %v548
      %v575 = vpack.c.b16 %v574, %v573
      %vm576 = vcmask 654336
      %v578 = vsel %vm576, %v575, 0
      %580 = vmatprep.subr.bf16.mxu0 %v550
      %581 = vmatpush1.bf16.msra.mxu0 %v549
      %582 = vmatprep.subr.bf16.mxu0 %v552
      %583 = vmatpush1.bf16.msra.mxu0 %v551
      %584 = vmatprep.subr.bf16.mxu0 %v554
      %585 = vmatpush1.bf16.msra.mxu0 %v553
      %586 = vmatprep.subr.bf16.mxu0 %v556
      %587 = vmatpush1.bf16.msra.mxu0 %v555
      %588 = vmatprep.subr.bf16.mxu0 %v558
      %589 = vmatpush1.bf16.msra.mxu0 %v557
      %590 = vmatprep.subr.bf16.mxu0 0
      %591 = vmatpush1.bf16.msra.mxu0 0
      %592 = vmatprep.subr.bf16.mxu0 0
      %593 = vmatpush1.bf16.msra.mxu0 0
      %594 = vmatprep.subr.bf16.mxu0 0
      %595 = vmatpush1.bf16.msra.mxu0 0
      %596 = vmatprep.subr.bf16.mxu0 0
      %597 = vmatpush1.bf16.msra.mxu0 0
      %598 = vmatprep.subr.bf16.mxu0 0
      %599 = vmatpush1.bf16.msra.mxu0 0
      %600 = vmatprep.subr.bf16.mxu0 0
      %601 = vmatpush1.bf16.msra.mxu0 0
      %602 = vmatprep.subr.bf16.mxu0 0
      %603 = vmatpush1.bf16.msra.mxu0 0
      %604 = vmatprep.subr.bf16.mxu0 0
      %605 = vmatpush1.bf16.msra.mxu0 0
      %606 = vmatprep.subr.bf16.mxu0 0
      %607 = vmatpush1.bf16.msra.mxu0 0
      %608 = vmatprep.subr.bf16.mxu0 0
      %609 = vmatpush1.bf16.msra.mxu0 0
      %610 = vmatprep.subr.bf16.mxu0 0
      %611 = vmatpush1.bf16.msra.mxu0 0
      %612 = vmatprep.mubr.bf16.mxu0 0
      %613 = vmatmul.mubr.bf16.gmra.mrb[0].mxu0 %v578
      %v614 = vpop.f32.mrb[0].mxu0
      %v615 = vadd.f32 %v564, %v614
      %v616 = vpop.f32.mrb[0].mxu0
      %v617 = vadd.f32 %v564, %v616
      %v618 = vpop.f32.mrb[0].mxu0
      %v619 = vadd.f32 %v569, %v618
      %v620 = vpop.f32.mrb[0].mxu0
      %v621 = vadd.f32 %v569, %v620
      %622 = vdwg.mxu0
      %v623 = vadd.f32 %v615, %v617
      %624 = vadd.xlane.f32.xlu0 %v623
      %v625 = vpop.xlane.xlu0 %624
      %v626 = vadd.f32 %v619, %v621
      %627 = vadd.xlane.f32.xlu0 %v626
      %v628 = vpop.xlane.xlu0 %627
      %v629 = vmul.f32 %v625, %v424
      %v630 = vmul.f32 %v628, %v424
      %v631 = vsub.f32 %v615, %v629
      %v632 = vsub.f32 %v617, %v629
      %v633 = vsub.f32 %v619, %v630
      %v634 = vsub.f32 %v621, %v630
      %v635 = vmul.f32 %v631, %v631
      %v636 = vmul.f32 %v632, %v632
      %v637 = vmul.f32 %v633, %v633
      %v638 = vmul.f32 %v634, %v634
      %v639 = vadd.f32 %v635, %v636
      %640 = vadd.xlane.f32.xlu0 %v639
      %v641 = vpop.xlane.xlu0 %640
      %v642 = vadd.f32 %v637, %v638
      %643 = vadd.xlane.f32.xlu0 %v642
      %v644 = vpop.xlane.xlu0 %643
      %v645 = vmul.f32 %v641, %v424
      %v646 = vmul.f32 %v644, %v424
      %v647 = vadd.f32 %v645, 1e-05
      %v648 = vadd.f32 %v646, 1e-05
      %v649 = vrsqrt.pop %v647
      %v650 = vrsqrt.pop %v648
      %v651 = vmul.f32 %v631, %v649
      %v652 = vmul.f32 %v632, %v649
      %v653 = vmul.f32 %v633, %v650
      %v654 = vmul.f32 %v634, %v650
      %v655 = vadd.f32 %v651, %v451
      %v656 = vadd.f32 %v652, %v452
      %v657 = vadd.f32 %v653, %v453
      %v658 = vadd.f32 %v654, %v454
      %v659 = vmax.f32 %v655, 0.0
      %v660 = vmax.f32 %v656, 0.0
      %v661 = vmax.f32 %v657, 0.0
      %v662 = vmax.f32 %v658, 0.0
      %663 = vst [vmem:[%s224] sm:$0xff] %v659
      %664 = vst [vmem:[%s224 + $0x8] sm:$0xff] %v660
      %665 = vst [vmem:[%s224 + $0x10] sm:$0xff] %v661
      %666 = vst [vmem:[%s224 + $0x18] sm:$0xff] %v662
      %p667 = scmp.lt.s32.totalorder %s16, 1
      %s668 = scalar_select %p667, %s16, 1
      %s669 = smul.addr %s668, 4
      %s670 = smul.addr %s669, 8
      %s671 = scalar_lea.vmem %s5, %s670
      // Predicated region
      $region41: #{a_call__.6} parent=39 // pred_check
        %p672 = pneg %p144
      $region42: #{a_call__.6} parent=39 // pred_check_branch
        %674 = sbr.rel (%p672) target = $region44
      $region43: #{a_call__.6} parent=39 // pred_region
        _
      $region44: #{a_call__.6} parent=39 // pred_fallthru
        _
    $region40: #{a_call__.6} parent=5 // pred_fallthru
      _
    %p675 = scmp.le.s32.totalorder 2, %s11
    // Predicated region
    $region45: #{a_call__.6} parent=5 // pred_check
      %p676 = pneg %p675
    $region46: #{a_call__.6} parent=5 // pred_check_branch
      %678 = sbr.rel (%p676) target = $region48
    $region47: #{a_call__.6} parent=5 // pred_region
      %s679 = ssub.s32 %s11, 2
      // Predicated region
      $region49: #{a_call__.6} parent=47 // pred_check
        %p680 = pneg %p150
      $region50: #{a_call__.6} parent=47 // pred_check_branch
        %682 = sbr.rel (%p680) target = $region52
      $region51: #{a_call__.6} parent=47 // pred_region
        %p683 = scmp.lt.s32.totalorder %s17, 1
        %s684 = scalar_select %p683, %s17, 1
        %s685 = smul.addr %s684, 4
        %s686 = smul.addr %s685, 8
        %s687 = scalar_lea.vmem %s5, %s686
      $region52: #{a_call__.6} parent=47 // pred_fallthru
        _
    $region48: #{a_call__.6} parent=5 // pred_fallthru
      _
  $region6: #{a_call__.6} parent=0 // loop_footer
    %s15 = sadd.s32 1, %s11
  $region7: #{a_call__.6} parent=0 // loop_footer_branch
    %10 = sbr.rel target = $region3
  $region8: #{a_call__.6} parent=0 // loop_exit
    _

// kernel: a_call__.7
$region0: #{a_call__.7}
  #allocation0 [shape = 'u32[]', space=smem, size = 0x4, offset = 0x4, fixed_abs, tag = 'smem constant byte address 0x4 - core index']
  #allocation1 [shape = 'u32[144,128]{1,0:T(1,128)}', space=vmem, size = 0x12000, scoped, tag = 'internal scratch']
  #allocation2 [shape = 'bf16[80,128]{1,0:T(16,128)(2,1)}', space=vmem, size = 0x5000, scoped, tag = 'scratch operand']
  #allocation3 [shape = 'bf16[160,128]{1,0:T(16,128)(2,1)}', space=vmem, size = 0xa000, scoped, tag = 'scratch operand']
  %s0 = inlined_call_operand.vmem [shape: f32[2,16,128], index: 0, kind: input, shape index: {}]
  %s1 = inlined_call_operand.vmem [shape: bf16[32,80], index: 1, kind: input, shape index: {}]
  %s2 = inlined_call_operand.vmem [shape: f32[32,1], index: 2, kind: input, shape index: {}, may-alias: {2,4}]
  %s3 = inlined_call_operand.vmem [shape: bf16[32,160], index: 3, kind: input, shape index: {}]
  %s4 = inlined_call_operand.vmem [shape: f32[32,1], index: 4, kind: input, shape index: {}, may-alias: {2,4}]
  %s5 = inlined_call_operand.vmem [shape: f32[2,32,128], index: 5, kind: output, shape index: {}]
  %s6 = sld [smem:[#allocation0]]
  $region53: #{a_call__.7} parent=0
    _
  %s8 = ssub.s32 1, %s6
  %s9 = scalar_select 0, %s8, %s6
  loop: start=0, step=1, limit=4
  $region2: #{a_call__.7} parent=0 // loop_pre_header
    _
  $region3: #{a_call__.7} parent=0 // loop_header
    %s11 = sphi 0, %s15
    %p12 = scmp.ge.s32.totalorder %s11, 4
    %s21 = sphi 0, %s23
    %s24 = sphi 0, %s21
    %s25 = sphi 0, %s24
    %s41 = sphi 0, %s25
    %s45 = sphi 0, %s45
    %s47 = sphi 0, %s45
    %s48 = sphi 0, %s47
    %s62 = sphi 0, %s48
    %s66 = sphi 0, %s66
    %s68 = sphi 0, %s66
    %s69 = sphi 0, %s68
    %s83 = sphi 0, %s69
    %s87 = sphi 0, %s87
    %s89 = sphi 0, %s87
    %s90 = sphi 0, %s89
    %s104 = sphi 0, %s90
    %s108 = sphi 0, %s108
    %s110 = sphi 0, %s108
    %s111 = sphi 0, %s110
    %s125 = sphi 0, %s111
    %s131 = sphi 0, %s133
    %s134 = sphi 0, %s131
    %s135 = sphi 0, %s134
    %s151 = sphi 0, %s135
  $region4: #{a_call__.7} parent=0 // loop_header_branch
    %14 = sbr.rel (%p12) target = $region8
  $region5: #{a_call__.7} parent=0 // loop_body
    %s16 = ssub.s32 %s11, 1
    %s17 = ssub.s32 %s11, 2
    %s18 = sadd.s32 %s11, 1
    %s19 = ssub.s32 %s11, %s18
    %p20 = scmp.eq.s32.totalorder %s19, 0
    %s22 = sadd.s32 %s21, 1
    %s23 = scalar_select %p20, %s21, %s22
    %p26 = pneg %p20
    %p27 = scmp.eq.s32.totalorder %s11, 1
    %p28 = por %p26, %p27
    %p29 = scmp.ne.s32.totalorder %s21, %s24
    %p30 = scmp.eq.s32.totalorder %s11, 0
    %p31 = por %p29, %p30
    %p32 = scmp.ne.s32.totalorder %s21, %s24
    %p33 = scmp.eq.s32.totalorder %s16, 1
    %p34 = por %p32, %p33
    %p35 = scmp.ne.s32.totalorder %s24, %s25
    %p36 = scmp.eq.s32.totalorder %s16, 0
    %p37 = por %p35, %p36
    %p38 = scmp.ne.s32.totalorder %s24, %s25
    %p39 = scmp.eq.s32.totalorder %s17, 1
    %p40 = por %p38, %p39
    %p42 = scmp.ne.s32.totalorder %s25, %s41
    %p43 = scmp.eq.s32.totalorder %s17, 0
    %p44 = por %p42, %p43
    %s46 = sadd.s32 %s45, 1
    %p49 = scmp.eq.s32.totalorder %s11, 1
    %p50 = scmp.ne.s32.totalorder %s45, %s47
    %p51 = scmp.eq.s32.totalorder %s11, 0
    %p52 = por %p50, %p51
    %p53 = scmp.ne.s32.totalorder %s45, %s47
    %p54 = scmp.eq.s32.totalorder %s16, 1
    %p55 = por %p53, %p54
    %p56 = scmp.ne.s32.totalorder %s47, %s48
    %p57 = scmp.eq.s32.totalorder %s16, 0
    %p58 = por %p56, %p57
    %p59 = scmp.ne.s32.totalorder %s47, %s48
    %p60 = scmp.eq.s32.totalorder %s17, 1
    %p61 = por %p59, %p60
    %p63 = scmp.ne.s32.totalorder %s48, %s62
    %p64 = scmp.eq.s32.totalorder %s17, 0
    %p65 = por %p63, %p64
    %s67 = sadd.s32 %s66, 1
    %p70 = scmp.eq.s32.totalorder %s11, 1
    %p71 = scmp.ne.s32.totalorder %s66, %s68
    %p72 = scmp.eq.s32.totalorder %s11, 0
    %p73 = por %p71, %p72
    %p74 = scmp.ne.s32.totalorder %s66, %s68
    %p75 = scmp.eq.s32.totalorder %s16, 1
    %p76 = por %p74, %p75
    %p77 = scmp.ne.s32.totalorder %s68, %s69
    %p78 = scmp.eq.s32.totalorder %s16, 0
    %p79 = por %p77, %p78
    %p80 = scmp.ne.s32.totalorder %s68, %s69
    %p81 = scmp.eq.s32.totalorder %s17, 1
    %p82 = por %p80, %p81
    %p84 = scmp.ne.s32.totalorder %s69, %s83
    %p85 = scmp.eq.s32.totalorder %s17, 0
    %p86 = por %p84, %p85
    %s88 = sadd.s32 %s87, 1
    %p91 = scmp.eq.s32.totalorder %s11, 1
    %p92 = scmp.ne.s32.totalorder %s87, %s89
    %p93 = scmp.eq.s32.totalorder %s11, 0
    %p94 = por %p92, %p93
    %p95 = scmp.ne.s32.totalorder %s87, %s89
    %p96 = scmp.eq.s32.totalorder %s16, 1
    %p97 = por %p95, %p96
    %p98 = scmp.ne.s32.totalorder %s89, %s90
    %p99 = scmp.eq.s32.totalorder %s16, 0
    %p100 = por %p98, %p99
    %p101 = scmp.ne.s32.totalorder %s89, %s90
    %p102 = scmp.eq.s32.totalorder %s17, 1
    %p103 = por %p101, %p102
    %p105 = scmp.ne.s32.totalorder %s90, %s104
    %p106 = scmp.eq.s32.totalorder %s17, 0
    %p107 = por %p105, %p106
    %s109 = sadd.s32 %s108, 1
    %p112 = scmp.eq.s32.totalorder %s11, 1
    %p113 = scmp.ne.s32.totalorder %s108, %s110
    %p114 = scmp.eq.s32.totalorder %s11, 0
    %p115 = por %p113, %p114
    %p116 = scmp.ne.s32.totalorder %s108, %s110
    %p117 = scmp.eq.s32.totalorder %s16, 1
    %p118 = por %p116, %p117
    %p119 = scmp.ne.s32.totalorder %s110, %s111
    %p120 = scmp.eq.s32.totalorder %s16, 0
    %p121 = por %p119, %p120
    %p122 = scmp.ne.s32.totalorder %s110, %s111
    %p123 = scmp.eq.s32.totalorder %s17, 1
    %p124 = por %p122, %p123
    %p126 = scmp.ne.s32.totalorder %s111, %s125
    %p127 = scmp.eq.s32.totalorder %s17, 0
    %p128 = por %p126, %p127
    %s129 = ssub.s32 %s11, %s18
    %p130 = scmp.eq.s32.totalorder %s129, 0
    %s132 = sadd.s32 %s131, 1
    %s133 = scalar_select %p130, %s131, %s132
    %p136 = pneg %p130
    %p137 = scmp.eq.s32.totalorder %s11, 1
    %p138 = por %p136, %p137
    %p139 = scmp.ne.s32.totalorder %s131, %s134
    %p140 = scmp.eq.s32.totalorder %s11, 0
    %p141 = por %p139, %p140
    %p142 = scmp.ne.s32.totalorder %s131, %s134
    %p143 = scmp.eq.s32.totalorder %s16, 1
    %p144 = por %p142, %p143
    %p145 = scmp.ne.s32.totalorder %s134, %s135
    %p146 = scmp.eq.s32.totalorder %s16, 0
    %p147 = por %p145, %p146
    %p148 = scmp.ne.s32.totalorder %s134, %s135
    %p149 = scmp.eq.s32.totalorder %s17, 1
    %p150 = por %p148, %p149
    %p152 = scmp.ne.s32.totalorder %s135, %s151
    %p153 = scmp.eq.s32.totalorder %s17, 0
    %p154 = por %p152, %p153
    %p155 = scmp.le.s32.totalorder 1, %s11
    %p156 = scmp.lt.s32.totalorder %s11, 3
    %p157 = pnand %p155, %p156
    %p158 = pneg %p157
    // Predicated region
    $region9: #{a_call__.7} parent=5 // pred_check
      _
    $region10: #{a_call__.7} parent=5 // pred_check_branch
      %160 = sbr.rel (%p157) target = $region12
    $region11: #{a_call__.7} parent=5 // pred_region
      %s161 = ssub.s32 %s11, 1
      // Predicated region
      $region13: #{a_call__.7} parent=11 // pred_check
        %p162 = pneg %p58
      $region14: #{a_call__.7} parent=11 // pred_check_branch
        %164 = sbr.rel (%p162) target = $region16
      $region15: #{a_call__.7} parent=11 // pred_region
        _
      $region16: #{a_call__.7} parent=11 // pred_fallthru
        _
      // Predicated region
      $region17: #{a_call__.7} parent=11 // pred_check
        %p165 = pneg %p79
      $region18: #{a_call__.7} parent=11 // pred_check_branch
        %167 = sbr.rel (%p165) target = $region20
      $region19: #{a_call__.7} parent=11 // pred_region
        _
      $region20: #{a_call__.7} parent=11 // pred_fallthru
        _
      // Predicated region
      $region21: #{a_call__.7} parent=11 // pred_check
        %p168 = pneg %p100
      $region22: #{a_call__.7} parent=11 // pred_check_branch
        %170 = sbr.rel (%p168) target = $region24
      $region23: #{a_call__.7} parent=11 // pred_region
        _
      $region24: #{a_call__.7} parent=11 // pred_fallthru
        _
      // Predicated region
      $region25: #{a_call__.7} parent=11 // pred_check
        %p171 = pneg %p121
      $region26: #{a_call__.7} parent=11 // pred_check_branch
        %173 = sbr.rel (%p171) target = $region28
      $region27: #{a_call__.7} parent=11 // pred_region
        _
      $region28: #{a_call__.7} parent=11 // pred_fallthru
        _
    $region12: #{a_call__.7} parent=5 // pred_fallthru
      _
    %p174 = scmp.lt.s32.totalorder %s11, 2
    // Predicated region
    $region29: #{a_call__.7} parent=5 // pred_check
      %p175 = pneg %p174
    $region30: #{a_call__.7} parent=5 // pred_check_branch
      %177 = sbr.rel (%p175) target = $region32
    $region31: #{a_call__.7} parent=5 // pred_region
      // Predicated region
      $region33: #{a_call__.7} parent=31 // pred_check
        %p178 = pneg %p31
      $region34: #{a_call__.7} parent=31 // pred_check_branch
        %180 = sbr.rel (%p178) target = $region36
      $region35: #{a_call__.7} parent=31 // pred_region
        %p181 = scmp.lt.s32.totalorder %s11, 1
        %s182 = scalar_select %p181, %s11, 1
        %s183 = smul.addr %s182, 2
        %s184 = smul.addr %s183, 8
        %s185 = scalar_lea.vmem %s0, %s184
      $region36: #{a_call__.7} parent=31 // pred_fallthru
        _
    $region32: #{a_call__.7} parent=5 // pred_fallthru
      _
    %p186 = scmp.le.s32.totalorder 1, %s11
    %p187 = scmp.lt.s32.totalorder %s11, 3
    %p188 = pnand %p186, %p187
    %p189 = pneg %p188
    // Predicated region
    $region37: #{a_call__.7} parent=5 // pred_check
      _
    $region38: #{a_call__.7} parent=5 // pred_check_branch
      %191 = sbr.rel (%p188) target = $region40
    $region39: #{a_call__.7} parent=5 // pred_region
      %s192 = ssub.s32 %s11, 1
      %p193 = scmp.lt.s32.totalorder %s16, 1
      %s194 = scalar_select %p193, %s16, 1
      %s195 = smul.addr %s194, 2
      %s196 = smul.addr %s195, 8
      %s197 = scalar_lea.vmem %s0, %s196
      %p198 = pneg %p37
      %p199 = pneg %p34
      %p200 = pneg %p58
      %p201 = pneg %p55
      %p202 = pneg %p79
      %p203 = pneg %p76
      %p204 = pneg %p100
      %p205 = pneg %p97
      %p206 = pneg %p121
      %p207 = pneg %p118
      %p208 = pneg %p147
      %p209 = pneg %p144
      %p210 = scmp.lt.s32.totalorder %s16, 1
      %s211 = scalar_select %p210, %s16, 1
      %s212 = smul.addr %s211, 4
      %s213 = smul.addr %s212, 8
      %s214 = scalar_lea.vmem %s5, %s213
      %p215 = scmp.lt.s32.totalorder %s16, 1
      %s216 = scalar_select %p215, %s16, 1
      %s217 = smul.addr %s216, 2
      %s218 = smul.addr %s217, 8
      %s219 = scalar_lea.vmem %s0, %s218
      %p220 = scmp.lt.s32.totalorder %s16, 1
      %s221 = scalar_select %p220, %s16, 1
      %s222 = smul.addr %s221, 4
      %s223 = smul.addr %s222, 8
      %s224 = scalar_lea.vmem %s5, %s223
      %v226 = vld [vmem:[%s219] sm:$0xff]
      %v227 = vld [vmem:[%s219 + $0x8] sm:$0xff]
      %228 = vrot.lane.b32.xlu0 %v226, 127
      %v229 = vpop.permute.xlu0 %228
      %230 = vrot.lane.b32.xlu0 %v227, 127
      %v231 = vpop.permute.xlu0 %230
      %232 = vrot.lane.b32.xlu0 %v226, 126
      %v233 = vpop.permute.xlu0 %232
      %234 = vrot.lane.b32.xlu0 %v227, 126
      %v235 = vpop.permute.xlu0 %234
      %236 = vrot.lane.b32.xlu0 %v226, 125
      %v237 = vpop.permute.xlu0 %236
      %238 = vrot.lane.b32.xlu0 %v227, 125
      %v239 = vpop.permute.xlu0 %238
      %240 = vrot.lane.b32.xlu0 %v226, 124
      %v241 = vpop.permute.xlu0 %240
      %242 = vrot.lane.b32.xlu0 %v227, 124
      %v243 = vpop.permute.xlu0 %242
      %v244 = vadd.f32 %v229, %v237
      %v245 = vadd.f32 %v231, %v239
      %v246 = vadd.f32 %v233, %v241
      %v247 = vadd.f32 %v235, %v243
      %v248 = vsub.f32 %v229, %v237
      %v249 = vsub.f32 %v231, %v239
      %v250 = vand.u32 2147483647, %v248
      %v251 = vand.u32 2147483647, %v249
      %v252 = vsub.f32 %v233, %v241
      %v253 = vsub.f32 %v235, %v243
      %v254 = vand.u32 2147483647, %v252
      %v255 = vand.u32 2147483647, %v253
      %v256 = vpack.c.bf16 %v227, %v226
      %257 = vst [vmem:[#allocation2] sm:$0xff] %v256
      %v258 = vpack.c.bf16 %v245, %v244
      %259 = vst [vmem:[#allocation2 + $0x8] sm:$0xff] %v258
      %v260 = vpack.c.bf16 %v247, %v246
      %261 = vst [vmem:[#allocation2 + $0x10] sm:$0xff] %v260
      %v262 = vpack.c.bf16 %v251, %v250
      %263 = vst [vmem:[#allocation2 + $0x18] sm:$0xff] %v262
      %v264 = vpack.c.bf16 %v255, %v254
      %265 = vst [vmem:[#allocation2 + $0x20] sm:$0xff] %v264
      %v266 = vld [vmem:[%s1] sm:$0xf]
      %v267 = vld [vmem:[%s1 + $0x4] sm:$0xf]
      %v268 = vld [vmem:[%s1 + $0x8] sm:$0xf]
      %v269 = vld [vmem:[%s1 + $0xc] sm:$0xf]
      %v270 = vld [vmem:[#allocation2] sm:$0xff]
      %v271 = vld [vmem:[#allocation2 + $0x8] sm:$0xff]
      %v272 = vld [vmem:[#allocation2 + $0x10] sm:$0xff]
      %v273 = vld [vmem:[#allocation2 + $0x18] sm:$0xff]
      %v274 = vld [vmem:[#allocation2 + $0x20] sm:$0xff]
      %v275 = vld [vmem:[%s2] sm:$0xff]
      %v276 = vld [vmem:[%s2 + $0x8] sm:$0xff]
      %v277 = vld [vmem:[%s2 + $0x10] sm:$0xff]
      %v278 = vld [vmem:[%s2 + $0x18] sm:$0xff]
      %280 = vset.pattern.permute.xlu0 0
      %281 = vperm.xlu0 %280, %v275
      %v282 = vpop.permute.xlu0 %281
      %285 = vset.pattern.permute.xlu0 0
      %286 = vperm.xlu0 %285, %v276
      %v287 = vpop.permute.xlu0 %286
      %290 = vset.pattern.permute.xlu0 0
      %291 = vperm.xlu0 %290, %v277
      %v292 = vpop.permute.xlu0 %291
      %295 = vset.pattern.permute.xlu0 0
      %296 = vperm.xlu0 %295, %v278
      %v297 = vpop.permute.xlu0 %296
      %v303 = vunpack.c.l.b16 %v266
      %v304 = vunpack.c.l.b16 %v267
      %v305 = vunpack.c.l.b16 %v268
      %v306 = vunpack.c.l.b16 %v269
      %v307 = vpack.c.b16 %v304, %v303
      %v308 = vpack.c.b16 %v306, %v305
      %vm309 = vcmask 654336
      %v311 = vsel %vm309, %v307, 0
      %v314 = vsel %vm309, %v308, 0
      %316 = vmatprep.subr.bf16.mxu0 0
      %317 = vmatpush1.bf16.msra.mxu0 %v270
      %318 = vmatprep.subr.bf16.mxu0 0
      %319 = vmatpush1.bf16.msra.mxu0 %v271
      %320 = vmatprep.subr.bf16.mxu0 0
      %321 = vmatpush1.bf16.msra.mxu0 %v272
      %322 = vmatprep.subr.bf16.mxu0 0
      %323 = vmatpush1.bf16.msra.mxu0 %v273
      %324 = vmatprep.subr.bf16.mxu0 0
      %325 = vmatpush1.bf16.msra.mxu0 %v274
      %326 = vmatprep.subr.bf16.mxu0 0
      %327 = vmatpush1.bf16.msra.mxu0 0
      %328 = vmatprep.subr.bf16.mxu0 0
      %329 = vmatpush1.bf16.msra.mxu0 0
      %330 = vmatprep.subr.bf16.mxu0 0
      %331 = vmatpush1.bf16.msra.mxu0 0
      %332 = vmatprep.subr.bf16.mxu0 0
      %333 = vmatpush1.bf16.msra.mxu0 0
      %334 = vmatprep.subr.bf16.mxu0 0
      %335 = vmatpush1.bf16.msra.mxu0 0
      %336 = vmatprep.subr.bf16.mxu0 0
      %337 = vmatpush1.bf16.msra.mxu0 0
      %338 = vmatprep.subr.bf16.mxu0 0
      %339 = vmatpush1.bf16.msra.mxu0 0
      %340 = vmatprep.subr.bf16.mxu0 0
      %341 = vmatpush1.bf16.msra.mxu0 0
      %342 = vmatprep.subr.bf16.mxu0 0
      %343 = vmatpush1.bf16.msra.mxu0 0
      %344 = vmatprep.subr.bf16.mxu0 0
      %345 = vmatpush1.bf16.msra.mxu0 0
      %346 = vmatprep.subr.bf16.mxu0 0
      %347 = vmatpush1.bf16.msra.mxu0 0
      %348 = vmatprep.mubr.bf16.mxu0 0
      %349 = vmatmul.mubr.bf16.gmra.mrb[0].mxu0 %v311
      %v350 = vpop.f32.mrb[0].mxu0
      %v351 = vadd.f32 %v282, %v350
      %v352 = vpop.f32.mrb[0].mxu0
      %v353 = vpop.f32.mrb[0].mxu0
      %v354 = vadd.f32 %v287, %v353
      %v355 = vpop.f32.mrb[0].mxu0
      %356 = vmatprep.mubr.bf16.mxu0 0
      %357 = vmatmul.mubr.bf16.gmra.mrb[0].mxu0 %v314
      %v358 = vpop.f32.mrb[0].mxu0
      %v359 = vadd.f32 %v292, %v358
      %v360 = vpop.f32.mrb[0].mxu0
      %v361 = vpop.f32.mrb[0].mxu0
      %v362 = vadd.f32 %v297, %v361
      %v363 = vpop.f32.mrb[0].mxu0
      %364 = vdwg.mxu0
      %365 = vadd.xlane.f32.xlu0 %v351
      %v366 = vpop.xlane.xlu0 %365
      %367 = vadd.xlane.f32.xlu0 %v354
      %v368 = vpop.xlane.xlu0 %367
      %369 = vadd.xlane.f32.xlu0 %v359
      %v370 = vpop.xlane.xlu0 %369
      %371 = vadd.xlane.f32.xlu0 %v362
      %v372 = vpop.xlane.xlu0 %371
      %v373 = vrcp.pop 128.0
      %v374 = vmul.f32 %v366, %v373
      %v375 = vmul.f32 %v368, %v373
      %v376 = vmul.f32 %v370, %v373
      %v377 = vmul.f32 %v372, %v373
      %v378 = vsub.f32 %v351, %v374
      %v379 = vsub.f32 %v354, %v375
      %v380 = vsub.f32 %v359, %v376
      %v381 = vsub.f32 %v362, %v377
      %v382 = vmul.f32 %v378, %v378
      %v383 = vmul.f32 %v379, %v379
      %v384 = vmul.f32 %v380, %v380
      %v385 = vmul.f32 %v381, %v381
      %386 = vadd.xlane.f32.xlu0 %v382
      %v387 = vpop.xlane.xlu0 %386
      %388 = vadd.xlane.f32.xlu0 %v383
      %v389 = vpop.xlane.xlu0 %388
      %390 = vadd.xlane.f32.xlu0 %v384
      %v391 = vpop.xlane.xlu0 %390
      %392 = vadd.xlane.f32.xlu0 %v385
      %v393 = vpop.xlane.xlu0 %392
      %v394 = vmul.f32 %v387, %v373
      %v395 = vmul.f32 %v389, %v373
      %v396 = vmul.f32 %v391, %v373
      %v397 = vmul.f32 %v393, %v373
      %v398 = vadd.f32 %v394, 1e-05
      %v399 = vadd.f32 %v395, 1e-05
      %v400 = vadd.f32 %v396, 1e-05
      %v401 = vadd.f32 %v397, 1e-05
      %v402 = vrsqrt.pop %v398
      %v403 = vrsqrt.pop %v399
      %v404 = vrsqrt.pop %v400
      %v405 = vrsqrt.pop %v401
      %v406 = vmul.f32 %v378, %v402
      %v407 = vmul.f32 %v379, %v403
      %v408 = vmul.f32 %v380, %v404
      %v409 = vmul.f32 %v381, %v405
      %v410 = vmax.f32 %v406, 0.0
      %v411 = vmax.f32 %v407, 0.0
      %v412 = vmax.f32 %v408, 0.0
      %v413 = vmax.f32 %v409, 0.0
      %414 = vrot.lane.b32.xlu0 %v410, 127
      %v415 = vpop.permute.xlu0 %414
      %416 = vrot.lane.b32.xlu0 %v411, 127
      %v417 = vpop.permute.xlu0 %416
      %418 = vrot.lane.b32.xlu0 %v412, 127
      %v419 = vpop.permute.xlu0 %418
      %420 = vrot.lane.b32.xlu0 %v413, 127
      %v421 = vpop.permute.xlu0 %420
      %422 = vrot.lane.b32.xlu0 %v410, 126
      %v423 = vpop.permute.xlu0 %422
      %424 = vrot.lane.b32.xlu0 %v411, 126
      %v425 = vpop.permute.xlu0 %424
      %426 = vrot.lane.b32.xlu0 %v412, 126
      %v427 = vpop.permute.xlu0 %426
      %428 = vrot.lane.b32.xlu0 %v413, 126
      %v429 = vpop.permute.xlu0 %428
      %430 = vrot.lane.b32.xlu0 %v410, 125
      %v431 = vpop.permute.xlu0 %430
      %432 = vrot.lane.b32.xlu0 %v411, 125
      %v433 = vpop.permute.xlu0 %432
      %434 = vrot.lane.b32.xlu0 %v412, 125
      %v435 = vpop.permute.xlu0 %434
      %436 = vrot.lane.b32.xlu0 %v413, 125
      %v437 = vpop.permute.xlu0 %436
      %438 = vrot.lane.b32.xlu0 %v410, 124
      %v439 = vpop.permute.xlu0 %438
      %440 = vrot.lane.b32.xlu0 %v411, 124
      %v441 = vpop.permute.xlu0 %440
      %442 = vrot.lane.b32.xlu0 %v412, 124
      %v443 = vpop.permute.xlu0 %442
      %444 = vrot.lane.b32.xlu0 %v413, 124
      %v445 = vpop.permute.xlu0 %444
      %v446 = vadd.f32 %v415, %v431
      %v447 = vadd.f32 %v417, %v433
      %v448 = vadd.f32 %v419, %v435
      %v449 = vadd.f32 %v421, %v437
      %v450 = vadd.f32 %v423, %v439
      %v451 = vadd.f32 %v425, %v441
      %v452 = vadd.f32 %v427, %v443
      %v453 = vadd.f32 %v429, %v445
      %v454 = vsub.f32 %v415, %v431
      %v455 = vsub.f32 %v417, %v433
      %v456 = vsub.f32 %v419, %v435
      %v457 = vsub.f32 %v421, %v437
      %v458 = vand.u32 2147483647, %v454
      %v459 = vand.u32 2147483647, %v455
      %v460 = vand.u32 2147483647, %v456
      %v461 = vand.u32 2147483647, %v457
      %v462 = vsub.f32 %v423, %v439
      %v463 = vsub.f32 %v425, %v441
      %v464 = vsub.f32 %v427, %v443
      %v465 = vsub.f32 %v429, %v445
      %v466 = vand.u32 2147483647, %v462
      %v467 = vand.u32 2147483647, %v463
      %v468 = vand.u32 2147483647, %v464
      %v469 = vand.u32 2147483647, %v465
      %v470 = vpack.c.bf16 %v411, %v410
      %v471 = vpack.c.bf16 %v413, %v412
      %472 = vst [vmem:[#allocation3] sm:$0xff] %v470
      %473 = vst [vmem:[#allocation3 + $0x8] sm:$0xff] %v471
      %v474 = vpack.c.bf16 %v447, %v446
      %v475 = vpack.c.bf16 %v449, %v448
      %476 = vst [vmem:[#allocation3 + $0x10] sm:$0xff] %v474
      %477 = vst [vmem:[#allocation3 + $0x18] sm:$0xff] %v475
      %v478 = vpack.c.bf16 %v451, %v450
      %v479 = vpack.c.bf16 %v453, %v452
      %480 = vst [vmem:[#allocation3 + $0x20] sm:$0xff] %v478
      %481 = vst [vmem:[#allocation3 + $0x28] sm:$0xff] %v479
      %v482 = vpack.c.bf16 %v459, %v458
      %v483 = vpack.c.bf16 %v461, %v460
      %484 = vst [vmem:[#allocation3 + $0x30] sm:$0xff] %v482
      %485 = vst [vmem:[#allocation3 + $0x38] sm:$0xff] %v483
      %v486 = vpack.c.bf16 %v467, %v466
      %v487 = vpack.c.bf16 %v469, %v468
      %488 = vst [vmem:[#allocation3 + $0x40] sm:$0xff] %v486
      %489 = vst [vmem:[#allocation3 + $0x48] sm:$0xff] %v487
      %v490 = vld [vmem:[%s3] sm:$0xff]
      %v491 = vld [vmem:[%s3 + $0x8] sm:$0xff]
      %v492 = vld [vmem:[%s3 + $0x10] sm:$0xff]
      %v493 = vld [vmem:[%s3 + $0x18] sm:$0xff]
      %v494 = vld [vmem:[#allocation3] sm:$0xff]
      %v495 = vld [vmem:[#allocation3 + $0x8] sm:$0xff]
      %v496 = vld [vmem:[#allocation3 + $0x10] sm:$0xff]
      %v497 = vld [vmem:[#allocation3 + $0x18] sm:$0xff]
      %v498 = vld [vmem:[#allocation3 + $0x20] sm:$0xff]
      %v499 = vld [vmem:[#allocation3 + $0x28] sm:$0xff]
      %v500 = vld [vmem:[#allocation3 + $0x30] sm:$0xff]
      %v501 = vld [vmem:[#allocation3 + $0x38] sm:$0xff]
      %v502 = vld [vmem:[#allocation3 + $0x40] sm:$0xff]
      %v503 = vld [vmem:[#allocation3 + $0x48] sm:$0xff]
      %v504 = vld [vmem:[%s4] sm:$0xff]
      %v505 = vld [vmem:[%s4 + $0x8] sm:$0xff]
      %v506 = vld [vmem:[%s4 + $0x10] sm:$0xff]
      %v507 = vld [vmem:[%s4 + $0x18] sm:$0xff]
      %509 = vset.pattern.permute.xlu0 0
      %510 = vperm.xlu0 %509, %v504
      %v511 = vpop.permute.xlu0 %510
      %514 = vset.pattern.permute.xlu0 0
      %515 = vperm.xlu0 %514, %v505
      %v516 = vpop.permute.xlu0 %515
      %519 = vset.pattern.permute.xlu0 0
      %520 = vperm.xlu0 %519, %v506
      %v521 = vpop.permute.xlu0 %520
      %524 = vset.pattern.permute.xlu0 0
      %525 = vperm.xlu0 %524, %v507
      %v526 = vpop.permute.xlu0 %525
      %v532 = vunpack.c.l.b16 %v490
      %v533 = vunpack.c.h.b16 %v490
      %v534 = vunpack.c.l.b16 %v491
      %v535 = vunpack.c.h.b16 %v491
      %v536 = vunpack.c.l.b16 %v492
      %v537 = vunpack.c.h.b16 %v492
      %v538 = vunpack.c.l.b16 %v493
      %v539 = vunpack.c.h.b16 %v493
      %v540 = vpack.c.b16 %v534, %v532
      %v541 = vpack.c.b16 %v535, %v533
      %v542 = vpack.c.b16 %v538, %v536
      %v543 = vpack.c.b16 %v539, %v537
      %vm546 = vcmask 261120
      %v548 = vsel %vm546, %v541, 0
      %v551 = vsel %vm546, %v543, 0
      %553 = vmatprep.subr.bf16.mxu0 0
      %554 = vmatpush1.bf16.msra.mxu0 %v494
      %555 = vmatprep.subr.bf16.mxu0 0
      %556 = vmatpush1.bf16.msra.mxu0 %v495
      %557 = vmatprep.subr.bf16.mxu0 0
      %558 = vmatpush1.bf16.msra.mxu0 %v496
      %559 = vmatprep.subr.bf16.mxu0 0
      %560 = vmatpush1.bf16.msra.mxu0 %v497
      %561 = vmatprep.subr.bf16.mxu0 0
      %562 = vmatpush1.bf16.msra.mxu0 %v498
      %563 = vmatprep.subr.bf16.mxu0 0
      %564 = vmatpush1.bf16.msra.mxu0 %v499
      %565 = vmatprep.subr.bf16.mxu0 0
      %566 = vmatpush1.bf16.msra.mxu0 %v500
      %567 = vmatprep.subr.bf16.mxu0 0
      %568 = vmatpush1.bf16.msra.mxu0 %v501
      %569 = vmatprep.subr.bf16.mxu0 0
      %570 = vmatpush1.bf16.msra.mxu0 %v502
      %571 = vmatprep.subr.bf16.mxu0 0
      %572 = vmatpush1.bf16.msra.mxu0 %v503
      %573 = vmatprep.subr.bf16.mxu0 0
      %574 = vmatpush1.bf16.msra.mxu0 0
      %575 = vmatprep.subr.bf16.mxu0 0
      %576 = vmatpush1.bf16.msra.mxu0 0
      %577 = vmatprep.subr.bf16.mxu0 0
      %578 = vmatpush1.bf16.msra.mxu0 0
      %579 = vmatprep.subr.bf16.mxu0 0
      %580 = vmatpush1.bf16.msra.mxu0 0
      %581 = vmatprep.subr.bf16.mxu0 0
      %582 = vmatpush1.bf16.msra.mxu0 0
      %583 = vmatprep.subr.bf16.mxu0 0
      %584 = vmatpush1.bf16.msra.mxu0 0
      %585 = vmatprep.mubr.bf16.mxu0 %v548
      %586 = vmatmul.mubr.bf16.gmra.mrb[0].mxu0 %v540
      %v587 = vpop.f32.mrb[0].mxu0
      %v588 = vadd.f32 %v511, %v587
      %v589 = vpop.f32.mrb[0].mxu0
      %v590 = vpop.f32.mrb[0].mxu0
      %v591 = vadd.f32 %v516, %v590
      %v592 = vpop.f32.mrb[0].mxu0
      %593 = vmatprep.mubr.bf16.mxu0 %v551
      %594 = vmatmul.mubr.bf16.gmra.mrb[0].mxu0 %v542
      %v595 = vpop.f32.mrb[0].mxu0
      %v596 = vadd.f32 %v521, %v595
      %v597 = vpop.f32.mrb[0].mxu0
      %v598 = vpop.f32.mrb[0].mxu0
      %v599 = vadd.f32 %v526, %v598
      %v600 = vpop.f32.mrb[0].mxu0
      %601 = vdwg.mxu0
      %602 = vadd.xlane.f32.xlu0 %v588
      %v603 = vpop.xlane.xlu0 %602
      %604 = vadd.xlane.f32.xlu0 %v591
      %v605 = vpop.xlane.xlu0 %604
      %606 = vadd.xlane.f32.xlu0 %v596
      %v607 = vpop.xlane.xlu0 %606
      %608 = vadd.xlane.f32.xlu0 %v599
      %v609 = vpop.xlane.xlu0 %608
      %v610 = vmul.f32 %v603, %v373
      %v611 = vmul.f32 %v605, %v373
      %v612 = vmul.f32 %v607, %v373
      %v613 = vmul.f32 %v609, %v373
      %v614 = vsub.f32 %v588, %v610
      %v615 = vsub.f32 %v591, %v611
      %v616 = vsub.f32 %v596, %v612
      %v617 = vsub.f32 %v599, %v613
      %v618 = vmul.f32 %v614, %v614
      %v619 = vmul.f32 %v615, %v615
      %v620 = vmul.f32 %v616, %v616
      %v621 = vmul.f32 %v617, %v617
      %622 = vadd.xlane.f32.xlu0 %v618
      %v623 = vpop.xlane.xlu0 %622
      %624 = vadd.xlane.f32.xlu0 %v619
      %v625 = vpop.xlane.xlu0 %624
      %626 = vadd.xlane.f32.xlu0 %v620
      %v627 = vpop.xlane.xlu0 %626
      %628 = vadd.xlane.f32.xlu0 %v621
      %v629 = vpop.xlane.xlu0 %628
      %v630 = vmul.f32 %v623, %v373
      %v631 = vmul.f32 %v625, %v373
      %v632 = vmul.f32 %v627, %v373
      %v633 = vmul.f32 %v629, %v373
      %v634 = vadd.f32 %v630, 1e-05
      %v635 = vadd.f32 %v631, 1e-05
      %v636 = vadd.f32 %v632, 1e-05
      %v637 = vadd.f32 %v633, 1e-05
      %v638 = vrsqrt.pop %v634
      %v639 = vrsqrt.pop %v635
      %v640 = vrsqrt.pop %v636
      %v641 = vrsqrt.pop %v637
      %v642 = vmul.f32 %v614, %v638
      %v643 = vmul.f32 %v615, %v639
      %v644 = vmul.f32 %v616, %v640
      %v645 = vmul.f32 %v617, %v641
      %v646 = vadd.f32 %v642, %v410
      %v647 = vadd.f32 %v643, %v411
      %v648 = vadd.f32 %v644, %v412
      %v649 = vadd.f32 %v645, %v413
      %v650 = vmax.f32 %v646, 0.0
      %v651 = vmax.f32 %v647, 0.0
      %v652 = vmax.f32 %v648, 0.0
      %v653 = vmax.f32 %v649, 0.0
      %654 = vst [vmem:[%s224] sm:$0xff] %v650
      %655 = vst [vmem:[%s224 + $0x8] sm:$0xff] %v651
      %656 = vst [vmem:[%s224 + $0x10] sm:$0xff] %v652
      %657 = vst [vmem:[%s224 + $0x18] sm:$0xff] %v653
      %p658 = scmp.lt.s32.totalorder %s16, 1
      %s659 = scalar_select %p658, %s16, 1
      %s660 = smul.addr %s659, 4
      %s661 = smul.addr %s660, 8
      %s662 = scalar_lea.vmem %s5, %s661
      // Predicated region
      $region41: #{a_call__.7} parent=39 // pred_check
        %p663 = pneg %p144
      $region42: #{a_call__.7} parent=39 // pred_check_branch
        %665 = sbr.rel (%p663) target = $region44
      $region43: #{a_call__.7} parent=39 // pred_region
        _
      $region44: #{a_call__.7} parent=39 // pred_fallthru
        _
    $region40: #{a_call__.7} parent=5 // pred_fallthru
      _
    %p666 = scmp.le.s32.totalorder 2, %s11
    // Predicated region
    $region45: #{a_call__.7} parent=5 // pred_check
      %p667 = pneg %p666
    $region46: #{a_call__.7} parent=5 // pred_check_branch
      %669 = sbr.rel (%p667) target = $region48
    $region47: #{a_call__.7} parent=5 // pred_region
      %s670 = ssub.s32 %s11, 2
      // Predicated region
      $region49: #{a_call__.7} parent=47 // pred_check
        %p671 = pneg %p150
      $region50: #{a_call__.7} parent=47 // pred_check_branch
        %673 = sbr.rel (%p671) target = $region52
      $region51: #{a_call__.7} parent=47 // pred_region
        %p674 = scmp.lt.s32.totalorder %s17, 1
        %s675 = scalar_select %p674, %s17, 1
        %s676 = smul.addr %s675, 4
        %s677 = smul.addr %s676, 8
        %s678 = scalar_lea.vmem %s5, %s677
      $region52: #{a_call__.7} parent=47 // pred_fallthru
        _
    $region48: #{a_call__.7} parent=5 // pred_fallthru
      _
  $region6: #{a_call__.7} parent=0 // loop_footer
    %s15 = sadd.s32 1, %s11
  $region7: #{a_call__.7} parent=0 // loop_footer_branch
    %10 = sbr.rel target = $region3
  $region8: #{a_call__.7} parent=0 // loop_exit
    _

// kernel: a_call__.10
$region0: #{a_call__.10}
  #allocation0 [shape = 'u32[]', space=smem, size = 0x4, offset = 0x4, fixed_abs, tag = 'smem constant byte address 0x4 - core index']
  #allocation1 [shape = 'u32[144,128]{1,0:T(1,128)}', space=vmem, size = 0x12000, scoped, tag = 'internal scratch']
  #allocation2 [shape = 'bf16[80,256]{1,0:T(16,128)(2,1)}', space=vmem, size = 0xa000, scoped, tag = 'scratch operand']
  %s0 = inlined_call_operand.vmem [shape: f32[2,16,256], index: 0, kind: input, shape index: {}]
  %s1 = inlined_call_operand.vmem [shape: bf16[8,80], index: 1, kind: input, shape index: {}]
  %s2 = inlined_call_operand.vmem [shape: f32[8,1], index: 2, kind: input, shape index: {}]
  %s3 = inlined_call_operand.vmem [shape: f32[2,8,256], index: 3, kind: output, shape index: {}]
  %s4 = sld [smem:[#allocation0]]
  $region45: #{a_call__.10} parent=0
    _
  %s6 = ssub.s32 1, %s4
  %s7 = scalar_select 0, %s6, %s4
  loop: start=0, step=1, limit=4
  $region2: #{a_call__.10} parent=0 // loop_pre_header
    _
  $region3: #{a_call__.10} parent=0 // loop_header
    %s9 = sphi 0, %s13
    %p10 = scmp.ge.s32.totalorder %s9, 4
    %s19 = sphi 0, %s21
    %s22 = sphi 0, %s19
    %s23 = sphi 0, %s22
    %s39 = sphi 0, %s23
    %s43 = sphi 0, %s43
    %s45 = sphi 0, %s43
    %s46 = sphi 0, %s45
    %s60 = sphi 0, %s46
    %s64 = sphi 0, %s64
    %s66 = sphi 0, %s64
    %s67 = sphi 0, %s66
    %s81 = sphi 0, %s67
    %s87 = sphi 0, %s89
    %s90 = sphi 0, %s87
    %s91 = sphi 0, %s90
    %s107 = sphi 0, %s91
  $region4: #{a_call__.10} parent=0 // loop_header_branch
    %12 = sbr.rel (%p10) target = $region8
  $region5: #{a_call__.10} parent=0 // loop_body
    %s14 = ssub.s32 %s9, 1
    %s15 = ssub.s32 %s9, 2
    %s16 = sadd.s32 %s9, 1
    %s17 = ssub.s32 %s9, %s16
    %p18 = scmp.eq.s32.totalorder %s17, 0
    %s20 = sadd.s32 %s19, 1
    %s21 = scalar_select %p18, %s19, %s20
    %p24 = pneg %p18
    %p25 = scmp.eq.s32.totalorder %s9, 1
    %p26 = por %p24, %p25
    %p27 = scmp.ne.s32.totalorder %s19, %s22
    %p28 = scmp.eq.s32.totalorder %s9, 0
    %p29 = por %p27, %p28
    %p30 = scmp.ne.s32.totalorder %s19, %s22
    %p31 = scmp.eq.s32.totalorder %s14, 1
    %p32 = por %p30, %p31
    %p33 = scmp.ne.s32.totalorder %s22, %s23
    %p34 = scmp.eq.s32.totalorder %s14, 0
    %p35 = por %p33, %p34
    %p36 = scmp.ne.s32.totalorder %s22, %s23
    %p37 = scmp.eq.s32.totalorder %s15, 1
    %p38 = por %p36, %p37
    %p40 = scmp.ne.s32.totalorder %s23, %s39
    %p41 = scmp.eq.s32.totalorder %s15, 0
    %p42 = por %p40, %p41
    %s44 = sadd.s32 %s43, 1
    %p47 = scmp.eq.s32.totalorder %s9, 1
    %p48 = scmp.ne.s32.totalorder %s43, %s45
    %p49 = scmp.eq.s32.totalorder %s9, 0
    %p50 = por %p48, %p49
    %p51 = scmp.ne.s32.totalorder %s43, %s45
    %p52 = scmp.eq.s32.totalorder %s14, 1
    %p53 = por %p51, %p52
    %p54 = scmp.ne.s32.totalorder %s45, %s46
    %p55 = scmp.eq.s32.totalorder %s14, 0
    %p56 = por %p54, %p55
    %p57 = scmp.ne.s32.totalorder %s45, %s46
    %p58 = scmp.eq.s32.totalorder %s15, 1
    %p59 = por %p57, %p58
    %p61 = scmp.ne.s32.totalorder %s46, %s60
    %p62 = scmp.eq.s32.totalorder %s15, 0
    %p63 = por %p61, %p62
    %s65 = sadd.s32 %s64, 1
    %p68 = scmp.eq.s32.totalorder %s9, 1
    %p69 = scmp.ne.s32.totalorder %s64, %s66
    %p70 = scmp.eq.s32.totalorder %s9, 0
    %p71 = por %p69, %p70
    %p72 = scmp.ne.s32.totalorder %s64, %s66
    %p73 = scmp.eq.s32.totalorder %s14, 1
    %p74 = por %p72, %p73
    %p75 = scmp.ne.s32.totalorder %s66, %s67
    %p76 = scmp.eq.s32.totalorder %s14, 0
    %p77 = por %p75, %p76
    %p78 = scmp.ne.s32.totalorder %s66, %s67
    %p79 = scmp.eq.s32.totalorder %s15, 1
    %p80 = por %p78, %p79
    %p82 = scmp.ne.s32.totalorder %s67, %s81
    %p83 = scmp.eq.s32.totalorder %s15, 0
    %p84 = por %p82, %p83
    %s85 = ssub.s32 %s9, %s16
    %p86 = scmp.eq.s32.totalorder %s85, 0
    %s88 = sadd.s32 %s87, 1
    %s89 = scalar_select %p86, %s87, %s88
    %p92 = pneg %p86
    %p93 = scmp.eq.s32.totalorder %s9, 1
    %p94 = por %p92, %p93
    %p95 = scmp.ne.s32.totalorder %s87, %s90
    %p96 = scmp.eq.s32.totalorder %s9, 0
    %p97 = por %p95, %p96
    %p98 = scmp.ne.s32.totalorder %s87, %s90
    %p99 = scmp.eq.s32.totalorder %s14, 1
    %p100 = por %p98, %p99
    %p101 = scmp.ne.s32.totalorder %s90, %s91
    %p102 = scmp.eq.s32.totalorder %s14, 0
    %p103 = por %p101, %p102
    %p104 = scmp.ne.s32.totalorder %s90, %s91
    %p105 = scmp.eq.s32.totalorder %s15, 1
    %p106 = por %p104, %p105
    %p108 = scmp.ne.s32.totalorder %s91, %s107
    %p109 = scmp.eq.s32.totalorder %s15, 0
    %p110 = por %p108, %p109
    %p111 = scmp.le.s32.totalorder 1, %s9
    %p112 = scmp.lt.s32.totalorder %s9, 3
    %p113 = pnand %p111, %p112
    %p114 = pneg %p113
    // Predicated region
    $region9: #{a_call__.10} parent=5 // pred_check
      _
    $region10: #{a_call__.10} parent=5 // pred_check_branch
      %116 = sbr.rel (%p113) target = $region12
    $region11: #{a_call__.10} parent=5 // pred_region
      %s117 = ssub.s32 %s9, 1
      // Predicated region
      $region13: #{a_call__.10} parent=11 // pred_check
        %p118 = pneg %p56
      $region14: #{a_call__.10} parent=11 // pred_check_branch
        %120 = sbr.rel (%p118) target = $region16
      $region15: #{a_call__.10} parent=11 // pred_region
        _
      $region16: #{a_call__.10} parent=11 // pred_fallthru
        _
      // Predicated region
      $region17: #{a_call__.10} parent=11 // pred_check
        %p121 = pneg %p77
      $region18: #{a_call__.10} parent=11 // pred_check_branch
        %123 = sbr.rel (%p121) target = $region20
      $region19: #{a_call__.10} parent=11 // pred_region
        _
      $region20: #{a_call__.10} parent=11 // pred_fallthru
        _
    $region12: #{a_call__.10} parent=5 // pred_fallthru
      _
    %p124 = scmp.lt.s32.totalorder %s9, 2
    // Predicated region
    $region21: #{a_call__.10} parent=5 // pred_check
      %p125 = pneg %p124
    $region22: #{a_call__.10} parent=5 // pred_check_branch
      %127 = sbr.rel (%p125) target = $region24
    $region23: #{a_call__.10} parent=5 // pred_region
      // Predicated region
      $region25: #{a_call__.10} parent=23 // pred_check
        %p128 = pneg %p29
      $region26: #{a_call__.10} parent=23 // pred_check_branch
        %130 = sbr.rel (%p128) target = $region28
      $region27: #{a_call__.10} parent=23 // pred_region
        %p131 = scmp.lt.s32.totalorder %s9, 1
        %s132 = scalar_select %p131, %s9, 1
        %s133 = smul.addr %s132, 4
        %s134 = smul.addr %s133, 8
        %s135 = scalar_lea.vmem %s0, %s134
      $region28: #{a_call__.10} parent=23 // pred_fallthru
        _
    $region24: #{a_call__.10} parent=5 // pred_fallthru
      _
    %p136 = scmp.le.s32.totalorder 1, %s9
    %p137 = scmp.lt.s32.totalorder %s9, 3
    %p138 = pnand %p136, %p137
    %p139 = pneg %p138
    // Predicated region
    $region29: #{a_call__.10} parent=5 // pred_check
      _
    $region30: #{a_call__.10} parent=5 // pred_check_branch
      %141 = sbr.rel (%p138) target = $region32
    $region31: #{a_call__.10} parent=5 // pred_region
      %s142 = ssub.s32 %s9, 1
      %p143 = scmp.lt.s32.totalorder %s14, 1
      %s144 = scalar_select %p143, %s14, 1
      %s145 = smul.addr %s144, 4
      %s146 = smul.addr %s145, 8
      %s147 = scalar_lea.vmem %s0, %s146
      %p148 = pneg %p35
      %p149 = pneg %p32
      %p150 = pneg %p56
      %p151 = pneg %p53
      %p152 = pneg %p77
      %p153 = pneg %p74
      %p154 = pneg %p103
      %p155 = pneg %p100
      %p156 = scmp.lt.s32.totalorder %s14, 1
      %s157 = scalar_select %p156, %s14, 1
      %s158 = smul.addr %s157, 2
      %s159 = smul.addr %s158, 8
      %s160 = scalar_lea.vmem %s3, %s159
      %p161 = scmp.lt.s32.totalorder %s14, 1
      %s162 = scalar_select %p161, %s14, 1
      %s163 = smul.addr %s162, 4
      %s164 = smul.addr %s163, 8
      %s165 = scalar_lea.vmem %s0, %s164
      %p166 = scmp.lt.s32.totalorder %s14, 1
      %s167 = scalar_select %p166, %s14, 1
      %s168 = smul.addr %s167, 2
      %s169 = smul.addr %s168, 8
      %s170 = scalar_lea.vmem %s3, %s169
      %v172 = vld [vmem:[%s165] sm:$0xff]
      %v173 = vld [vmem:[%s165 + $0x8] sm:$0xff]
      %v174 = vld [vmem:[%s165 + $0x10] sm:$0xff]
      %v175 = vld [vmem:[%s165 + $0x18] sm:$0xff]
      %176 = vrot.lane.b32.xlu0 %v172, 127
      %v177 = vpop.permute.xlu0 %176
      %178 = vrot.lane.b32.xlu0 %v174, 127
      %v179 = vpop.permute.xlu0 %178
      %180 = vrot.lane.b32.xlu0 %v173, 127
      %v181 = vpop.permute.xlu0 %180
      %182 = vrot.lane.b32.xlu0 %v175, 127
      %v183 = vpop.permute.xlu0 %182
      %v184 = vlaneseq
      %v185 = vand.u32 %v184, 127
      %vm186 = vcmp.lt.s32.totalorder %v185, 127
      %v187 = vsel %vm186, %v177, %v181
      %v188 = vsel %vm186, %v179, %v183
      %v189 = vsel %vm186, %v181, %v177
      %v190 = vsel %vm186, %v183, %v179
      %191 = vrot.lane.b32.xlu0 %v172, 126
      %v192 = vpop.permute.xlu0 %191
      %193 = vrot.lane.b32.xlu0 %v174, 126
      %v194 = vpop.permute.xlu0 %193
      %195 = vrot.lane.b32.xlu0 %v173, 126
      %v196 = vpop.permute.xlu0 %195
      %197 = vrot.lane.b32.xlu0 %v175, 126
      %v198 = vpop.permute.xlu0 %197
      %vm199 = vcmp.lt.s32.totalorder %v185, 126
      %v200 = vsel %vm199, %v192, %v196
      %v201 = vsel %vm199, %v194, %v198
      %v202 = vsel %vm199, %v196, %v192
      %v203 = vsel %vm199, %v198, %v194
      %204 = vrot.lane.b32.xlu0 %v172, 125
      %v205 = vpop.permute.xlu0 %204
      %206 = vrot.lane.b32.xlu0 %v174, 125
      %v207 = vpop.permute.xlu0 %206
      %208 = vrot.lane.b32.xlu0 %v173, 125
      %v209 = vpop.permute.xlu0 %208
      %210 = vrot.lane.b32.xlu0 %v175, 125
      %v211 = vpop.permute.xlu0 %210
      %vm212 = vcmp.lt.s32.totalorder %v185, 125
      %v213 = vsel %vm212, %v205, %v209
      %v214 = vsel %vm212, %v207, %v211
      %v215 = vsel %vm212, %v209, %v205
      %v216 = vsel %vm212, %v211, %v207
      %217 = vrot.lane.b32.xlu0 %v172, 124
      %v218 = vpop.permute.xlu0 %217
      %219 = vrot.lane.b32.xlu0 %v174, 124
      %v220 = vpop.permute.xlu0 %219
      %221 = vrot.lane.b32.xlu0 %v173, 124
      %v222 = vpop.permute.xlu0 %221
      %223 = vrot.lane.b32.xlu0 %v175, 124
      %v224 = vpop.permute.xlu0 %223
      %vm225 = vcmp.lt.s32.totalorder %v185, 124
      %v226 = vsel %vm225, %v218, %v222
      %v227 = vsel %vm225, %v220, %v224
      %v228 = vsel %vm225, %v222, %v218
      %v229 = vsel %vm225, %v224, %v220
      %v230 = vadd.f32 %v187, %v213
      %v231 = vadd.f32 %v189, %v215
      %v232 = vadd.f32 %v188, %v214
      %v233 = vadd.f32 %v190, %v216
      %v234 = vadd.f32 %v200, %v226
      %v235 = vadd.f32 %v202, %v228
      %v236 = vadd.f32 %v201, %v227
      %v237 = vadd.f32 %v203, %v229
      %v238 = vsub.f32 %v187, %v213
      %v239 = vsub.f32 %v189, %v215
      %v240 = vsub.f32 %v188, %v214
      %v241 = vsub.f32 %v190, %v216
      %v242 = vand.u32 2147483647, %v238
      %v243 = vand.u32 2147483647, %v239
      %v244 = vand.u32 2147483647, %v240
      %v245 = vand.u32 2147483647, %v241
      %v246 = vsub.f32 %v200, %v226
      %v247 = vsub.f32 %v202, %v228
      %v248 = vsub.f32 %v201, %v227
      %v249 = vsub.f32 %v203, %v229
      %v250 = vand.u32 2147483647, %v246
      %v251 = vand.u32 2147483647, %v247
      %v252 = vand.u32 2147483647, %v248
      %v253 = vand.u32 2147483647, %v249
      %v254 = vpack.c.bf16 %v174, %v172
      %v255 = vpack.c.bf16 %v175, %v173
      %256 = vst [vmem:[#allocation2] sm:$0xff] %v254
      %257 = vst [vmem:[#allocation2 + $0x8] sm:$0xff] %v255
      %v258 = vpack.c.bf16 %v232, %v230
      %v259 = vpack.c.bf16 %v233, %v231
      %260 = vst [vmem:[#allocation2 + $0x10] sm:$0xff] %v258
      %261 = vst [vmem:[#allocation2 + $0x18] sm:$0xff] %v259
      %v262 = vpack.c.bf16 %v236, %v234
      %v263 = vpack.c.bf16 %v237, %v235
      %264 = vst [vmem:[#allocation2 + $0x20] sm:$0xff] %v262
      %265 = vst [vmem:[#allocation2 + $0x28] sm:$0xff] %v263
      %v266 = vpack.c.bf16 %v244, %v242
      %v267 = vpack.c.bf16 %v245, %v243
      %268 = vst [vmem:[#allocation2 + $0x30] sm:$0xff] %v266
      %269 = vst [vmem:[#allocation2 + $0x38] sm:$0xff] %v267
      %v270 = vpack.c.bf16 %v252, %v250
      %v271 = vpack.c.bf16 %v253, %v251
      %272 = vst [vmem:[#allocation2 + $0x40] sm:$0xff] %v270
      %273 = vst [vmem:[#allocation2 + $0x48] sm:$0xff] %v271
      %v274 = vld [vmem:[%s1] sm:$0xf]
      %v275 = vld [vmem:[#allocation2] sm:$0xff]
      %v276 = vld [vmem:[#allocation2 + $0x8] sm:$0xff]
      %v277 = vld [vmem:[#allocation2 + $0x10] sm:$0xff]
      %v278 = vld [vmem:[#allocation2 + $0x18] sm:$0xff]
      %v279 = vld [vmem:[#allocation2 + $0x20] sm:$0xff]
      %v280 = vld [vmem:[#allocation2 + $0x28] sm:$0xff]
      %v281 = vld [vmem:[#allocation2 + $0x30] sm:$0xff]
      %v282 = vld [vmem:[#allocation2 + $0x38] sm:$0xff]
      %v283 = vld [vmem:[#allocation2 + $0x40] sm:$0xff]
      %v284 = vld [vmem:[#allocation2 + $0x48] sm:$0xff]
      %v285 = vld [vmem:[%s2] sm:$0xff]
      %287 = vset.pattern.permute.xlu0 0
      %288 = vperm.xlu0 %287, %v285
      %v289 = vpop.permute.xlu0 %288
      %vm291 = vcmask 654336
      %v293 = vsel %vm291, %v274, 0
      %295 = vmatprep.subr.bf16.mxu0 %v276
      %296 = vmatpush1.bf16.msra.mxu0 %v275
      %297 = vmatprep.subr.bf16.mxu0 %v278
      %298 = vmatpush1.bf16.msra.mxu0 %v277
      %299 = vmatprep.subr.bf16.mxu0 %v280
      %300 = vmatpush1.bf16.msra.mxu0 %v279
      %301 = vmatprep.subr.bf16.mxu0 %v282
      %302 = vmatpush1.bf16.msra.mxu0 %v281
      %303 = vmatprep.subr.bf16.mxu0 %v284
      %304 = vmatpush1.bf16.msra.mxu0 %v283
      %305 = vmatprep.subr.bf16.mxu0 0
      %306 = vmatpush1.bf16.msra.mxu0 0
      %307 = vmatprep.subr.bf16.mxu0 0
      %308 = vmatpush1.bf16.msra.mxu0 0
      %309 = vmatprep.subr.bf16.mxu0 0
      %310 = vmatpush1.bf16.msra.mxu0 0
      %311 = vmatprep.subr.bf16.mxu0 0
      %312 = vmatpush1.bf16.msra.mxu0 0
      %313 = vmatprep.subr.bf16.mxu0 0
      %314 = vmatpush1.bf16.msra.mxu0 0
      %315 = vmatprep.subr.bf16.mxu0 0
      %316 = vmatpush1.bf16.msra.mxu0 0
      %317 = vmatprep.subr.bf16.mxu0 0
      %318 = vmatpush1.bf16.msra.mxu0 0
      %319 = vmatprep.subr.bf16.mxu0 0
      %320 = vmatpush1.bf16.msra.mxu0 0
      %321 = vmatprep.subr.bf16.mxu0 0
      %322 = vmatpush1.bf16.msra.mxu0 0
      %323 = vmatprep.subr.bf16.mxu0 0
      %324 = vmatpush1.bf16.msra.mxu0 0
      %325 = vmatprep.subr.bf16.mxu0 0
      %326 = vmatpush1.bf16.msra.mxu0 0
      %327 = vmatprep.mubr.bf16.mxu0 0
      %328 = vmatmul.mubr.bf16.gmra.mrb[0].mxu0 %v293
      %v329 = vpop.f32.mrb[0].mxu0
      %v330 = vadd.f32 %v289, %v329
      %v331 = vpop.f32.mrb[0].mxu0
      %v332 = vadd.f32 %v289, %v331
      %v333 = vpop.f32.mrb[0].mxu0
      %v334 = vpop.f32.mrb[0].mxu0
      %335 = vdwg.mxu0
      %336 = vst [vmem:[%s170] sm:$0xff] %v330
      %337 = vst [vmem:[%s170 + $0x8] sm:$0xff] %v332
      %p338 = scmp.lt.s32.totalorder %s14, 1
      %s339 = scalar_select %p338, %s14, 1
      %s340 = smul.addr %s339, 2
      %s341 = smul.addr %s340, 8
      %s342 = scalar_lea.vmem %s3, %s341
      // Predicated region
      $region33: #{a_call__.10} parent=31 // pred_check
        %p343 = pneg %p100
      $region34: #{a_call__.10} parent=31 // pred_check_branch
        %345 = sbr.rel (%p343) target = $region36
      $region35: #{a_call__.10} parent=31 // pred_region
        _
      $region36: #{a_call__.10} parent=31 // pred_fallthru
        _
    $region32: #{a_call__.10} parent=5 // pred_fallthru
      _
    %p346 = scmp.le.s32.totalorder 2, %s9
    // Predicated region
    $region37: #{a_call__.10} parent=5 // pred_check
      %p347 = pneg %p346
    $region38: #{a_call__.10} parent=5 // pred_check_branch
      %349 = sbr.rel (%p347) target = $region40
    $region39: #{a_call__.10} parent=5 // pred_region
      %s350 = ssub.s32 %s9, 2
      // Predicated region
      $region41: #{a_call__.10} parent=39 // pred_check
        %p351 = pneg %p106
      $region42: #{a_call__.10} parent=39 // pred_check_branch
        %353 = sbr.rel (%p351) target = $region44
      $region43: #{a_call__.10} parent=39 // pred_region
        %p354 = scmp.lt.s32.totalorder %s15, 1
        %s355 = scalar_select %p354, %s15, 1
        %s356 = smul.addr %s355, 2
        %s357 = smul.addr %s356, 8
        %s358 = scalar_lea.vmem %s3, %s357
      $region44: #{a_call__.10} parent=39 // pred_fallthru
        _
    $region40: #{a_call__.10} parent=5 // pred_fallthru
      _
  $region6: #{a_call__.10} parent=0 // loop_footer
    %s13 = sadd.s32 1, %s9
  $region7: #{a_call__.10} parent=0 // loop_footer_branch
    %8 = sbr.rel target = $region3
  $region8: #{a_call__.10} parent=0 // loop_exit
    _

// kernel: a_call__.9
$region0: #{a_call__.9}
  #allocation0 [shape = 'u32[]', space=smem, size = 0x4, offset = 0x4, fixed_abs, tag = 'smem constant byte address 0x4 - core index']
  #allocation1 [shape = 'u32[144,128]{1,0:T(1,128)}', space=vmem, size = 0x12000, scoped, tag = 'internal scratch']
  #allocation2 [shape = 'bf16[160,256]{1,0:T(16,128)(2,1)}', space=vmem, size = 0x14000, scoped, tag = 'scratch operand']
  #allocation3 [shape = 'bf16[80,256]{1,0:T(16,128)(2,1)}', space=vmem, size = 0xa000, scoped, tag = 'scratch operand']
  %s0 = inlined_call_operand.vmem [shape: f32[2,16,256], index: 0, kind: input, shape index: {}]
  %s1 = inlined_call_operand.vmem [shape: f32[2,16,256], index: 1, kind: input, shape index: {}]
  %s2 = inlined_call_operand.vmem [shape: bf16[16,160], index: 2, kind: input, shape index: {}]
  %s3 = inlined_call_operand.vmem [shape: f32[16,1], index: 3, kind: input, shape index: {}, may-alias: {3,5}]
  %s4 = inlined_call_operand.vmem [shape: bf16[16,80], index: 4, kind: input, shape index: {}]
  %s5 = inlined_call_operand.vmem [shape: f32[16,1], index: 5, kind: input, shape index: {}, may-alias: {3,5}]
  %s6 = inlined_call_operand.vmem [shape: f32[2,16,256], index: 6, kind: output, shape index: {}]
  %s7 = sld [smem:[#allocation0]]
  $region57: #{a_call__.9} parent=0
    _
  %s9 = ssub.s32 1, %s7
  %s10 = scalar_select 0, %s9, %s7
  loop: start=0, step=1, limit=4
  $region2: #{a_call__.9} parent=0 // loop_pre_header
    _
  $region3: #{a_call__.9} parent=0 // loop_header
    %s12 = sphi 0, %s16
    %p13 = scmp.ge.s32.totalorder %s12, 4
    %s22 = sphi 0, %s24
    %s25 = sphi 0, %s22
    %s26 = sphi 0, %s25
    %s42 = sphi 0, %s26
    %s48 = sphi 0, %s50
    %s51 = sphi 0, %s48
    %s52 = sphi 0, %s51
    %s68 = sphi 0, %s52
    %s72 = sphi 0, %s72
    %s74 = sphi 0, %s72
    %s75 = sphi 0, %s74
    %s89 = sphi 0, %s75
    %s93 = sphi 0, %s93
    %s95 = sphi 0, %s93
    %s96 = sphi 0, %s95
    %s110 = sphi 0, %s96
    %s114 = sphi 0, %s114
    %s116 = sphi 0, %s114
    %s117 = sphi 0, %s116
    %s131 = sphi 0, %s117
    %s135 = sphi 0, %s135
    %s137 = sphi 0, %s135
    %s138 = sphi 0, %s137
    %s152 = sphi 0, %s138
    %s158 = sphi 0, %s160
    %s161 = sphi 0, %s158
    %s162 = sphi 0, %s161
    %s178 = sphi 0, %s162
  $region4: #{a_call__.9} parent=0 // loop_header_branch
    %15 = sbr.rel (%p13) target = $region8
  $region5: #{a_call__.9} parent=0 // loop_body
    %s17 = ssub.s32 %s12, 1
    %s18 = ssub.s32 %s12, 2
    %s19 = sadd.s32 %s12, 1
    %s20 = ssub.s32 %s12, %s19
    %p21 = scmp.eq.s32.totalorder %s20, 0
    %s23 = sadd.s32 %s22, 1
    %s24 = scalar_select %p21, %s22, %s23
    %p27 = pneg %p21
    %p28 = scmp.eq.s32.totalorder %s12, 1
    %p29 = por %p27, %p28
    %p30 = scmp.ne.s32.totalorder %s22, %s25
    %p31 = scmp.eq.s32.totalorder %s12, 0
    %p32 = por %p30, %p31
    %p33 = scmp.ne.s32.totalorder %s22, %s25
    %p34 = scmp.eq.s32.totalorder %s17, 1
    %p35 = por %p33, %p34
    %p36 = scmp.ne.s32.totalorder %s25, %s26
    %p37 = scmp.eq.s32.totalorder %s17, 0
    %p38 = por %p36, %p37
    %p39 = scmp.ne.s32.totalorder %s25, %s26
    %p40 = scmp.eq.s32.totalorder %s18, 1
    %p41 = por %p39, %p40
    %p43 = scmp.ne.s32.totalorder %s26, %s42
    %p44 = scmp.eq.s32.totalorder %s18, 0
    %p45 = por %p43, %p44
    %s46 = ssub.s32 %s12, %s19
    %p47 = scmp.eq.s32.totalorder %s46, 0
    %s49 = sadd.s32 %s48, 1
    %s50 = scalar_select %p47, %s48, %s49
    %p53 = pneg %p47
    %p54 = scmp.eq.s32.totalorder %s12, 1
    %p55 = por %p53, %p54
    %p56 = scmp.ne.s32.totalorder %s48, %s51
    %p57 = scmp.eq.s32.totalorder %s12, 0
    %p58 = por %p56, %p57
    %p59 = scmp.ne.s32.totalorder %s48, %s51
    %p60 = scmp.eq.s32.totalorder %s17, 1
    %p61 = por %p59, %p60
    %p62 = scmp.ne.s32.totalorder %s51, %s52
    %p63 = scmp.eq.s32.totalorder %s17, 0
    %p64 = por %p62, %p63
    %p65 = scmp.ne.s32.totalorder %s51, %s52
    %p66 = scmp.eq.s32.totalorder %s18, 1
    %p67 = por %p65, %p66
    %p69 = scmp.ne.s32.totalorder %s52, %s68
    %p70 = scmp.eq.s32.totalorder %s18, 0
    %p71 = por %p69, %p70
    %s73 = sadd.s32 %s72, 1
    %p76 = scmp.eq.s32.totalorder %s12, 1
    %p77 = scmp.ne.s32.totalorder %s72, %s74
    %p78 = scmp.eq.s32.totalorder %s12, 0
    %p79 = por %p77, %p78
    %p80 = scmp.ne.s32.totalorder %s72, %s74
    %p81 = scmp.eq.s32.totalorder %s17, 1
    %p82 = por %p80, %p81
    %p83 = scmp.ne.s32.totalorder %s74, %s75
    %p84 = scmp.eq.s32.totalorder %s17, 0
    %p85 = por %p83, %p84
    %p86 = scmp.ne.s32.totalorder %s74, %s75
    %p87 = scmp.eq.s32.totalorder %s18, 1
    %p88 = por %p86, %p87
    %p90 = scmp.ne.s32.totalorder %s75, %s89
    %p91 = scmp.eq.s32.totalorder %s18, 0
    %p92 = por %p90, %p91
    %s94 = sadd.s32 %s93, 1
    %p97 = scmp.eq.s32.totalorder %s12, 1
    %p98 = scmp.ne.s32.totalorder %s93, %s95
    %p99 = scmp.eq.s32.totalorder %s12, 0
    %p100 = por %p98, %p99
    %p101 = scmp.ne.s32.totalorder %s93, %s95
    %p102 = scmp.eq.s32.totalorder %s17, 1
    %p103 = por %p101, %p102
    %p104 = scmp.ne.s32.totalorder %s95, %s96
    %p105 = scmp.eq.s32.totalorder %s17, 0
    %p106 = por %p104, %p105
    %p107 = scmp.ne.s32.totalorder %s95, %s96
    %p108 = scmp.eq.s32.totalorder %s18, 1
    %p109 = por %p107, %p108
    %p111 = scmp.ne.s32.totalorder %s96, %s110
    %p112 = scmp.eq.s32.totalorder %s18, 0
    %p113 = por %p111, %p112
    %s115 = sadd.s32 %s114, 1
    %p118 = scmp.eq.s32.totalorder %s12, 1
    %p119 = scmp.ne.s32.totalorder %s114, %s116
    %p120 = scmp.eq.s32.totalorder %s12, 0
    %p121 = por %p119, %p120
    %p122 = scmp.ne.s32.totalorder %s114, %s116
    %p123 = scmp.eq.s32.totalorder %s17, 1
    %p124 = por %p122, %p123
    %p125 = scmp.ne.s32.totalorder %s116, %s117
    %p126 = scmp.eq.s32.totalorder %s17, 0
    %p127 = por %p125, %p126
    %p128 = scmp.ne.s32.totalorder %s116, %s117
    %p129 = scmp.eq.s32.totalorder %s18, 1
    %p130 = por %p128, %p129
    %p132 = scmp.ne.s32.totalorder %s117, %s131
    %p133 = scmp.eq.s32.totalorder %s18, 0
    %p134 = por %p132, %p133
    %s136 = sadd.s32 %s135, 1
    %p139 = scmp.eq.s32.totalorder %s12, 1
    %p140 = scmp.ne.s32.totalorder %s135, %s137
    %p141 = scmp.eq.s32.totalorder %s12, 0
    %p142 = por %p140, %p141
    %p143 = scmp.ne.s32.totalorder %s135, %s137
    %p144 = scmp.eq.s32.totalorder %s17, 1
    %p145 = por %p143, %p144
    %p146 = scmp.ne.s32.totalorder %s137, %s138
    %p147 = scmp.eq.s32.totalorder %s17, 0
    %p148 = por %p146, %p147
    %p149 = scmp.ne.s32.totalorder %s137, %s138
    %p150 = scmp.eq.s32.totalorder %s18, 1
    %p151 = por %p149, %p150
    %p153 = scmp.ne.s32.totalorder %s138, %s152
    %p154 = scmp.eq.s32.totalorder %s18, 0
    %p155 = por %p153, %p154
    %s156 = ssub.s32 %s12, %s19
    %p157 = scmp.eq.s32.totalorder %s156, 0
    %s159 = sadd.s32 %s158, 1
    %s160 = scalar_select %p157, %s158, %s159
    %p163 = pneg %p157
    %p164 = scmp.eq.s32.totalorder %s12, 1
    %p165 = por %p163, %p164
    %p166 = scmp.ne.s32.totalorder %s158, %s161
    %p167 = scmp.eq.s32.totalorder %s12, 0
    %p168 = por %p166, %p167
    %p169 = scmp.ne.s32.totalorder %s158, %s161
    %p170 = scmp.eq.s32.totalorder %s17, 1
    %p171 = por %p169, %p170
    %p172 = scmp.ne.s32.totalorder %s161, %s162
    %p173 = scmp.eq.s32.totalorder %s17, 0
    %p174 = por %p172, %p173
    %p175 = scmp.ne.s32.totalorder %s161, %s162
    %p176 = scmp.eq.s32.totalorder %s18, 1
    %p177 = por %p175, %p176
    %p179 = scmp.ne.s32.totalorder %s162, %s178
    %p180 = scmp.eq.s32.totalorder %s18, 0
    %p181 = por %p179, %p180
    %p182 = scmp.le.s32.totalorder 1, %s12
    %p183 = scmp.lt.s32.totalorder %s12, 3
    %p184 = pnand %p182, %p183
    %p185 = pneg %p184
    // Predicated region
    $region9: #{a_call__.9} parent=5 // pred_check
      _
    $region10: #{a_call__.9} parent=5 // pred_check_branch
      %187 = sbr.rel (%p184) target = $region12
    $region11: #{a_call__.9} parent=5 // pred_region
      %s188 = ssub.s32 %s12, 1
      // Predicated region
      $region13: #{a_call__.9} parent=11 // pred_check
        %p189 = pneg %p85
      $region14: #{a_call__.9} parent=11 // pred_check_branch
        %191 = sbr.rel (%p189) target = $region16
      $region15: #{a_call__.9} parent=11 // pred_region
        _
      $region16: #{a_call__.9} parent=11 // pred_fallthru
        _
      // Predicated region
      $region17: #{a_call__.9} parent=11 // pred_check
        %p192 = pneg %p106
      $region18: #{a_call__.9} parent=11 // pred_check_branch
        %194 = sbr.rel (%p192) target = $region20
      $region19: #{a_call__.9} parent=11 // pred_region
        _
      $region20: #{a_call__.9} parent=11 // pred_fallthru
        _
      // Predicated region
      $region21: #{a_call__.9} parent=11 // pred_check
        %p195 = pneg %p127
      $region22: #{a_call__.9} parent=11 // pred_check_branch
        %197 = sbr.rel (%p195) target = $region24
      $region23: #{a_call__.9} parent=11 // pred_region
        _
      $region24: #{a_call__.9} parent=11 // pred_fallthru
        _
      // Predicated region
      $region25: #{a_call__.9} parent=11 // pred_check
        %p198 = pneg %p148
      $region26: #{a_call__.9} parent=11 // pred_check_branch
        %200 = sbr.rel (%p198) target = $region28
      $region27: #{a_call__.9} parent=11 // pred_region
        _
      $region28: #{a_call__.9} parent=11 // pred_fallthru
        _
    $region12: #{a_call__.9} parent=5 // pred_fallthru
      _
    %p201 = scmp.lt.s32.totalorder %s12, 2
    // Predicated region
    $region29: #{a_call__.9} parent=5 // pred_check
      %p202 = pneg %p201
    $region30: #{a_call__.9} parent=5 // pred_check_branch
      %204 = sbr.rel (%p202) target = $region32
    $region31: #{a_call__.9} parent=5 // pred_region
      // Predicated region
      $region33: #{a_call__.9} parent=31 // pred_check
        %p205 = pneg %p32
      $region34: #{a_call__.9} parent=31 // pred_check_branch
        %207 = sbr.rel (%p205) target = $region36
      $region35: #{a_call__.9} parent=31 // pred_region
        %p208 = scmp.lt.s32.totalorder %s12, 1
        %s209 = scalar_select %p208, %s12, 1
        %s210 = smul.addr %s209, 4
        %s211 = smul.addr %s210, 8
        %s212 = scalar_lea.vmem %s0, %s211
      $region36: #{a_call__.9} parent=31 // pred_fallthru
        _
      // Predicated region
      $region37: #{a_call__.9} parent=31 // pred_check
        %p213 = pneg %p58
      $region38: #{a_call__.9} parent=31 // pred_check_branch
        %215 = sbr.rel (%p213) target = $region40
      $region39: #{a_call__.9} parent=31 // pred_region
        %p216 = scmp.lt.s32.totalorder %s12, 1
        %s217 = scalar_select %p216, %s12, 1
        %s218 = smul.addr %s217, 4
        %s219 = smul.addr %s218, 8
        %s220 = scalar_lea.vmem %s1, %s219
      $region40: #{a_call__.9} parent=31 // pred_fallthru
        _
    $region32: #{a_call__.9} parent=5 // pred_fallthru
      _
    %p221 = scmp.le.s32.totalorder 1, %s12
    %p222 = scmp.lt.s32.totalorder %s12, 3
    %p223 = pnand %p221, %p222
    %p224 = pneg %p223
    // Predicated region
    $region41: #{a_call__.9} parent=5 // pred_check
      _
    $region42: #{a_call__.9} parent=5 // pred_check_branch
      %226 = sbr.rel (%p223) target = $region44
    $region43: #{a_call__.9} parent=5 // pred_region
      %s227 = ssub.s32 %s12, 1
      %p228 = scmp.lt.s32.totalorder %s17, 1
      %s229 = scalar_select %p228, %s17, 1
      %s230 = smul.addr %s229, 4
      %s231 = smul.addr %s230, 8
      %s232 = scalar_lea.vmem %s0, %s231
      %p233 = pneg %p38
      %p234 = pneg %p35
      %p235 = scmp.lt.s32.totalorder %s17, 1
      %s236 = scalar_select %p235, %s17, 1
      %s237 = smul.addr %s236, 4
      %s238 = smul.addr %s237, 8
      %s239 = scalar_lea.vmem %s1, %s238
      %p240 = pneg %p64
      %p241 = pneg %p61
      %p242 = pneg %p85
      %p243 = pneg %p82
      %p244 = pneg %p106
      %p245 = pneg %p103
      %p246 = pneg %p127
      %p247 = pneg %p124
      %p248 = pneg %p148
      %p249 = pneg %p145
      %p250 = pneg %p174
      %p251 = pneg %p171
      %p252 = scmp.lt.s32.totalorder %s17, 1
      %s253 = scalar_select %p252, %s17, 1
      %s254 = smul.addr %s253, 4
      %s255 = smul.addr %s254, 8
      %s256 = scalar_lea.vmem %s6, %s255
      %p257 = scmp.lt.s32.totalorder %s17, 1
      %s258 = scalar_select %p257, %s17, 1
      %s259 = smul.addr %s258, 4
      %s260 = smul.addr %s259, 8
      %s261 = scalar_lea.vmem %s0, %s260
      %p262 = scmp.lt.s32.totalorder %s17, 1
      %s263 = scalar_select %p262, %s17, 1
      %s264 = smul.addr %s263, 4
      %s265 = smul.addr %s264, 8
      %s266 = scalar_lea.vmem %s1, %s265
      %p267 = scmp.lt.s32.totalorder %s17, 1
      %s268 = scalar_select %p267, %s17, 1
      %s269 = smul.addr %s268, 4
      %s270 = smul.addr %s269, 8
      %s271 = scalar_lea.vmem %s6, %s270
      %v273 = vld [vmem:[%s261] sm:$0xff]
      %v274 = vld [vmem:[%s261 + $0x8] sm:$0xff]
      %v275 = vld [vmem:[%s261 + $0x10] sm:$0xff]
      %v276 = vld [vmem:[%s261 + $0x18] sm:$0xff]
      %277 = vrot.lane.b32.xlu0 %v273, 127
      %v278 = vpop.permute.xlu0 %277
      %279 = vrot.lane.b32.xlu0 %v275, 127
      %v280 = vpop.permute.xlu0 %279
      %281 = vrot.lane.b32.xlu0 %v274, 127
      %v282 = vpop.permute.xlu0 %281
      %283 = vrot.lane.b32.xlu0 %v276, 127
      %v284 = vpop.permute.xlu0 %283
      %v285 = vlaneseq
      %v286 = vand.u32 %v285, 127
      %vm287 = vcmp.lt.s32.totalorder %v286, 127
      %v288 = vsel %vm287, %v278, %v282
      %v289 = vsel %vm287, %v280, %v284
      %v290 = vsel %vm287, %v282, %v278
      %v291 = vsel %vm287, %v284, %v280
      %292 = vrot.lane.b32.xlu0 %v273, 126
      %v293 = vpop.permute.xlu0 %292
      %294 = vrot.lane.b32.xlu0 %v275, 126
      %v295 = vpop.permute.xlu0 %294
      %296 = vrot.lane.b32.xlu0 %v274, 126
      %v297 = vpop.permute.xlu0 %296
      %298 = vrot.lane.b32.xlu0 %v276, 126
      %v299 = vpop.permute.xlu0 %298
      %vm300 = vcmp.lt.s32.totalorder %v286, 126
      %v301 = vsel %vm300, %v293, %v297
      %v302 = vsel %vm300, %v295, %v299
      %v303 = vsel %vm300, %v297, %v293
      %v304 = vsel %vm300, %v299, %v295
      %305 = vrot.lane.b32.xlu0 %v273, 125
      %v306 = vpop.permute.xlu0 %305
      %307 = vrot.lane.b32.xlu0 %v275, 125
      %v308 = vpop.permute.xlu0 %307
      %309 = vrot.lane.b32.xlu0 %v274, 125
      %v310 = vpop.permute.xlu0 %309
      %311 = vrot.lane.b32.xlu0 %v276, 125
      %v312 = vpop.permute.xlu0 %311
      %vm313 = vcmp.lt.s32.totalorder %v286, 125
      %v314 = vsel %vm313, %v306, %v310
      %v315 = vsel %vm313, %v308, %v312
      %v316 = vsel %vm313, %v310, %v306
      %v317 = vsel %vm313, %v312, %v308
      %318 = vrot.lane.b32.xlu0 %v273, 124
      %v319 = vpop.permute.xlu0 %318
      %320 = vrot.lane.b32.xlu0 %v275, 124
      %v321 = vpop.permute.xlu0 %320
      %322 = vrot.lane.b32.xlu0 %v274, 124
      %v323 = vpop.permute.xlu0 %322
      %324 = vrot.lane.b32.xlu0 %v276, 124
      %v325 = vpop.permute.xlu0 %324
      %vm326 = vcmp.lt.s32.totalorder %v286, 124
      %v327 = vsel %vm326, %v319, %v323
      %v328 = vsel %vm326, %v321, %v325
      %v329 = vsel %vm326, %v323, %v319
      %v330 = vsel %vm326, %v325, %v321
      %v331 = vadd.f32 %v288, %v314
      %v332 = vadd.f32 %v290, %v316
      %v333 = vadd.f32 %v289, %v315
      %v334 = vadd.f32 %v291, %v317
      %v335 = vadd.f32 %v301, %v327
      %v336 = vadd.f32 %v303, %v329
      %v337 = vadd.f32 %v302, %v328
      %v338 = vadd.f32 %v304, %v330
      %v339 = vsub.f32 %v288, %v314
      %v340 = vsub.f32 %v290, %v316
      %v341 = vsub.f32 %v289, %v315
      %v342 = vsub.f32 %v291, %v317
      %v343 = vand.u32 2147483647, %v339
      %v344 = vand.u32 2147483647, %v340
      %v345 = vand.u32 2147483647, %v341
      %v346 = vand.u32 2147483647, %v342
      %v347 = vsub.f32 %v301, %v327
      %v348 = vsub.f32 %v303, %v329
      %v349 = vsub.f32 %v302, %v328
      %v350 = vsub.f32 %v304, %v330
      %v351 = vand.u32 2147483647, %v347
      %v352 = vand.u32 2147483647, %v348
      %v353 = vand.u32 2147483647, %v349
      %v354 = vand.u32 2147483647, %v350
      %v355 = vpack.c.bf16 %v275, %v273
      %v356 = vpack.c.bf16 %v276, %v274
      %357 = vst [vmem:[#allocation2] sm:$0xff] %v355
      %358 = vst [vmem:[#allocation2 + $0x8] sm:$0xff] %v356
      %v359 = vpack.c.bf16 %v333, %v331
      %v360 = vpack.c.bf16 %v334, %v332
      %361 = vst [vmem:[#allocation2 + $0x20] sm:$0xff] %v359
      %362 = vst [vmem:[#allocation2 + $0x28] sm:$0xff] %v360
      %v363 = vpack.c.bf16 %v337, %v335
      %v364 = vpack.c.bf16 %v338, %v336
      %365 = vst [vmem:[#allocation2 + $0x40] sm:$0xff] %v363
      %366 = vst [vmem:[#allocation2 + $0x48] sm:$0xff] %v364
      %v367 = vpack.c.bf16 %v345, %v343
      %v368 = vpack.c.bf16 %v346, %v344
      %369 = vst [vmem:[#allocation2 + $0x60] sm:$0xff] %v367
      %370 = vst [vmem:[#allocation2 + $0x68] sm:$0xff] %v368
      %v371 = vpack.c.bf16 %v353, %v351
      %v372 = vpack.c.bf16 %v354, %v352
      %373 = vst [vmem:[#allocation2 + $0x80] sm:$0xff] %v371
      %374 = vst [vmem:[#allocation2 + $0x88] sm:$0xff] %v372
      %v375 = vld [vmem:[%s266] sm:$0xff]
      %v376 = vld [vmem:[%s266 + $0x8] sm:$0xff]
      %v377 = vld [vmem:[%s266 + $0x10] sm:$0xff]
      %v378 = vld [vmem:[%s266 + $0x18] sm:$0xff]
      %379 = vrot.lane.b32.xlu0 %v375, 127
      %v380 = vpop.permute.xlu0 %379
      %381 = vrot.lane.b32.xlu0 %v377, 127
      %v382 = vpop.permute.xlu0 %381
      %383 = vrot.lane.b32.xlu0 %v376, 127
      %v384 = vpop.permute.xlu0 %383
      %385 = vrot.lane.b32.xlu0 %v378, 127
      %v386 = vpop.permute.xlu0 %385
      %v387 = vsel %vm287, %v380, %v384
      %v388 = vsel %vm287, %v382, %v386
      %v389 = vsel %vm287, %v384, %v380
      %v390 = vsel %vm287, %v386, %v382
      %391 = vrot.lane.b32.xlu0 %v375, 126
      %v392 = vpop.permute.xlu0 %391
      %393 = vrot.lane.b32.xlu0 %v377, 126
      %v394 = vpop.permute.xlu0 %393
      %395 = vrot.lane.b32.xlu0 %v376, 126
      %v396 = vpop.permute.xlu0 %395
      %397 = vrot.lane.b32.xlu0 %v378, 126
      %v398 = vpop.permute.xlu0 %397
      %v399 = vsel %vm300, %v392, %v396
      %v400 = vsel %vm300, %v394, %v398
      %v401 = vsel %vm300, %v396, %v392
      %v402 = vsel %vm300, %v398, %v394
      %403 = vrot.lane.b32.xlu0 %v375, 125
      %v404 = vpop.permute.xlu0 %403
      %405 = vrot.lane.b32.xlu0 %v377, 125
      %v406 = vpop.permute.xlu0 %405
      %407 = vrot.lane.b32.xlu0 %v376, 125
      %v408 = vpop.permute.xlu0 %407
      %409 = vrot.lane.b32.xlu0 %v378, 125
      %v410 = vpop.permute.xlu0 %409
      %v411 = vsel %vm313, %v404, %v408
      %v412 = vsel %vm313, %v406, %v410
      %v413 = vsel %vm313, %v408, %v404
      %v414 = vsel %vm313, %v410, %v406
      %415 = vrot.lane.b32.xlu0 %v375, 124
      %v416 = vpop.permute.xlu0 %415
      %417 = vrot.lane.b32.xlu0 %v377, 124
      %v418 = vpop.permute.xlu0 %417
      %419 = vrot.lane.b32.xlu0 %v376, 124
      %v420 = vpop.permute.xlu0 %419
      %421 = vrot.lane.b32.xlu0 %v378, 124
      %v422 = vpop.permute.xlu0 %421
      %v423 = vsel %vm326, %v416, %v420
      %v424 = vsel %vm326, %v418, %v422
      %v425 = vsel %vm326, %v420, %v416
      %v426 = vsel %vm326, %v422, %v418
      %v427 = vadd.f32 %v387, %v411
      %v428 = vadd.f32 %v389, %v413
      %v429 = vadd.f32 %v388, %v412
      %v430 = vadd.f32 %v390, %v414
      %v431 = vadd.f32 %v399, %v423
      %v432 = vadd.f32 %v401, %v425
      %v433 = vadd.f32 %v400, %v424
      %v434 = vadd.f32 %v402, %v426
      %v435 = vsub.f32 %v387, %v411
      %v436 = vsub.f32 %v389, %v413
      %v437 = vsub.f32 %v388, %v412
      %v438 = vsub.f32 %v390, %v414
      %v439 = vand.u32 2147483647, %v435
      %v440 = vand.u32 2147483647, %v436
      %v441 = vand.u32 2147483647, %v437
      %v442 = vand.u32 2147483647, %v438
      %v443 = vsub.f32 %v399, %v423
      %v444 = vsub.f32 %v401, %v425
      %v445 = vsub.f32 %v400, %v424
      %v446 = vsub.f32 %v402, %v426
      %v447 = vand.u32 2147483647, %v443
      %v448 = vand.u32 2147483647, %v444
      %v449 = vand.u32 2147483647, %v445
      %v450 = vand.u32 2147483647, %v446
      %v451 = vpack.c.bf16 %v377, %v375
      %v452 = vpack.c.bf16 %v378, %v376
      %453 = vst [vmem:[#allocation2 + $0x10] sm:$0xff] %v451
      %454 = vst [vmem:[#allocation2 + $0x18] sm:$0xff] %v452
      %v455 = vpack.c.bf16 %v429, %v427
      %v456 = vpack.c.bf16 %v430, %v428
      %457 = vst [vmem:[#allocation2 + $0x30] sm:$0xff] %v455
      %458 = vst [vmem:[#allocation2 + $0x38] sm:$0xff] %v456
      %v459 = vpack.c.bf16 %v433, %v431
      %v460 = vpack.c.bf16 %v434, %v432
      %461 = vst [vmem:[#allocation2 + $0x50] sm:$0xff] %v459
      %462 = vst [vmem:[#allocation2 + $0x58] sm:$0xff] %v460
      %v463 = vpack.c.bf16 %v441, %v439
      %v464 = vpack.c.bf16 %v442, %v440
      %465 = vst [vmem:[#allocation2 + $0x70] sm:$0xff] %v463
      %466 = vst [vmem:[#allocation2 + $0x78] sm:$0xff] %v464
      %v467 = vpack.c.bf16 %v449, %v447
      %v468 = vpack.c.bf16 %v450, %v448
      %469 = vst [vmem:[#allocation2 + $0x90] sm:$0xff] %v467
      %470 = vst [vmem:[#allocation2 + $0x98] sm:$0xff] %v468
      %v471 = vld [vmem:[%s2] sm:$0xff]
      %v472 = vld [vmem:[%s2 + $0x8] sm:$0xff]
      %v473 = vld [vmem:[#allocation2] sm:$0xff]
      %v474 = vld [vmem:[#allocation2 + $0x8] sm:$0xff]
      %v475 = vld [vmem:[#allocation2 + $0x10] sm:$0xff]
      %v476 = vld [vmem:[#allocation2 + $0x18] sm:$0xff]
      %v477 = vld [vmem:[#allocation2 + $0x20] sm:$0xff]
      %v478 = vld [vmem:[#allocation2 + $0x28] sm:$0xff]
      %v479 = vld [vmem:[#allocation2 + $0x30] sm:$0xff]
      %v480 = vld [vmem:[#allocation2 + $0x38] sm:$0xff]
      %v481 = vld [vmem:[#allocation2 + $0x40] sm:$0xff]
      %v482 = vld [vmem:[#allocation2 + $0x48] sm:$0xff]
      %v483 = vld [vmem:[#allocation2 + $0x50] sm:$0xff]
      %v484 = vld [vmem:[#allocation2 + $0x58] sm:$0xff]
      %v485 = vld [vmem:[#allocation2 + $0x60] sm:$0xff]
      %v486 = vld [vmem:[#allocation2 + $0x68] sm:$0xff]
      %v487 = vld [vmem:[#allocation2 + $0x70] sm:$0xff]
      %v488 = vld [vmem:[#allocation2 + $0x78] sm:$0xff]
      %v489 = vld [vmem:[#allocation2 + $0x80] sm:$0xff]
      %v490 = vld [vmem:[#allocation2 + $0x88] sm:$0xff]
      %v491 = vld [vmem:[#allocation2 + $0x90] sm:$0xff]
      %v492 = vld [vmem:[#allocation2 + $0x98] sm:$0xff]
      %v493 = vld [vmem:[%s3] sm:$0xff]
      %v494 = vld [vmem:[%s3 + $0x8] sm:$0xff]
      %496 = vset.pattern.permute.xlu0 0
      %497 = vperm.xlu0 %496, %v493
      %v498 = vpop.permute.xlu0 %497
      %501 = vset.pattern.permute.xlu0 0
      %502 = vperm.xlu0 %501, %v494
      %v503 = vpop.permute.xlu0 %502
      %v507 = vunpack.c.l.b16 %v471
      %v508 = vunpack.c.h.b16 %v471
      %v509 = vunpack.c.l.b16 %v472
      %v510 = vunpack.c.h.b16 %v472
      %v511 = vpack.c.b16 %v509, %v507
      %v512 = vpack.c.b16 %v510, %v508
      %vm514 = vcmask 261120
      %v516 = vsel %vm514, %v512, 0
      %518 = vmatprep.subr.bf16.mxu0 %v474
      %519 = vmatpush1.bf16.msra.mxu0 %v473
      %520 = vmatprep.subr.bf16.mxu0 %v476
      %521 = vmatpush1.bf16.msra.mxu0 %v475
      %522 = vmatprep.subr.bf16.mxu0 %v478
      %523 = vmatpush1.bf16.msra.mxu0 %v477
      %524 = vmatprep.subr.bf16.mxu0 %v480
      %525 = vmatpush1.bf16.msra.mxu0 %v479
      %526 = vmatprep.subr.bf16.mxu0 %v482
      %527 = vmatpush1.bf16.msra.mxu0 %v481
      %528 = vmatprep.subr.bf16.mxu0 %v484
      %529 = vmatpush1.bf16.msra.mxu0 %v483
      %530 = vmatprep.subr.bf16.mxu0 %v486
      %531 = vmatpush1.bf16.msra.mxu0 %v485
      %532 = vmatprep.subr.bf16.mxu0 %v488
      %533 = vmatpush1.bf16.msra.mxu0 %v487
      %534 = vmatprep.subr.bf16.mxu0 %v490
      %535 = vmatpush1.bf16.msra.mxu0 %v489
      %536 = vmatprep.subr.bf16.mxu0 %v492
      %537 = vmatpush1.bf16.msra.mxu0 %v491
      %538 = vmatprep.subr.bf16.mxu0 0
      %539 = vmatpush1.bf16.msra.mxu0 0
      %540 = vmatprep.subr.bf16.mxu0 0
      %541 = vmatpush1.bf16.msra.mxu0 0
      %542 = vmatprep.subr.bf16.mxu0 0
      %543 = vmatpush1.bf16.msra.mxu0 0
      %544 = vmatprep.subr.bf16.mxu0 0
      %545 = vmatpush1.bf16.msra.mxu0 0
      %546 = vmatprep.subr.bf16.mxu0 0
      %547 = vmatpush1.bf16.msra.mxu0 0
      %548 = vmatprep.subr.bf16.mxu0 0
      %549 = vmatpush1.bf16.msra.mxu0 0
      %550 = vmatprep.mubr.bf16.mxu0 %v516
      %551 = vmatmul.mubr.bf16.gmra.mrb[0].mxu0 %v511
      %v552 = vpop.f32.mrb[0].mxu0
      %v553 = vadd.f32 %v498, %v552
      %v554 = vpop.f32.mrb[0].mxu0
      %v555 = vadd.f32 %v498, %v554
      %v556 = vpop.f32.mrb[0].mxu0
      %v557 = vadd.f32 %v503, %v556
      %v558 = vpop.f32.mrb[0].mxu0
      %v559 = vadd.f32 %v503, %v558
      %560 = vdwg.mxu0
      %v561 = vadd.f32 %v553, %v555
      %562 = vadd.xlane.f32.xlu0 %v561
      %v563 = vpop.xlane.xlu0 %562
      %v564 = vadd.f32 %v557, %v559
      %565 = vadd.xlane.f32.xlu0 %v564
      %v566 = vpop.xlane.xlu0 %565
      %v567 = vrcp.pop 256.0
      %v568 = vmul.f32 %v563, %v567
      %v569 = vmul.f32 %v566, %v567
      %v570 = vsub.f32 %v553, %v568
      %v571 = vsub.f32 %v555, %v568
      %v572 = vsub.f32 %v557, %v569
      %v573 = vsub.f32 %v559, %v569
      %v574 = vmul.f32 %v570, %v570
      %v575 = vmul.f32 %v571, %v571
      %v576 = vmul.f32 %v572, %v572
      %v577 = vmul.f32 %v573, %v573
      %v578 = vadd.f32 %v574, %v575
      %579 = vadd.xlane.f32.xlu0 %v578
      %v580 = vpop.xlane.xlu0 %579
      %v581 = vadd.f32 %v576, %v577
      %582 = vadd.xlane.f32.xlu0 %v581
      %v583 = vpop.xlane.xlu0 %582
      %v584 = vmul.f32 %v580, %v567
      %v585 = vmul.f32 %v583, %v567
      %v586 = vadd.f32 %v584, 1e-05
      %v587 = vadd.f32 %v585, 1e-05
      %v588 = vrsqrt.pop %v586
      %v589 = vrsqrt.pop %v587
      %v590 = vmul.f32 %v570, %v588
      %v591 = vmul.f32 %v571, %v588
      %v592 = vmul.f32 %v572, %v589
      %v593 = vmul.f32 %v573, %v589
      %v594 = vmax.f32 %v590, 0.0
      %v595 = vmax.f32 %v591, 0.0
      %v596 = vmax.f32 %v592, 0.0
      %v597 = vmax.f32 %v593, 0.0
      %598 = vrot.lane.b32.xlu0 %v594, 127
      %v599 = vpop.permute.xlu0 %598
      %600 = vrot.lane.b32.xlu0 %v596, 127
      %v601 = vpop.permute.xlu0 %600
      %602 = vrot.lane.b32.xlu0 %v595, 127
      %v603 = vpop.permute.xlu0 %602
      %604 = vrot.lane.b32.xlu0 %v597, 127
      %v605 = vpop.permute.xlu0 %604
      %v606 = vsel %vm287, %v599, %v603
      %v607 = vsel %vm287, %v601, %v605
      %v608 = vsel %vm287, %v603, %v599
      %v609 = vsel %vm287, %v605, %v601
      %610 = vrot.lane.b32.xlu0 %v594, 126
      %v611 = vpop.permute.xlu0 %610
      %612 = vrot.lane.b32.xlu0 %v596, 126
      %v613 = vpop.permute.xlu0 %612
      %614 = vrot.lane.b32.xlu0 %v595, 126
      %v615 = vpop.permute.xlu0 %614
      %616 = vrot.lane.b32.xlu0 %v597, 126
      %v617 = vpop.permute.xlu0 %616
      %v618 = vsel %vm300, %v611, %v615
      %v619 = vsel %vm300, %v613, %v617
      %v620 = vsel %vm300, %v615, %v611
      %v621 = vsel %vm300, %v617, %v613
      %622 = vrot.lane.b32.xlu0 %v594, 125
      %v623 = vpop.permute.xlu0 %622
      %624 = vrot.lane.b32.xlu0 %v596, 125
      %v625 = vpop.permute.xlu0 %624
      %626 = vrot.lane.b32.xlu0 %v595, 125
      %v627 = vpop.permute.xlu0 %626
      %628 = vrot.lane.b32.xlu0 %v597, 125
      %v629 = vpop.permute.xlu0 %628
      %v630 = vsel %vm313, %v623, %v627
      %v631 = vsel %vm313, %v625, %v629
      %v632 = vsel %vm313, %v627, %v623
      %v633 = vsel %vm313, %v629, %v625
      %634 = vrot.lane.b32.xlu0 %v594, 124
      %v635 = vpop.permute.xlu0 %634
      %636 = vrot.lane.b32.xlu0 %v596, 124
      %v637 = vpop.permute.xlu0 %636
      %638 = vrot.lane.b32.xlu0 %v595, 124
      %v639 = vpop.permute.xlu0 %638
      %640 = vrot.lane.b32.xlu0 %v597, 124
      %v641 = vpop.permute.xlu0 %640
      %v642 = vsel %vm326, %v635, %v639
      %v643 = vsel %vm326, %v637, %v641
      %v644 = vsel %vm326, %v639, %v635
      %v645 = vsel %vm326, %v641, %v637
      %v646 = vadd.f32 %v606, %v630
      %v647 = vadd.f32 %v608, %v632
      %v648 = vadd.f32 %v607, %v631
      %v649 = vadd.f32 %v609, %v633
      %v650 = vadd.f32 %v618, %v642
      %v651 = vadd.f32 %v620, %v644
      %v652 = vadd.f32 %v619, %v643
      %v653 = vadd.f32 %v621, %v645
      %v654 = vsub.f32 %v606, %v630
      %v655 = vsub.f32 %v608, %v632
      %v656 = vsub.f32 %v607, %v631
      %v657 = vsub.f32 %v609, %v633
      %v658 = vand.u32 2147483647, %v654
      %v659 = vand.u32 2147483647, %v655
      %v660 = vand.u32 2147483647, %v656
      %v661 = vand.u32 2147483647, %v657
      %v662 = vsub.f32 %v618, %v642
      %v663 = vsub.f32 %v620, %v644
      %v664 = vsub.f32 %v619, %v643
      %v665 = vsub.f32 %v621, %v645
      %v666 = vand.u32 2147483647, %v662
      %v667 = vand.u32 2147483647, %v663
      %v668 = vand.u32 2147483647, %v664
      %v669 = vand.u32 2147483647, %v665
      %v670 = vpack.c.bf16 %v596, %v594
      %v671 = vpack.c.bf16 %v597, %v595
      %672 = vst [vmem:[#allocation3] sm:$0xff] %v670
      %673 = vst [vmem:[#allocation3 + $0x8] sm:$0xff] %v671
      %v674 = vpack.c.bf16 %v648, %v646
      %v675 = vpack.c.bf16 %v649, %v647
      %676 = vst [vmem:[#allocation3 + $0x10] sm:$0xff] %v674
      %677 = vst [vmem:[#allocation3 + $0x18] sm:$0xff] %v675
      %v678 = vpack.c.bf16 %v652, %v650
      %v679 = vpack.c.bf16 %v653, %v651
      %680 = vst [vmem:[#allocation3 + $0x20] sm:$0xff] %v678
      %681 = vst [vmem:[#allocation3 + $0x28] sm:$0xff] %v679
      %v682 = vpack.c.bf16 %v660, %v658
      %v683 = vpack.c.bf16 %v661, %v659
      %684 = vst [vmem:[#allocation3 + $0x30] sm:$0xff] %v682
      %685 = vst [vmem:[#allocation3 + $0x38] sm:$0xff] %v683
      %v686 = vpack.c.bf16 %v668, %v666
      %v687 = vpack.c.bf16 %v669, %v667
      %688 = vst [vmem:[#allocation3 + $0x40] sm:$0xff] %v686
      %689 = vst [vmem:[#allocation3 + $0x48] sm:$0xff] %v687
      %v690 = vld [vmem:[%s4] sm:$0xf]
      %v691 = vld [vmem:[%s4 + $0x4] sm:$0xf]
      %v692 = vld [vmem:[#allocation3] sm:$0xff]
      %v693 = vld [vmem:[#allocation3 + $0x8] sm:$0xff]
      %v694 = vld [vmem:[#allocation3 + $0x10] sm:$0xff]
      %v695 = vld [vmem:[#allocation3 + $0x18] sm:$0xff]
      %v696 = vld [vmem:[#allocation3 + $0x20] sm:$0xff]
      %v697 = vld [vmem:[#allocation3 + $0x28] sm:$0xff]
      %v698 = vld [vmem:[#allocation3 + $0x30] sm:$0xff]
      %v699 = vld [vmem:[#allocation3 + $0x38] sm:$0xff]
      %v700 = vld [vmem:[#allocation3 + $0x40] sm:$0xff]
      %v701 = vld [vmem:[#allocation3 + $0x48] sm:$0xff]
      %v702 = vld [vmem:[%s5] sm:$0xff]
      %v703 = vld [vmem:[%s5 + $0x8] sm:$0xff]
      %705 = vset.pattern.permute.xlu0 0
      %706 = vperm.xlu0 %705, %v702
      %v707 = vpop.permute.xlu0 %706
      %710 = vset.pattern.permute.xlu0 0
      %711 = vperm.xlu0 %710, %v703
      %v712 = vpop.permute.xlu0 %711
      %v716 = vunpack.c.l.b16 %v690
      %v717 = vunpack.c.l.b16 %v691
      %v718 = vpack.c.b16 %v717, %v716
      %vm719 = vcmask 654336
      %v721 = vsel %vm719, %v718, 0
      %723 = vmatprep.subr.bf16.mxu0 %v693
      %724 = vmatpush1.bf16.msra.mxu0 %v692
      %725 = vmatprep.subr.bf16.mxu0 %v695
      %726 = vmatpush1.bf16.msra.mxu0 %v694
      %727 = vmatprep.subr.bf16.mxu0 %v697
      %728 = vmatpush1.bf16.msra.mxu0 %v696
      %729 = vmatprep.subr.bf16.mxu0 %v699
      %730 = vmatpush1.bf16.msra.mxu0 %v698
      %731 = vmatprep.subr.bf16.mxu0 %v701
      %732 = vmatpush1.bf16.msra.mxu0 %v700
      %733 = vmatprep.subr.bf16.mxu0 0
      %734 = vmatpush1.bf16.msra.mxu0 0
      %735 = vmatprep.subr.bf16.mxu0 0
      %736 = vmatpush1.bf16.msra.mxu0 0
      %737 = vmatprep.subr.bf16.mxu0 0
      %738 = vmatpush1.bf16.msra.mxu0 0
      %739 = vmatprep.subr.bf16.mxu0 0
      %740 = vmatpush1.bf16.msra.mxu0 0
      %741 = vmatprep.subr.bf16.mxu0 0
      %742 = vmatpush1.bf16.msra.mxu0 0
      %743 = vmatprep.subr.bf16.mxu0 0
      %744 = vmatpush1.bf16.msra.mxu0 0
      %745 = vmatprep.subr.bf16.mxu0 0
      %746 = vmatpush1.bf16.msra.mxu0 0
      %747 = vmatprep.subr.bf16.mxu0 0
      %748 = vmatpush1.bf16.msra.mxu0 0
      %749 = vmatprep.subr.bf16.mxu0 0
      %750 = vmatpush1.bf16.msra.mxu0 0
      %751 = vmatprep.subr.bf16.mxu0 0
      %752 = vmatpush1.bf16.msra.mxu0 0
      %753 = vmatprep.subr.bf16.mxu0 0
      %754 = vmatpush1.bf16.msra.mxu0 0
      %755 = vmatprep.mubr.bf16.mxu0 0
      %756 = vmatmul.mubr.bf16.gmra.mrb[0].mxu0 %v721
      %v757 = vpop.f32.mrb[0].mxu0
      %v758 = vadd.f32 %v707, %v757
      %v759 = vpop.f32.mrb[0].mxu0
      %v760 = vadd.f32 %v707, %v759
      %v761 = vpop.f32.mrb[0].mxu0
      %v762 = vadd.f32 %v712, %v761
      %v763 = vpop.f32.mrb[0].mxu0
      %v764 = vadd.f32 %v712, %v763
      %765 = vdwg.mxu0
      %v766 = vadd.f32 %v758, %v760
      %767 = vadd.xlane.f32.xlu0 %v766
      %v768 = vpop.xlane.xlu0 %767
      %v769 = vadd.f32 %v762, %v764
      %770 = vadd.xlane.f32.xlu0 %v769
      %v771 = vpop.xlane.xlu0 %770
      %v772 = vmul.f32 %v768, %v567
      %v773 = vmul.f32 %v771, %v567
      %v774 = vsub.f32 %v758, %v772
      %v775 = vsub.f32 %v760, %v772
      %v776 = vsub.f32 %v762, %v773
      %v777 = vsub.f32 %v764, %v773
      %v778 = vmul.f32 %v774, %v774
      %v779 = vmul.f32 %v775, %v775
      %v780 = vmul.f32 %v776, %v776
      %v781 = vmul.f32 %v777, %v777
      %v782 = vadd.f32 %v778, %v779
      %783 = vadd.xlane.f32.xlu0 %v782
      %v784 = vpop.xlane.xlu0 %783
      %v785 = vadd.f32 %v780, %v781
      %786 = vadd.xlane.f32.xlu0 %v785
      %v787 = vpop.xlane.xlu0 %786
      %v788 = vmul.f32 %v784, %v567
      %v789 = vmul.f32 %v787, %v567
      %v790 = vadd.f32 %v788, 1e-05
      %v791 = vadd.f32 %v789, 1e-05
      %v792 = vrsqrt.pop %v790
      %v793 = vrsqrt.pop %v791
      %v794 = vmul.f32 %v774, %v792
      %v795 = vmul.f32 %v775, %v792
      %v796 = vmul.f32 %v776, %v793
      %v797 = vmul.f32 %v777, %v793
      %v798 = vadd.f32 %v794, %v594
      %v799 = vadd.f32 %v795, %v595
      %v800 = vadd.f32 %v796, %v596
      %v801 = vadd.f32 %v797, %v597
      %v802 = vmax.f32 %v798, 0.0
      %v803 = vmax.f32 %v799, 0.0
      %v804 = vmax.f32 %v800, 0.0
      %v805 = vmax.f32 %v801, 0.0
      %806 = vst [vmem:[%s271] sm:$0xff] %v802
      %807 = vst [vmem:[%s271 + $0x8] sm:$0xff] %v803
      %808 = vst [vmem:[%s271 + $0x10] sm:$0xff] %v804
      %809 = vst [vmem:[%s271 + $0x18] sm:$0xff] %v805
      %p810 = scmp.lt.s32.totalorder %s17, 1
      %s811 = scalar_select %p810, %s17, 1
      %s812 = smul.addr %s811, 4
      %s813 = smul.addr %s812, 8
      %s814 = scalar_lea.vmem %s6, %s813
      // Predicated region
      $region45: #{a_call__.9} parent=43 // pred_check
        %p815 = pneg %p171
      $region46: #{a_call__.9} parent=43 // pred_check_branch
        %817 = sbr.rel (%p815) target = $region48
      $region47: #{a_call__.9} parent=43 // pred_region
        _
      $region48: #{a_call__.9} parent=43 // pred_fallthru
        _
    $region44: #{a_call__.9} parent=5 // pred_fallthru
      _
    %p818 = scmp.le.s32.totalorder 2, %s12
    // Predicated region
    $region49: #{a_call__.9} parent=5 // pred_check
      %p819 = pneg %p818
    $region50: #{a_call__.9} parent=5 // pred_check_branch
      %821 = sbr.rel (%p819) target = $region52
    $region51: #{a_call__.9} parent=5 // pred_region
      %s822 = ssub.s32 %s12, 2
      // Predicated region
      $region53: #{a_call__.9} parent=51 // pred_check
        %p823 = pneg %p177
      $region54: #{a_call__.9} parent=51 // pred_check_branch
        %825 = sbr.rel (%p823) target = $region56
      $region55: #{a_call__.9} parent=51 // pred_region
        %p826 = scmp.lt.s32.totalorder %s18, 1
        %s827 = scalar_select %p826, %s18, 1
        %s828 = smul.addr %s827, 4
        %s829 = smul.addr %s828, 8
        %s830 = scalar_lea.vmem %s6, %s829
      $region56: #{a_call__.9} parent=51 // pred_fallthru
        _
    $region52: #{a_call__.9} parent=5 // pred_fallthru
      _
  $region6: #{a_call__.9} parent=0 // loop_footer
    %s16 = sadd.s32 1, %s12
  $region7: #{a_call__.9} parent=0 // loop_footer_branch
    %11 = sbr.rel target = $region3
  $region8: #{a_call__.9} parent=0 // loop_exit
    _

// kernel: a_call__.11
$region0: #{a_call__.11}
  #allocation0 [shape = 'u32[]', space=smem, size = 0x4, offset = 0x4, fixed_abs, tag = 'smem constant byte address 0x4 - core index']
  #allocation1 [shape = 'u32[144,128]{1,0:T(1,128)}', space=vmem, size = 0x12000, scoped, tag = 'internal scratch']
  #allocation2 [shape = 'bf16[40,256]{1,0:T(8,128)(2,1)}', space=vmem, size = 0x5000, scoped, tag = 'scratch operand']
  #allocation3 [shape = 'bf16[40,256]{1,0:T(8,128)(2,1)}', space=vmem, size = 0x5000, scoped, tag = 'scratch operand']
  %s0 = inlined_call_operand.vmem [shape: f32[2,8,256], index: 0, kind: input, shape index: {}]
  %s1 = inlined_call_operand.vmem [shape: bf16[8,40], index: 1, kind: input, shape index: {}]
  %s2 = inlined_call_operand.vmem [shape: f32[8,1], index: 2, kind: input, shape index: {}, may-alias: {2,4}]
  %s3 = inlined_call_operand.vmem [shape: bf16[8,40], index: 3, kind: input, shape index: {}]
  %s4 = inlined_call_operand.vmem [shape: f32[8,1], index: 4, kind: input, shape index: {}, may-alias: {2,4}]
  %s5 = inlined_call_operand.hbm [shape: f32[2,8,256], index: 5, kind: output, shape index: {}]
  %s6 = sld [smem:[#allocation0]]
  $region53: #{a_call__.11} parent=0
    _
  %s8 = ssub.s32 1, %s6
  %s9 = scalar_select 0, %s8, %s6
  $region1: #{a_call__.11} parent=0
    #allocation4 [shape = 'u8[16384]{0}', space=vmem, size = 0x4000, scoped, tag = 'output window, operand 0']
    #allocation5 [shape = 's32[2]{0}', space=sflag, size = 0x8, scoped, tag = 'scoped memory for a_call__.11']
    %10 = vsyncpa [#allocation5], 0
    %s11 = scalar_lea.sflag [#allocation5], 1
    %12 = vsyncpa %s11, 0
    loop: start=0, step=1, limit=4
    $region2: #{a_call__.11} parent=1 // loop_pre_header
      _
    $region3: #{a_call__.11} parent=1 // loop_header
      %s14 = sphi 0, %s18
      %p15 = scmp.ge.s32.totalorder %s14, 4
      %s24 = sphi 0, %s26
      %s27 = sphi 0, %s24
      %s28 = sphi 0, %s27
      %s44 = sphi 0, %s28
      %s48 = sphi 0, %s48
      %s50 = sphi 0, %s48
      %s51 = sphi 0, %s50
      %s65 = sphi 0, %s51
      %s69 = sphi 0, %s69
      %s71 = sphi 0, %s69
      %s72 = sphi 0, %s71
      %s86 = sphi 0, %s72
      %s90 = sphi 0, %s90
      %s92 = sphi 0, %s90
      %s93 = sphi 0, %s92
      %s107 = sphi 0, %s93
      %s111 = sphi 0, %s111
      %s113 = sphi 0, %s111
      %s114 = sphi 0, %s113
      %s128 = sphi 0, %s114
      %s134 = sphi 0, %s136
      %s137 = sphi 0, %s134
      %s138 = sphi 0, %s137
      %s154 = sphi 0, %s138
    $region4: #{a_call__.11} parent=1 // loop_header_branch
      %17 = sbr.rel (%p15) target = $region8
    $region5: #{a_call__.11} parent=1 // loop_body
      %s19 = ssub.s32 %s14, 1
      %s20 = ssub.s32 %s14, 2
      %s21 = sadd.s32 %s14, 1
      %s22 = ssub.s32 %s14, %s21
      %p23 = scmp.eq.s32.totalorder %s22, 0
      %s25 = sadd.s32 %s24, 1
      %s26 = scalar_select %p23, %s24, %s25
      %p29 = pneg %p23
      %p30 = scmp.eq.s32.totalorder %s14, 1
      %p31 = por %p29, %p30
      %p32 = scmp.ne.s32.totalorder %s24, %s27
      %p33 = scmp.eq.s32.totalorder %s14, 0
      %p34 = por %p32, %p33
      %p35 = scmp.ne.s32.totalorder %s24, %s27
      %p36 = scmp.eq.s32.totalorder %s19, 1
      %p37 = por %p35, %p36
      %p38 = scmp.ne.s32.totalorder %s27, %s28
      %p39 = scmp.eq.s32.totalorder %s19, 0
      %p40 = por %p38, %p39
      %p41 = scmp.ne.s32.totalorder %s27, %s28
      %p42 = scmp.eq.s32.totalorder %s20, 1
      %p43 = por %p41, %p42
      %p45 = scmp.ne.s32.totalorder %s28, %s44
      %p46 = scmp.eq.s32.totalorder %s20, 0
      %p47 = por %p45, %p46
      %s49 = sadd.s32 %s48, 1
      %p52 = scmp.eq.s32.totalorder %s14, 1
      %p53 = scmp.ne.s32.totalorder %s48, %s50
      %p54 = scmp.eq.s32.totalorder %s14, 0
      %p55 = por %p53, %p54
      %p56 = scmp.ne.s32.totalorder %s48, %s50
      %p57 = scmp.eq.s32.totalorder %s19, 1
      %p58 = por %p56, %p57
      %p59 = scmp.ne.s32.totalorder %s50, %s51
      %p60 = scmp.eq.s32.totalorder %s19, 0
      %p61 = por %p59, %p60
      %p62 = scmp.ne.s32.totalorder %s50, %s51
      %p63 = scmp.eq.s32.totalorder %s20, 1
      %p64 = por %p62, %p63
      %p66 = scmp.ne.s32.totalorder %s51, %s65
      %p67 = scmp.eq.s32.totalorder %s20, 0
      %p68 = por %p66, %p67
      %s70 = sadd.s32 %s69, 1
      %p73 = scmp.eq.s32.totalorder %s14, 1
      %p74 = scmp.ne.s32.totalorder %s69, %s71
      %p75 = scmp.eq.s32.totalorder %s14, 0
      %p76 = por %p74, %p75
      %p77 = scmp.ne.s32.totalorder %s69, %s71
      %p78 = scmp.eq.s32.totalorder %s19, 1
      %p79 = por %p77, %p78
      %p80 = scmp.ne.s32.totalorder %s71, %s72
      %p81 = scmp.eq.s32.totalorder %s19, 0
      %p82 = por %p80, %p81
      %p83 = scmp.ne.s32.totalorder %s71, %s72
      %p84 = scmp.eq.s32.totalorder %s20, 1
      %p85 = por %p83, %p84
      %p87 = scmp.ne.s32.totalorder %s72, %s86
      %p88 = scmp.eq.s32.totalorder %s20, 0
      %p89 = por %p87, %p88
      %s91 = sadd.s32 %s90, 1
      %p94 = scmp.eq.s32.totalorder %s14, 1
      %p95 = scmp.ne.s32.totalorder %s90, %s92
      %p96 = scmp.eq.s32.totalorder %s14, 0
      %p97 = por %p95, %p96
      %p98 = scmp.ne.s32.totalorder %s90, %s92
      %p99 = scmp.eq.s32.totalorder %s19, 1
      %p100 = por %p98, %p99
      %p101 = scmp.ne.s32.totalorder %s92, %s93
      %p102 = scmp.eq.s32.totalorder %s19, 0
      %p103 = por %p101, %p102
      %p104 = scmp.ne.s32.totalorder %s92, %s93
      %p105 = scmp.eq.s32.totalorder %s20, 1
      %p106 = por %p104, %p105
      %p108 = scmp.ne.s32.totalorder %s93, %s107
      %p109 = scmp.eq.s32.totalorder %s20, 0
      %p110 = por %p108, %p109
      %s112 = sadd.s32 %s111, 1
      %p115 = scmp.eq.s32.totalorder %s14, 1
      %p116 = scmp.ne.s32.totalorder %s111, %s113
      %p117 = scmp.eq.s32.totalorder %s14, 0
      %p118 = por %p116, %p117
      %p119 = scmp.ne.s32.totalorder %s111, %s113
      %p120 = scmp.eq.s32.totalorder %s19, 1
      %p121 = por %p119, %p120
      %p122 = scmp.ne.s32.totalorder %s113, %s114
      %p123 = scmp.eq.s32.totalorder %s19, 0
      %p124 = por %p122, %p123
      %p125 = scmp.ne.s32.totalorder %s113, %s114
      %p126 = scmp.eq.s32.totalorder %s20, 1
      %p127 = por %p125, %p126
      %p129 = scmp.ne.s32.totalorder %s114, %s128
      %p130 = scmp.eq.s32.totalorder %s20, 0
      %p131 = por %p129, %p130
      %s132 = ssub.s32 %s14, %s21
      %p133 = scmp.eq.s32.totalorder %s132, 0
      %s135 = sadd.s32 %s134, 1
      %s136 = scalar_select %p133, %s134, %s135
      %p139 = pneg %p133
      %p140 = scmp.eq.s32.totalorder %s14, 1
      %p141 = por %p139, %p140
      %p142 = scmp.ne.s32.totalorder %s134, %s137
      %p143 = scmp.eq.s32.totalorder %s14, 0
      %p144 = por %p142, %p143
      %p145 = scmp.ne.s32.totalorder %s134, %s137
      %p146 = scmp.eq.s32.totalorder %s19, 1
      %p147 = por %p145, %p146
      %p148 = scmp.ne.s32.totalorder %s137, %s138
      %p149 = scmp.eq.s32.totalorder %s19, 0
      %p150 = por %p148, %p149
      %p151 = scmp.ne.s32.totalorder %s137, %s138
      %p152 = scmp.eq.s32.totalorder %s20, 1
      %p153 = por %p151, %p152
      %p155 = scmp.ne.s32.totalorder %s138, %s154
      %p156 = scmp.eq.s32.totalorder %s20, 0
      %p157 = por %p155, %p156
      %p158 = scmp.le.s32.totalorder 1, %s14
      %p159 = scmp.lt.s32.totalorder %s14, 3
      %p160 = pnand %p158, %p159
      %p161 = pneg %p160
      // Predicated region
      $region9: #{a_call__.11} parent=5 // pred_check
        _
      $region10: #{a_call__.11} parent=5 // pred_check_branch
        %163 = sbr.rel (%p160) target = $region12
      $region11: #{a_call__.11} parent=5 // pred_region
        %s164 = ssub.s32 %s14, 1
        // Predicated region
        $region13: #{a_call__.11} parent=11 // pred_check
          %p165 = pneg %p61
        $region14: #{a_call__.11} parent=11 // pred_check_branch
          %167 = sbr.rel (%p165) target = $region16
        $region15: #{a_call__.11} parent=11 // pred_region
          _
        $region16: #{a_call__.11} parent=11 // pred_fallthru
          _
        // Predicated region
        $region17: #{a_call__.11} parent=11 // pred_check
          %p168 = pneg %p82
        $region18: #{a_call__.11} parent=11 // pred_check_branch
          %170 = sbr.rel (%p168) target = $region20
        $region19: #{a_call__.11} parent=11 // pred_region
          _
        $region20: #{a_call__.11} parent=11 // pred_fallthru
          _
        // Predicated region
        $region21: #{a_call__.11} parent=11 // pred_check
          %p171 = pneg %p103
        $region22: #{a_call__.11} parent=11 // pred_check_branch
          %173 = sbr.rel (%p171) target = $region24
        $region23: #{a_call__.11} parent=11 // pred_region
          _
        $region24: #{a_call__.11} parent=11 // pred_fallthru
          _
        // Predicated region
        $region25: #{a_call__.11} parent=11 // pred_check
          %p174 = pneg %p124
        $region26: #{a_call__.11} parent=11 // pred_check_branch
          %176 = sbr.rel (%p174) target = $region28
        $region27: #{a_call__.11} parent=11 // pred_region
          _
        $region28: #{a_call__.11} parent=11 // pred_fallthru
          _
      $region12: #{a_call__.11} parent=5 // pred_fallthru
        _
      %p177 = scmp.lt.s32.totalorder %s14, 2
      // Predicated region
      $region29: #{a_call__.11} parent=5 // pred_check
        %p178 = pneg %p177
      $region30: #{a_call__.11} parent=5 // pred_check_branch
        %180 = sbr.rel (%p178) target = $region32
      $region31: #{a_call__.11} parent=5 // pred_region
        // Predicated region
        $region33: #{a_call__.11} parent=31 // pred_check
          %p181 = pneg %p34
        $region34: #{a_call__.11} parent=31 // pred_check_branch
          %183 = sbr.rel (%p181) target = $region36
        $region35: #{a_call__.11} parent=31 // pred_region
          %p184 = scmp.lt.s32.totalorder %s14, 1
          %s185 = scalar_select %p184, %s14, 1
          %s186 = smul.addr %s185, 2
          %s187 = smul.addr %s186, 8
          %s188 = scalar_lea.vmem %s0, %s187
        $region36: #{a_call__.11} parent=31 // pred_fallthru
          _
      $region32: #{a_call__.11} parent=5 // pred_fallthru
        _
      %p189 = scmp.le.s32.totalorder 1, %s14
      %p190 = scmp.lt.s32.totalorder %s14, 3
      %p191 = pnand %p189, %p190
      %p192 = pneg %p191
      // Predicated region
      $region37: #{a_call__.11} parent=5 // pred_check
        _
      $region38: #{a_call__.11} parent=5 // pred_check_branch
        %194 = sbr.rel (%p191) target = $region40
      $region39: #{a_call__.11} parent=5 // pred_region
        %s195 = ssub.s32 %s14, 1
        %p196 = scmp.lt.s32.totalorder %s19, 1
        %s197 = scalar_select %p196, %s19, 1
        %s198 = smul.addr %s197, 2
        %s199 = smul.addr %s198, 8
        %s200 = scalar_lea.vmem %s0, %s199
        %p201 = pneg %p40
        %p202 = pneg %p37
        %p203 = pneg %p61
        %p204 = pneg %p58
        %p205 = pneg %p82
        %p206 = pneg %p79
        %p207 = pneg %p103
        %p208 = pneg %p100
        %p209 = pneg %p124
        %p210 = pneg %p121
        %p211 = pneg %p150
        %p212 = pneg %p147
        %s213 = sand.u32 %s137, 1
        %s214 = scalar_lea.sflag [#allocation5], %s213
        %s215 = sand.u32 %s137, 1
        %s216 = smul.addr %s215, 16
        %s217 = scalar_lea.vmem [#allocation4], %s216
        %p218 = scmp.lt.s32.totalorder %s19, 1
        %s219 = scalar_select %p218, %s19, 1
        %s220 = smul.addr %s219, 2
        %s221 = smul.addr %s220, 8
        %s222 = scalar_lea.vmem %s0, %s221
        %v224 = vld [vmem:[%s222] sm:$0xff]
        %v225 = vld [vmem:[%s222 + $0x8] sm:$0xff]
        %226 = vrot.lane.b32.xlu0 %v224, 127
        %v227 = vpop.permute.xlu0 %226
        %228 = vrot.lane.b32.xlu0 %v225, 127
        %v229 = vpop.permute.xlu0 %228
        %v230 = vlaneseq
        %v231 = vand.u32 %v230, 127
        %vm232 = vcmp.lt.s32.totalorder %v231, 127
        %v233 = vsel %vm232, %v227, %v229
        %v234 = vsel %vm232, %v229, %v227
        %235 = vrot.lane.b32.xlu0 %v224, 126
        %v236 = vpop.permute.xlu0 %235
        %237 = vrot.lane.b32.xlu0 %v225, 126
        %v238 = vpop.permute.xlu0 %237
        %vm239 = vcmp.lt.s32.totalorder %v231, 126
        %v240 = vsel %vm239, %v236, %v238
        %v241 = vsel %vm239, %v238, %v236
        %242 = vrot.lane.b32.xlu0 %v224, 125
        %v243 = vpop.permute.xlu0 %242
        %244 = vrot.lane.b32.xlu0 %v225, 125
        %v245 = vpop.permute.xlu0 %244
        %vm246 = vcmp.lt.s32.totalorder %v231, 125
        %v247 = vsel %vm246, %v243, %v245
        %v248 = vsel %vm246, %v245, %v243
        %249 = vrot.lane.b32.xlu0 %v224, 124
        %v250 = vpop.permute.xlu0 %249
        %251 = vrot.lane.b32.xlu0 %v225, 124
        %v252 = vpop.permute.xlu0 %251
        %vm253 = vcmp.lt.s32.totalorder %v231, 124
        %v254 = vsel %vm253, %v250, %v252
        %v255 = vsel %vm253, %v252, %v250
        %v256 = vadd.f32 %v233, %v247
        %v257 = vadd.f32 %v234, %v248
        %v258 = vadd.f32 %v240, %v254
        %v259 = vadd.f32 %v241, %v255
        %v260 = vsub.f32 %v233, %v247
        %v261 = vsub.f32 %v234, %v248
        %v262 = vand.u32 2147483647, %v260
        %v263 = vand.u32 2147483647, %v261
        %v264 = vsub.f32 %v240, %v254
        %v265 = vsub.f32 %v241, %v255
        %v266 = vand.u32 2147483647, %v264
        %v267 = vand.u32 2147483647, %v265
        %v268 = vpack.c.bf16 %v224, %v224
        %v269 = vpack.c.bf16 %v225, %v225
        %v272 = vunpack.c.l.b16 %v268
        %v273 = vunpack.c.l.b16 %v269
        %v274 = vpack.c.b16 %v273, %v272
        %276 = vst [vmem:[#allocation2] sm:$0xff] %v274
        %v277 = vpack.c.bf16 %v256, %v256
        %v278 = vpack.c.bf16 %v257, %v257
        %v281 = vunpack.c.l.b16 %v277
        %v282 = vunpack.c.l.b16 %v278
        %v283 = vpack.c.b16 %v282, %v281
        %285 = vst [vmem:[#allocation2 + $0x8] sm:$0xff] %v283
        %v286 = vpack.c.bf16 %v258, %v258
        %v287 = vpack.c.bf16 %v259, %v259
        %v290 = vunpack.c.l.b16 %v286
        %v291 = vunpack.c.l.b16 %v287
        %v292 = vpack.c.b16 %v291, %v290
        %294 = vst [vmem:[#allocation2 + $0x10] sm:$0xff] %v292
        %v295 = vpack.c.bf16 %v262, %v262
        %v296 = vpack.c.bf16 %v263, %v263
        %v299 = vunpack.c.l.b16 %v295
        %v300 = vunpack.c.l.b16 %v296
        %v301 = vpack.c.b16 %v300, %v299
        %303 = vst [vmem:[#allocation2 + $0x18] sm:$0xff] %v301
        %v304 = vpack.c.bf16 %v266, %v266
        %v305 = vpack.c.bf16 %v267, %v267
        %v308 = vunpack.c.l.b16 %v304
        %v309 = vunpack.c.l.b16 %v305
        %v310 = vpack.c.b16 %v309, %v308
        %312 = vst [vmem:[#allocation2 + $0x20] sm:$0xff] %v310
        %v313 = vld [vmem:[%s1] sm:$0xf]
        %v314 = vld [vmem:[#allocation2] sm:$0xff]
        %v315 = vld [vmem:[#allocation2 + $0x8] sm:$0xff]
        %v316 = vld [vmem:[#allocation2 + $0x10] sm:$0xff]
        %v317 = vld [vmem:[#allocation2 + $0x18] sm:$0xff]
        %v318 = vld [vmem:[#allocation2 + $0x20] sm:$0xff]
        %v319 = vld [vmem:[%s2] sm:$0xff]
        %321 = vset.pattern.permute.xlu0 0
        %322 = vperm.xlu0 %321, %v319
        %v323 = vpop.permute.xlu0 %322
        %v330 = vunpack.c.l.b16 %v314
        %v331 = vunpack.c.h.b16 %v314
        %v332 = vunpack.c.l.b16 %v315
        %v333 = vunpack.c.h.b16 %v315
        %v334 = vunpack.c.l.b16 %v316
        %v335 = vunpack.c.h.b16 %v316
        %v336 = vunpack.c.l.b16 %v317
        %v337 = vunpack.c.h.b16 %v317
        %v338 = vunpack.c.l.b16 %v318
        %v339 = vunpack.c.h.b16 %v318
        %v340 = vpack.c.b16 %v332, %v330
        %v341 = vpack.c.b16 %v333, %v331
        %v342 = vpack.c.b16 %v336, %v334
        %v343 = vpack.c.b16 %v337, %v335
        %v344 = vpack.c.b16 %v338, %v338
        %v345 = vpack.c.b16 %v339, %v339
        %vm350 = vcmask 326656
        %v352 = vsel %vm350, %v313, 0
        %vm354 = vcmask 1043456
        %v356 = vsel %vm354, %v344, 0
        %v359 = vsel %vm354, %v345, 0
        %361 = vmatprep.subr.bf16.mxu0 %v341
        %362 = vmatpush1.bf16.msra.mxu0 %v340
        %363 = vmatprep.subr.bf16.mxu0 %v343
        %364 = vmatpush1.bf16.msra.mxu0 %v342
        %365 = vmatprep.subr.bf16.mxu0 %v359
        %366 = vmatpush1.bf16.msra.mxu0 %v356
        %367 = vmatprep.subr.bf16.mxu0 0
        %368 = vmatpush1.bf16.msra.mxu0 0
        %369 = vmatprep.subr.bf16.mxu0 0
        %370 = vmatpush1.bf16.msra.mxu0 0
        %371 = vmatprep.subr.bf16.mxu0 0
        %372 = vmatpush1.bf16.msra.mxu0 0
        %373 = vmatprep.subr.bf16.mxu0 0
        %374 = vmatpush1.bf16.msra.mxu0 0
        %375 = vmatprep.subr.bf16.mxu0 0
        %376 = vmatpush1.bf16.msra.mxu0 0
        %377 = vmatprep.subr.bf16.mxu0 0
        %378 = vmatpush1.bf16.msra.mxu0 0
        %379 = vmatprep.subr.bf16.mxu0 0
        %380 = vmatpush1.bf16.msra.mxu0 0
        %381 = vmatprep.subr.bf16.mxu0 0
        %382 = vmatpush1.bf16.msra.mxu0 0
        %383 = vmatprep.subr.bf16.mxu0 0
        %384 = vmatpush1.bf16.msra.mxu0 0
        %385 = vmatprep.subr.bf16.mxu0 0
        %386 = vmatpush1.bf16.msra.mxu0 0
        %387 = vmatprep.subr.bf16.mxu0 0
        %388 = vmatpush1.bf16.msra.mxu0 0
        %389 = vmatprep.subr.bf16.mxu0 0
        %390 = vmatpush1.bf16.msra.mxu0 0
        %391 = vmatprep.subr.bf16.mxu0 0
        %392 = vmatpush1.bf16.msra.mxu0 0
        %393 = vmatprep.mubr.bf16.mxu0 0
        %394 = vmatmul.mubr.bf16.gmra.mrb[0].mxu0 %v352
        %v395 = vpop.f32.mrb[0].mxu0
        %v396 = vadd.f32 %v323, %v395
        %v397 = vpop.f32.mrb[0].mxu0
        %v398 = vadd.f32 %v323, %v397
        %v399 = vpop.f32.mrb[0].mxu0
        %v400 = vpop.f32.mrb[0].mxu0
        %401 = vdwg.mxu0
        %v402 = vadd.f32 %v396, %v398
        %403 = vadd.xlane.f32.xlu0 %v402
        %v404 = vpop.xlane.xlu0 %403
        %v405 = vrcp.pop 256.0
        %v406 = vmul.f32 %v404, %v405
        %v407 = vsub.f32 %v396, %v406
        %v408 = vsub.f32 %v398, %v406
        %v409 = vmul.f32 %v407, %v407
        %v410 = vmul.f32 %v408, %v408
        %v411 = vadd.f32 %v409, %v410
        %412 = vadd.xlane.f32.xlu0 %v411
        %v413 = vpop.xlane.xlu0 %412
        %v414 = vmul.f32 %v413, %v405
        %v415 = vadd.f32 %v414, 1e-05
        %v416 = vrsqrt.pop %v415
        %v417 = vmul.f32 %v407, %v416
        %v418 = vmul.f32 %v408, %v416
        %v419 = vmax.f32 %v417, 0.0
        %v420 = vmax.f32 %v418, 0.0
        %421 = vrot.lane.b32.xlu0 %v419, 127
        %v422 = vpop.permute.xlu0 %421
        %423 = vrot.lane.b32.xlu0 %v420, 127
        %v424 = vpop.permute.xlu0 %423
        %v425 = vsel %vm232, %v422, %v424
        %v426 = vsel %vm232, %v424, %v422
        %427 = vrot.lane.b32.xlu0 %v419, 126
        %v428 = vpop.permute.xlu0 %427
        %429 = vrot.lane.b32.xlu0 %v420, 126
        %v430 = vpop.permute.xlu0 %429
        %v431 = vsel %vm239, %v428, %v430
        %v432 = vsel %vm239, %v430, %v428
        %433 = vrot.lane.b32.xlu0 %v419, 125
        %v434 = vpop.permute.xlu0 %433
        %435 = vrot.lane.b32.xlu0 %v420, 125
        %v436 = vpop.permute.xlu0 %435
        %v437 = vsel %vm246, %v434, %v436
        %v438 = vsel %vm246, %v436, %v434
        %439 = vrot.lane.b32.xlu0 %v419, 124
        %v440 = vpop.permute.xlu0 %439
        %441 = vrot.lane.b32.xlu0 %v420, 124
        %v442 = vpop.permute.xlu0 %441
        %v443 = vsel %vm253, %v440, %v442
        %v444 = vsel %vm253, %v442, %v440
        %v445 = vadd.f32 %v425, %v437
        %v446 = vadd.f32 %v426, %v438
        %v447 = vadd.f32 %v431, %v443
        %v448 = vadd.f32 %v432, %v444
        %v449 = vsub.f32 %v425, %v437
        %v450 = vsub.f32 %v426, %v438
        %v451 = vand.u32 2147483647, %v449
        %v452 = vand.u32 2147483647, %v450
        %v453 = vsub.f32 %v431, %v443
        %v454 = vsub.f32 %v432, %v444
        %v455 = vand.u32 2147483647, %v453
        %v456 = vand.u32 2147483647, %v454
        %v457 = vpack.c.bf16 %v419, %v419
        %v458 = vpack.c.bf16 %v420, %v420
        %v461 = vunpack.c.l.b16 %v457
        %v462 = vunpack.c.l.b16 %v458
        %v463 = vpack.c.b16 %v462, %v461
        %465 = vst [vmem:[#allocation3] sm:$0xff] %v463
        %v466 = vpack.c.bf16 %v445, %v445
        %v467 = vpack.c.bf16 %v446, %v446
        %v470 = vunpack.c.l.b16 %v466
        %v471 = vunpack.c.l.b16 %v467
        %v472 = vpack.c.b16 %v471, %v470
        %474 = vst [vmem:[#allocation3 + $0x8] sm:$0xff] %v472
        %v475 = vpack.c.bf16 %v447, %v447
        %v476 = vpack.c.bf16 %v448, %v448
        %v479 = vunpack.c.l.b16 %v475
        %v480 = vunpack.c.l.b16 %v476
        %v481 = vpack.c.b16 %v480, %v479
        %483 = vst [vmem:[#allocation3 + $0x10] sm:$0xff] %v481
        %v484 = vpack.c.bf16 %v451, %v451
        %v485 = vpack.c.bf16 %v452, %v452
        %v488 = vunpack.c.l.b16 %v484
        %v489 = vunpack.c.l.b16 %v485
        %v490 = vpack.c.b16 %v489, %v488
        %492 = vst [vmem:[#allocation3 + $0x18] sm:$0xff] %v490
        %v493 = vpack.c.bf16 %v455, %v455
        %v494 = vpack.c.bf16 %v456, %v456
        %v497 = vunpack.c.l.b16 %v493
        %v498 = vunpack.c.l.b16 %v494
        %v499 = vpack.c.b16 %v498, %v497
        %501 = vst [vmem:[#allocation3 + $0x20] sm:$0xff] %v499
        %v502 = vld [vmem:[%s3] sm:$0xf]
        %v503 = vld [vmem:[#allocation3] sm:$0xff]
        %v504 = vld [vmem:[#allocation3 + $0x8] sm:$0xff]
        %v505 = vld [vmem:[#allocation3 + $0x10] sm:$0xff]
        %v506 = vld [vmem:[#allocation3 + $0x18] sm:$0xff]
        %v507 = vld [vmem:[#allocation3 + $0x20] sm:$0xff]
        %v508 = vld [vmem:[%s4] sm:$0xff]
        %510 = vset.pattern.permute.xlu0 0
        %511 = vperm.xlu0 %510, %v508
        %v512 = vpop.permute.xlu0 %511
        %v519 = vunpack.c.l.b16 %v503
        %v520 = vunpack.c.h.b16 %v503
        %v521 = vunpack.c.l.b16 %v504
        %v522 = vunpack.c.h.b16 %v504
        %v523 = vunpack.c.l.b16 %v505
        %v524 = vunpack.c.h.b16 %v505
        %v525 = vunpack.c.l.b16 %v506
        %v526 = vunpack.c.h.b16 %v506
        %v527 = vunpack.c.l.b16 %v507
        %v528 = vunpack.c.h.b16 %v507
        %v529 = vpack.c.b16 %v521, %v519
        %v530 = vpack.c.b16 %v522, %v520
        %v531 = vpack.c.b16 %v525, %v523
        %v532 = vpack.c.b16 %v526, %v524
        %v533 = vpack.c.b16 %v527, %v527
        %v534 = vpack.c.b16 %v528, %v528
        %v540 = vsel %vm350, %v502, 0
        %v543 = vsel %vm354, %v533, 0
        %v546 = vsel %vm354, %v534, 0
        %548 = vmatprep.subr.bf16.mxu0 %v530
        %549 = vmatpush1.bf16.msra.mxu0 %v529
        %550 = vmatprep.subr.bf16.mxu0 %v532
        %551 = vmatpush1.bf16.msra.mxu0 %v531
        %552 = vmatprep.subr.bf16.mxu0 %v546
        %553 = vmatpush1.bf16.msra.mxu0 %v543
        %554 = vmatprep.subr.bf16.mxu0 0
        %555 = vmatpush1.bf16.msra.mxu0 0
        %556 = vmatprep.subr.bf16.mxu0 0
        %557 = vmatpush1.bf16.msra.mxu0 0
        %558 = vmatprep.subr.bf16.mxu0 0
        %559 = vmatpush1.bf16.msra.mxu0 0
        %560 = vmatprep.subr.bf16.mxu0 0
        %561 = vmatpush1.bf16.msra.mxu0 0
        %562 = vmatprep.subr.bf16.mxu0 0
        %563 = vmatpush1.bf16.msra.mxu0 0
        %564 = vmatprep.subr.bf16.mxu0 0
        %565 = vmatpush1.bf16.msra.mxu0 0
        %566 = vmatprep.subr.bf16.mxu0 0
        %567 = vmatpush1.bf16.msra.mxu0 0
        %568 = vmatprep.subr.bf16.mxu0 0
        %569 = vmatpush1.bf16.msra.mxu0 0
        %570 = vmatprep.subr.bf16.mxu0 0
        %571 = vmatpush1.bf16.msra.mxu0 0
        %572 = vmatprep.subr.bf16.mxu0 0
        %573 = vmatpush1.bf16.msra.mxu0 0
        %574 = vmatprep.subr.bf16.mxu0 0
        %575 = vmatpush1.bf16.msra.mxu0 0
        %576 = vmatprep.subr.bf16.mxu0 0
        %577 = vmatpush1.bf16.msra.mxu0 0
        %578 = vmatprep.subr.bf16.mxu0 0
        %579 = vmatpush1.bf16.msra.mxu0 0
        %580 = vmatprep.mubr.bf16.mxu0 0
        %581 = vmatmul.mubr.bf16.gmra.mrb[0].mxu0 %v540
        %v582 = vpop.f32.mrb[0].mxu0
        %v583 = vadd.f32 %v512, %v582
        %v584 = vpop.f32.mrb[0].mxu0
        %v585 = vadd.f32 %v512, %v584
        %v586 = vpop.f32.mrb[0].mxu0
        %v587 = vpop.f32.mrb[0].mxu0
        %588 = vdwg.mxu0
        %v589 = vadd.f32 %v583, %v585
        %590 = vadd.xlane.f32.xlu0 %v589
        %v591 = vpop.xlane.xlu0 %590
        %v592 = vmul.f32 %v591, %v405
        %v593 = vsub.f32 %v583, %v592
        %v594 = vsub.f32 %v585, %v592
        %v595 = vmul.f32 %v593, %v593
        %v596 = vmul.f32 %v594, %v594
        %v597 = vadd.f32 %v595, %v596
        %598 = vadd.xlane.f32.xlu0 %v597
        %v599 = vpop.xlane.xlu0 %598
        %v600 = vmul.f32 %v599, %v405
        %v601 = vadd.f32 %v600, 1e-05
        %v602 = vrsqrt.pop %v601
        %v603 = vmul.f32 %v593, %v602
        %v604 = vmul.f32 %v594, %v602
        %v605 = vadd.f32 %v603, %v419
        %v606 = vadd.f32 %v604, %v420
        %v607 = vmax.f32 %v605, 0.0
        %v608 = vmax.f32 %v606, 0.0
        %609 = vst [vmem:[%s217] sm:$0xff] %v607
        %610 = vst [vmem:[%s217 + $0x8] sm:$0xff] %v608
        %s611 = sand.u32 %s137, 1
        %s612 = scalar_lea.sflag [#allocation5], %s611
        %s613 = sand.u32 %s137, 1
        %s614 = smul.addr %s613, 16
        %s615 = scalar_lea.vmem [#allocation4], %s614
        // Predicated region
        $region41: #{a_call__.11} parent=39 // pred_check
          %p616 = pneg %p147
        $region42: #{a_call__.11} parent=39 // pred_check_branch
          %618 = sbr.rel (%p616) target = $region44
        $region43: #{a_call__.11} parent=39 // pred_region
          %s620 = ssub.s32 256, 256
          %621 = vsyncadd %s612, %s620
          %s622 = smul.addr %s19, 2
          %s623 = smul.addr %s622, 128
          %s624 = scalar_lea.hbm %s5, %s623
          %s626 = sshll.u32 %s615, 4
          %s627 = int_to_ptr.vmem [resolvable:$true] %s626
          %629 = dma.vmem_to_hbm [thread:$0]  %s627, 256, %s624, %s612
        $region44: #{a_call__.11} parent=39 // pred_fallthru
          _
      $region40: #{a_call__.11} parent=5 // pred_fallthru
        _
      %p630 = scmp.le.s32.totalorder 2, %s14
      // Predicated region
      $region45: #{a_call__.11} parent=5 // pred_check
        %p631 = pneg %p630
      $region46: #{a_call__.11} parent=5 // pred_check_branch
        %633 = sbr.rel (%p631) target = $region48
      $region47: #{a_call__.11} parent=5 // pred_region
        %s634 = ssub.s32 %s14, 2
        // Predicated region
        $region49: #{a_call__.11} parent=47 // pred_check
          %p635 = pneg %p153
        $region50: #{a_call__.11} parent=47 // pred_check_branch
          %637 = sbr.rel (%p635) target = $region52
        $region51: #{a_call__.11} parent=47 // pred_region
          %s638 = sand.u32 %s138, 1
          %s639 = scalar_lea.sflag [#allocation5], %s638
          %s640 = sand.u32 %s138, 1
          %s641 = smul.addr %s640, 16
          %s642 = scalar_lea.vmem [#allocation4], %s641
          %643 = dma.done %s639, 256
        $region52: #{a_call__.11} parent=47 // pred_fallthru
          _
      $region48: #{a_call__.11} parent=5 // pred_fallthru
        _
    $region6: #{a_call__.11} parent=1 // loop_footer
      %s18 = sadd.s32 1, %s14
    $region7: #{a_call__.11} parent=1 // loop_footer_branch
      %13 = sbr.rel target = $region3
    $region8: #{a_call__.11} parent=1 // loop_exit
      _
    %644 = vsyncpa [#allocation5], 1
    %s645 = scalar_lea.sflag [#allocation5], 1
    %646 = vsyncpa %s645, 1

</llo_original>
